<compile_context>
chip_gen: v7x
topology: tpu7x:2x2x1
jax: 0.10.0
libtpu: 0.0.40
codegen_flags: <defaults>
</compile_context>

<pallas_src>
import functools

import jax
import jax.numpy as jnp
from jax.experimental import pallas as pl
from jax.experimental.pallas import tpu as pltpu

KSIZE = 5
PAD = 2
MID_CH = 128
OUT_CH = 32
BN_EPS = 1e-5


def _dense_unit_kernel(x_ref, s1_ref, t1_ref, w1_ref, b1_ref, w2_ref, b2_ref,
                       out_ref, *, img_h, img_w, tile_h):
    # x_ref : (1, 1, tile_h+4, Wp, Cin) bf16   halo'd (H) + zero-padded (W) input tile
    # s1/t1 : (1, Cin) f32                     folded BN1 scale / bias
    # w1    : (Cin, 128) bf16                  conv1 weight with BN2 folded in
    # b1    : (1, 128) f32                     conv1 bias  with BN2 folded in
    # w2    : (128, 800) bf16                  conv2 weight repacked as [in, (dy*5+dx)*32 + out]
    # b2    : (1, 32) f32
    # out   : (1, 1, tile_h, img_w, 32) f32    conv output only (passthrough concat in wrapper)
    hh = tile_h + 2 * PAD
    wp = x_ref.shape[3]
    cin = x_ref.shape[4]
    t = pl.program_id(1)

    # ---- BN1 + ReLU (f32) ----
    x = x_ref[0, 0].astype(jnp.float32).reshape(hh * wp, cin)
    y = jnp.maximum(x * s1_ref[...] + t1_ref[...], 0.0)

    # ---- Conv1 1x1 (BN2 pre-folded) + ReLU : bf16 MXU, f32 accumulation ----
    z = jnp.dot(y.astype(jnp.bfloat16), w1_ref[...],
                preferred_element_type=jnp.float32)
    z = jnp.maximum(z + b1_ref[...], 0.0)

    # ---- zero positions that are conv2 zero-padding or outside the image (halo OOB rows) ----
    z = z.reshape(hh, wp, MID_CH)
    row = jax.lax.broadcasted_iota(jnp.int32, (hh, wp, MID_CH), 0)
    col = jax.lax.broadcasted_iota(jnp.int32, (hh, wp, MID_CH), 1)
    g_row = row + t * tile_h - PAD                    # global image row of this position
    valid = ((g_row >= 0) & (g_row < img_h) &
             (col >= PAD) & (col < img_w + PAD))
    z = jnp.where(valid, z, 0.0)

    # ---- Conv2 5x5: single lane-dense matmul (Np,128)@(128,800), bf16 -> f32 ----
    zb = z.astype(jnp.bfloat16).reshape(hh * wp, MID_CH)
    p = jnp.dot(zb, w2_ref[...], preferred_element_type=jnp.float32)
    p = p.reshape(hh, wp, KSIZE * KSIZE * OUT_CH)

    # ---- shift-and-accumulate the 25 taps (static slices, VPU adds) ----
    # initialize the accumulator from the center tap + bias (no zeros + separate add)
    kc = (PAD * KSIZE + PAD) * OUT_CH
    acc = p[PAD:PAD + tile_h, PAD:PAD + img_w, kc:kc + OUT_CH] + b2_ref[...]
    for dy in range(KSIZE):
        for dx in range(KSIZE):
            if dy == PAD and dx == PAD:
                continue
            k = (dy * KSIZE + dx) * OUT_CH
            acc = acc + p[dy:dy + tile_h, dx:dx + img_w, k:k + OUT_CH]

    out_ref[0, 0] = acc


def hovernet_dense_unit(x_nchw, params, *, tile_h=8):
    """Runs the dense unit. x_nchw: (N, Cin, H, W) float32 -> (N, Cin+32, H, W)."""
    s1, t1, w1f, b1f, w2p, b2 = params
    x_nchw = x_nchw.astype(jnp.float32)
    N, Cin, H, W = x_nchw.shape
    x_nhwc = jnp.transpose(x_nchw, (0, 2, 3, 1))          # (N, H, W, Cin) f32

    if tile_h <= 0 or tile_h > H or H % tile_h != 0:
        tile_h = H                                        # fallback: whole image per tile
    T = H // tile_h
    Hh = tile_h + 2 * PAD
    # Pad W to PAD+W+PAD rounded up to a multiple of 8 so in-kernel reshapes stay layout-clean.
    Wp = ((W + 2 * PAD + 7) // 8) * 8
    extra_w = Wp - (W + 2 * PAD)

    # Build overlapping halo'd H-tiles in the wrapper (layout plumbing, done once by XLA).
    x_pad = jnp.pad(x_nhwc, ((0, 0), (PAD, PAD), (PAD, PAD + extra_w), (0, 0)))
    x_tiles = jnp.stack(
        [x_pad[:, tt * tile_h: tt * tile_h + Hh] for tt in range(T)], axis=1)
    x_tiles = x_tiles.astype(jnp.bfloat16)                # (N, T, Hh, Wp, Cin)

    kernel = functools.partial(_dense_unit_kernel,
                               img_h=H, img_w=W, tile_h=tile_h)

    conv_out = pl.pallas_call(
        kernel,
        out_shape=jax.ShapeDtypeStruct((N, T, tile_h, W, OUT_CH), jnp.float32),
        grid_spec=pltpu.PrefetchScalarGridSpec(
            num_scalar_prefetch=0,
            grid=(N, T),
            in_specs=[
                pl.BlockSpec((1, 1, Hh, Wp, Cin), lambda n, t: (n, t, 0, 0, 0)),  # x tile
                pl.BlockSpec((1, Cin), lambda n, t: (0, 0)),                      # s1
                pl.BlockSpec((1, Cin), lambda n, t: (0, 0)),                      # t1
                pl.BlockSpec((Cin, MID_CH), lambda n, t: (0, 0)),                 # w1 (BN2 folded)
                pl.BlockSpec((1, MID_CH), lambda n, t: (0, 0)),                   # b1 (BN2 folded)
                pl.BlockSpec((MID_CH, KSIZE * KSIZE * OUT_CH),
                             lambda n, t: (0, 0)),                                # w2 packed
                pl.BlockSpec((1, OUT_CH), lambda n, t: (0, 0)),                   # b2
            ],
            out_specs=pl.BlockSpec((1, 1, tile_h, W, OUT_CH),
                                   lambda n, t: (n, t, 0, 0, 0)),
        ),
        compiler_params=pltpu.CompilerParams(
            dimension_semantics=("parallel", "parallel"),
            vmem_limit_bytes=48 * 1024 * 1024),
    )(x_tiles, s1, t1, w1f, b1f, w2p, b2)

    conv_out = conv_out.reshape(N, H, W, OUT_CH)
    # center_crop is identity (pad=2, stride=1); concat on channels in the wrapper.
    out = jnp.concatenate([x_nhwc, conv_out], axis=-1)
    return jnp.transpose(out, (0, 3, 1, 2))               # back to NCHW


def make_raw_params(key, in_channels):
    """Deterministic synthetic parameters (no checkpoint load)."""
    ks = jax.random.split(key, 12)
    g1 = 1.0 + 0.1 * jax.random.normal(ks[0], (in_channels,), jnp.float32)
    be1 = 0.1 * jax.random.normal(ks[1], (in_channels,), jnp.float32)
    m1 = 0.1 * jax.random.normal(ks[2], (in_channels,), jnp.float32)
    v1 = jax.random.uniform(ks[3], (in_channels,), jnp.float32, 0.5, 1.5)
    # Conv1 1x1: torch weight (128, Cin, 1, 1) stored as (Cin, 128)
    w1 = 0.1 * jax.random.normal(ks[4], (in_channels, MID_CH), jnp.float32)
    b1 = 0.1 * jax.random.normal(ks[5], (MID_CH,), jnp.float32)
    g2 = 1.0 + 0.1 * jax.random.normal(ks[6], (MID_CH,), jnp.float32)
    be2 = 0.1 * jax.random.normal(ks[7], (MID_CH,), jnp.float32)
    m2 = 0.1 * jax.random.normal(ks[8], (MID_CH,), jnp.float32)
    v2 = jax.random.uniform(ks[9], (MID_CH,), jnp.float32, 0.5, 1.5)
    # Conv2 5x5: torch weight (32, 128, 5, 5) stored as HWIO (5, 5, 128, 32)
    w2 = 0.05 * jax.random.normal(ks[10], (KSIZE, KSIZE, MID_CH, OUT_CH), jnp.float32)
    b2 = 0.1 * jax.random.normal(ks[11], (OUT_CH,), jnp.float32)
    return (g1, be1, m1, v1, w1, b1, g2, be2, m2, v2, w2, b2)


def fold_params(raw):
    """Fold BN (eval mode) + BN2-into-conv1 and repack w2 into kernel-ready tensors."""
    g1, be1, m1, v1, w1, b1, g2, be2, m2, v2, w2, b2 = raw
    s1 = g1 / jnp.sqrt(v1 + BN_EPS)
    t1 = be1 - m1 * s1
    s2 = g2 / jnp.sqrt(v2 + BN_EPS)
    t2 = be2 - m2 * s2
    # Fold BN2 into conv1 (exact): z*s2 + t2 = y @ (w1*s2) + (b1*s2 + t2)
    w1f = (w1 * s2[None, :]).astype(jnp.bfloat16)
    b1f = (b1 * s2 + t2).reshape(1, MID_CH).astype(jnp.float32)
    # Repack conv2 HWIO (5,5,128,32) -> lane-dense (128, 25*32), column = (dy*5+dx)*32 + o
    w2p = jnp.transpose(w2, (2, 0, 1, 3)).reshape(
        MID_CH, KSIZE * KSIZE * OUT_CH).astype(jnp.bfloat16)
    return (s1.reshape(1, -1).astype(jnp.float32),
            t1.reshape(1, -1).astype(jnp.float32),
            w1f, b1f, w2p,
            b2.reshape(1, OUT_CH).astype(jnp.float32))


def reference(x_nchw, raw):
    """Pure-JAX (XLA, f32) reference of the same forward pass, for validation."""
    g1, be1, m1, v1, w1, b1, g2, be2, m2, v2, w2, b2 = raw
    s1 = g1 / jnp.sqrt(v1 + BN_EPS); t1 = be1 - m1 * s1
    s2 = g2 / jnp.sqrt(v2 + BN_EPS); t2 = be2 - m2 * s2
    x = jnp.transpose(x_nchw, (0, 2, 3, 1))                     # NHWC
    y = jnp.maximum(x * s1 + t1, 0.0)
    z = jnp.einsum('nhwc,cd->nhwd', y, w1) + b1
    z = jnp.maximum(z * s2 + t2, 0.0)
    out = jax.lax.conv_general_dilated(
        z, w2, window_strides=(1, 1), padding=((PAD, PAD), (PAD, PAD)),
        dimension_numbers=('NHWC', 'HWIO', 'NHWC')) + b2
    out = jnp.concatenate([x, out], axis=-1)
    return jnp.transpose(out, (0, 3, 1, 2))


if __name__ == "__main__":
    key = jax.random.PRNGKey(0)
    kx, kp = jax.random.split(key)

    N, Cin, H, W = 2, 4, 16, 16
    x = jax.random.normal(kx, (N, Cin, H, W), jnp.float32)

    raw = make_raw_params(kp, Cin)
    params = fold_params(raw)

    out = jax.block_until_ready(hovernet_dense_unit(x, params, tile_h=8))
    assert out.shape == (N, Cin + OUT_CH, H, W), out.shape

    ref = jax.block_until_ready(reference(x, raw))
    max_err = float(jnp.max(jnp.abs(out - ref)))
    # bf16 MXU operands with f32 accumulation vs. a pure-f32 XLA reference.
    assert jnp.allclose(out, ref, atol=5e-2, rtol=5e-2), max_err

    print("KERNEL_OK")
</pallas_src>

<mosaic_0001>
module attributes {stable_mosaic.version = 11 : i64} {
  func.func @_dense_unit_kernel(%arg0: i32, %arg1: i32, %arg2: memref<1x1x12x24x4xbf16, #tpu.memory_space<vmem>>, %arg3: memref<1x4xf32, #tpu.memory_space<vmem>>, %arg4: memref<1x4xf32, #tpu.memory_space<vmem>>, %arg5: memref<4x128xbf16, #tpu.memory_space<vmem>>, %arg6: memref<1x128xf32, #tpu.memory_space<vmem>>, %arg7: memref<128x800xbf16, #tpu.memory_space<vmem>>, %arg8: memref<1x32xf32, #tpu.memory_space<vmem>>, %arg9: memref<1x1x8x16x32xf32, #tpu.memory_space<vmem>>) attributes {dimension_semantics = [#tpu.dimension_semantics<parallel>, #tpu.dimension_semantics<parallel>], iteration_bounds = array<i64: 2, 2>, scalar_prefetch = 0 : i64, scratch_operands = 0 : i64, tpu.core_type = #tpu.core_type<tc>, window_params = [{transform_indices = @transform_0, window_bounds = array<i64: 1, 1, 12, 24, 4>}, {pipeline_mode = #tpu.pipeline_mode<synchronous>, transform_indices = @transform_1, window_bounds = array<i64: 1, 4>}, {pipeline_mode = #tpu.pipeline_mode<synchronous>, transform_indices = @transform_2, window_bounds = array<i64: 1, 4>}, {pipeline_mode = #tpu.pipeline_mode<synchronous>, transform_indices = @transform_3, window_bounds = array<i64: 4, 128>}, {pipeline_mode = #tpu.pipeline_mode<synchronous>, transform_indices = @transform_4, window_bounds = array<i64: 1, 128>}, {pipeline_mode = #tpu.pipeline_mode<synchronous>, transform_indices = @transform_5, window_bounds = array<i64: 128, 800>}, {pipeline_mode = #tpu.pipeline_mode<synchronous>, transform_indices = @transform_6, window_bounds = array<i64: 1, 32>}, {transform_indices = @transform_7, window_bounds = array<i64: 1, 1, 8, 16, 32>}]} {
    %c0 = arith.constant 0 : index
    %c0_0 = arith.constant 0 : index
    %c0_1 = arith.constant 0 : index
    %c0_2 = arith.constant 0 : index
    %c0_3 = arith.constant 0 : index
    %0 = vector.load %arg2[%c0, %c0_0, %c0_1, %c0_2, %c0_3] : memref<1x1x12x24x4xbf16, #tpu.memory_space<vmem>>, vector<1x1x12x24x4xbf16>
    %1 = vector.shape_cast %0 : vector<1x1x12x24x4xbf16> to vector<12x24x4xbf16>
    %2 = arith.extf %1 : vector<12x24x4xbf16> to vector<12x24x4xf32>
    %3 = vector.shape_cast %2 : vector<12x24x4xf32> to vector<288x4xf32>
    %c0_4 = arith.constant 0 : index
    %c0_5 = arith.constant 0 : index
    %4 = vector.load %arg3[%c0_4, %c0_5] : memref<1x4xf32, #tpu.memory_space<vmem>>, vector<1x4xf32>
    %5 = vector.broadcast %4 : vector<1x4xf32> to vector<288x4xf32>
    %6 = arith.mulf %3, %5 : vector<288x4xf32>
    %c0_6 = arith.constant 0 : index
    %c0_7 = arith.constant 0 : index
    %7 = vector.load %arg4[%c0_6, %c0_7] : memref<1x4xf32, #tpu.memory_space<vmem>>, vector<1x4xf32>
    %8 = vector.broadcast %7 : vector<1x4xf32> to vector<288x4xf32>
    %9 = arith.addf %6, %8 : vector<288x4xf32>
    %cst = arith.constant 0.000000e+00 : f32
    %10 = vector.broadcast %cst : f32 to vector<288x4xf32>
    %11 = arith.maximumf %9, %10 : vector<288x4xf32>
    %12 = arith.truncf %11 : vector<288x4xf32> to vector<288x4xbf16>
    %c0_8 = arith.constant 0 : index
    %c0_9 = arith.constant 0 : index
    %13 = vector.load %arg5[%c0_8, %c0_9] : memref<4x128xbf16, #tpu.memory_space<vmem>>, vector<4x128xbf16>
    %cst_10 = arith.constant dense<0.000000e+00> : vector<288x128xf32>
    %14 = tpu.matmul %12, %13, %cst_10 {dimension_numbers = #tpu.dot_dimension_numbers<[1], [0], [0], [1], [0, 0, 1, 1], [], []>} : vector<288x4xbf16>, vector<4x128xbf16>, vector<288x128xf32> -> vector<288x128xf32>
    %c0_11 = arith.constant 0 : index
    %c0_12 = arith.constant 0 : index
    %15 = vector.load %arg6[%c0_11, %c0_12] : memref<1x128xf32, #tpu.memory_space<vmem>>, vector<1x128xf32>
    %16 = vector.broadcast %15 : vector<1x128xf32> to vector<288x128xf32>
    %17 = arith.addf %14, %16 : vector<288x128xf32>
    %cst_13 = arith.constant 0.000000e+00 : f32
    %18 = vector.broadcast %cst_13 : f32 to vector<288x128xf32>
    %19 = arith.maximumf %17, %18 : vector<288x128xf32>
    %20 = vector.shape_cast %19 : vector<288x128xf32> to vector<12x24x128xf32>
    %21 = tpu.iota {dimensions = array<i32: 0>} : vector<12x24x128xi32>
    %22 = tpu.iota {dimensions = array<i32: 1>} : vector<12x24x128xi32>
    %c8_i32 = arith.constant 8 : i32
    %23 = arith.muli %arg1, %c8_i32 : i32
    %24 = vector.broadcast %23 : i32 to vector<12x24x128xi32>
    %25 = arith.addi %21, %24 : vector<12x24x128xi32>
    %c2_i32 = arith.constant 2 : i32
    %26 = vector.broadcast %c2_i32 : i32 to vector<12x24x128xi32>
    %27 = arith.subi %25, %26 : vector<12x24x128xi32>
    %c0_i32 = arith.constant 0 : i32
    %28 = vector.broadcast %c0_i32 : i32 to vector<12x24x128xi32>
    %29 = arith.cmpi sge, %27, %28 : vector<12x24x128xi32>
    %c16_i32 = arith.constant 16 : i32
    %30 = vector.broadcast %c16_i32 : i32 to vector<12x24x128xi32>
    %31 = arith.cmpi slt, %27, %30 : vector<12x24x128xi32>
    %32 = arith.andi %29, %31 : vector<12x24x128xi1>
    %c2_i32_14 = arith.constant 2 : i32
    %33 = vector.broadcast %c2_i32_14 : i32 to vector<12x24x128xi32>
    %34 = arith.cmpi sge, %22, %33 : vector<12x24x128xi32>
    %35 = arith.andi %32, %34 : vector<12x24x128xi1>
    %c18_i32 = arith.constant 18 : i32
    %36 = vector.broadcast %c18_i32 : i32 to vector<12x24x128xi32>
    %37 = arith.cmpi slt, %22, %36 : vector<12x24x128xi32>
    %38 = arith.andi %35, %37 : vector<12x24x128xi1>
    %cst_15 = arith.constant 0.000000e+00 : f32
    %39 = vector.broadcast %cst_15 : f32 to vector<12x24x128xf32>
    %40 = arith.select %38, %20, %39 : vector<12x24x128xi1>, vector<12x24x128xf32>
    %41 = arith.truncf %40 : vector<12x24x128xf32> to vector<12x24x128xbf16>
    %42 = vector.shape_cast %41 : vector<12x24x128xbf16> to vector<288x128xbf16>
    %c0_16 = arith.constant 0 : index
    %c0_17 = arith.constant 0 : index
    %43 = vector.load %arg7[%c0_16, %c0_17] : memref<128x800xbf16, #tpu.memory_space<vmem>>, vector<128x800xbf16>
    %cst_18 = arith.constant dense<0.000000e+00> : vector<288x800xf32>
    %44 = tpu.matmul %42, %43, %cst_18 {dimension_numbers = #tpu.dot_dimension_numbers<[1], [0], [0], [1], [0, 0, 1, 1], [], []>} : vector<288x128xbf16>, vector<128x800xbf16>, vector<288x800xf32> -> vector<288x800xf32>
    %45 = vector.shape_cast %44 : vector<288x800xf32> to vector<12x24x800xf32>
    %46 = vector.extract_strided_slice %45 {offsets = [2, 2, 384], sizes = [8, 16, 32], strides = [1, 1, 1]} : vector<12x24x800xf32> to vector<8x16x32xf32>
    %c0_19 = arith.constant 0 : index
    %c0_20 = arith.constant 0 : index
    %47 = vector.load %arg8[%c0_19, %c0_20] : memref<1x32xf32, #tpu.memory_space<vmem>>, vector<1x32xf32>
    %48 = vector.shape_cast %47 : vector<1x32xf32> to vector<1x1x32xf32>
    %49 = vector.broadcast %48 : vector<1x1x32xf32> to vector<8x16x32xf32>
    %50 = arith.addf %46, %49 : vector<8x16x32xf32>
    %51 = vector.extract_strided_slice %45 {offsets = [0, 0, 0], sizes = [8, 16, 32], strides = [1, 1, 1]} : vector<12x24x800xf32> to vector<8x16x32xf32>
    %52 = arith.addf %50, %51 : vector<8x16x32xf32>
    %53 = vector.extract_strided_slice %45 {offsets = [0, 1, 32], sizes = [8, 16, 32], strides = [1, 1, 1]} : vector<12x24x800xf32> to vector<8x16x32xf32>
    %54 = arith.addf %52, %53 : vector<8x16x32xf32>
    %55 = vector.extract_strided_slice %45 {offsets = [0, 2, 64], sizes = [8, 16, 32], strides = [1, 1, 1]} : vector<12x24x800xf32> to vector<8x16x32xf32>
    %56 = arith.addf %54, %55 : vector<8x16x32xf32>
    %57 = vector.extract_strided_slice %45 {offsets = [0, 3, 96], sizes = [8, 16, 32], strides = [1, 1, 1]} : vector<12x24x800xf32> to vector<8x16x32xf32>
    %58 = arith.addf %56, %57 : vector<8x16x32xf32>
    %59 = vector.extract_strided_slice %45 {offsets = [0, 4, 128], sizes = [8, 16, 32], strides = [1, 1, 1]} : vector<12x24x800xf32> to vector<8x16x32xf32>
    %60 = arith.addf %58, %59 : vector<8x16x32xf32>
    %61 = vector.extract_strided_slice %45 {offsets = [1, 0, 160], sizes = [8, 16, 32], strides = [1, 1, 1]} : vector<12x24x800xf32> to vector<8x16x32xf32>
    %62 = arith.addf %60, %61 : vector<8x16x32xf32>
    %63 = vector.extract_strided_slice %45 {offsets = [1, 1, 192], sizes = [8, 16, 32], strides = [1, 1, 1]} : vector<12x24x800xf32> to vector<8x16x32xf32>
    %64 = arith.addf %62, %63 : vector<8x16x32xf32>
    %65 = vector.extract_strided_slice %45 {offsets = [1, 2, 224], sizes = [8, 16, 32], strides = [1, 1, 1]} : vector<12x24x800xf32> to vector<8x16x32xf32>
    %66 = arith.addf %64, %65 : vector<8x16x32xf32>
    %67 = vector.extract_strided_slice %45 {offsets = [1, 3, 256], sizes = [8, 16, 32], strides = [1, 1, 1]} : vector<12x24x800xf32> to vector<8x16x32xf32>
    %68 = arith.addf %66, %67 : vector<8x16x32xf32>
    %69 = vector.extract_strided_slice %45 {offsets = [1, 4, 288], sizes = [8, 16, 32], strides = [1, 1, 1]} : vector<12x24x800xf32> to vector<8x16x32xf32>
    %70 = arith.addf %68, %69 : vector<8x16x32xf32>
    %71 = vector.extract_strided_slice %45 {offsets = [2, 0, 320], sizes = [8, 16, 32], strides = [1, 1, 1]} : vector<12x24x800xf32> to vector<8x16x32xf32>
    %72 = arith.addf %70, %71 : vector<8x16x32xf32>
    %73 = vector.extract_strided_slice %45 {offsets = [2, 1, 352], sizes = [8, 16, 32], strides = [1, 1, 1]} : vector<12x24x800xf32> to vector<8x16x32xf32>
    %74 = arith.addf %72, %73 : vector<8x16x32xf32>
    %75 = vector.extract_strided_slice %45 {offsets = [2, 3, 416], sizes = [8, 16, 32], strides = [1, 1, 1]} : vector<12x24x800xf32> to vector<8x16x32xf32>
    %76 = arith.addf %74, %75 : vector<8x16x32xf32>
    %77 = vector.extract_strided_slice %45 {offsets = [2, 4, 448], sizes = [8, 16, 32], strides = [1, 1, 1]} : vector<12x24x800xf32> to vector<8x16x32xf32>
    %78 = arith.addf %76, %77 : vector<8x16x32xf32>
    %79 = vector.extract_strided_slice %45 {offsets = [3, 0, 480], sizes = [8, 16, 32], strides = [1, 1, 1]} : vector<12x24x800xf32> to vector<8x16x32xf32>
    %80 = arith.addf %78, %79 : vector<8x16x32xf32>
    %81 = vector.extract_strided_slice %45 {offsets = [3, 1, 512], sizes = [8, 16, 32], strides = [1, 1, 1]} : vector<12x24x800xf32> to vector<8x16x32xf32>
    %82 = arith.addf %80, %81 : vector<8x16x32xf32>
    %83 = vector.extract_strided_slice %45 {offsets = [3, 2, 544], sizes = [8, 16, 32], strides = [1, 1, 1]} : vector<12x24x800xf32> to vector<8x16x32xf32>
    %84 = arith.addf %82, %83 : vector<8x16x32xf32>
    %85 = vector.extract_strided_slice %45 {offsets = [3, 3, 576], sizes = [8, 16, 32], strides = [1, 1, 1]} : vector<12x24x800xf32> to vector<8x16x32xf32>
    %86 = arith.addf %84, %85 : vector<8x16x32xf32>
    %87 = vector.extract_strided_slice %45 {offsets = [3, 4, 608], sizes = [8, 16, 32], strides = [1, 1, 1]} : vector<12x24x800xf32> to vector<8x16x32xf32>
    %88 = arith.addf %86, %87 : vector<8x16x32xf32>
    %89 = vector.extract_strided_slice %45 {offsets = [4, 0, 640], sizes = [8, 16, 32], strides = [1, 1, 1]} : vector<12x24x800xf32> to vector<8x16x32xf32>
    %90 = arith.addf %88, %89 : vector<8x16x32xf32>
    %91 = vector.extract_strided_slice %45 {offsets = [4, 1, 672], sizes = [8, 16, 32], strides = [1, 1, 1]} : vector<12x24x800xf32> to vector<8x16x32xf32>
    %92 = arith.addf %90, %91 : vector<8x16x32xf32>
    %93 = vector.extract_strided_slice %45 {offsets = [4, 2, 704], sizes = [8, 16, 32], strides = [1, 1, 1]} : vector<12x24x800xf32> to vector<8x16x32xf32>
    %94 = arith.addf %92, %93 : vector<8x16x32xf32>
    %95 = vector.extract_strided_slice %45 {offsets = [4, 3, 736], sizes = [8, 16, 32], strides = [1, 1, 1]} : vector<12x24x800xf32> to vector<8x16x32xf32>
    %96 = arith.addf %94, %95 : vector<8x16x32xf32>
    %97 = vector.extract_strided_slice %45 {offsets = [4, 4, 768], sizes = [8, 16, 32], strides = [1, 1, 1]} : vector<12x24x800xf32> to vector<8x16x32xf32>
    %98 = arith.addf %96, %97 : vector<8x16x32xf32>
    %c0_21 = arith.constant 0 : index
    %c0_22 = arith.constant 0 : index
    %c0_23 = arith.constant 0 : index
    %c0_24 = arith.constant 0 : index
    %c0_25 = arith.constant 0 : index
    %99 = vector.load %arg9[%c0_21, %c0_22, %c0_23, %c0_24, %c0_25] : memref<1x1x8x16x32xf32, #tpu.memory_space<vmem>>, vector<1x1x8x16x32xf32>
    %100 = vector.shape_cast %99 : vector<1x1x8x16x32xf32> to vector<8x16x32xf32>
    %101 = vector.shape_cast %98 : vector<8x16x32xf32> to vector<1x1x8x16x32xf32>
    tpu.vector_store %arg9[%c0_21, %c0_22, %c0_23, %c0_24, %c0_25], %101 {strides = array<i32>} : memref<1x1x8x16x32xf32, #tpu.memory_space<vmem>>, vector<1x1x8x16x32xf32>,
    return
  }
  func.func @transform_0(%arg0: i32, %arg1: i32) -> (i32, i32, i32, i32, i32) {
    %c0_i32 = arith.constant 0 : i32
    %c0_i32_0 = arith.constant 0 : i32
    %c0_i32_1 = arith.constant 0 : i32
    %c0_i32_2 = arith.constant 0 : i32
    return %arg0, %arg1, %c0_i32, %c0_i32_0, %c0_i32_1 : i32, i32, i32, i32, i32
  }
  func.func @transform_1(%arg0: i32, %arg1: i32) -> (i32, i32) {
    %c0_i32 = arith.constant 0 : i32
    %c0_i32_0 = arith.constant 0 : i32
    %c0_i32_1 = arith.constant 0 : i32
    return %c0_i32, %c0_i32_0 : i32, i32
  }
  func.func @transform_2(%arg0: i32, %arg1: i32) -> (i32, i32) {
    %c0_i32 = arith.constant 0 : i32
    %c0_i32_0 = arith.constant 0 : i32
    %c0_i32_1 = arith.constant 0 : i32
    return %c0_i32, %c0_i32_0 : i32, i32
  }
  func.func @transform_3(%arg0: i32, %arg1: i32) -> (i32, i32) {
    %c0_i32 = arith.constant 0 : i32
    %c0_i32_0 = arith.constant 0 : i32
    %c0_i32_1 = arith.constant 0 : i32
    return %c0_i32, %c0_i32_0 : i32, i32
  }
  func.func @transform_4(%arg0: i32, %arg1: i32) -> (i32, i32) {
    %c0_i32 = arith.constant 0 : i32
    %c0_i32_0 = arith.constant 0 : i32
    %c0_i32_1 = arith.constant 0 : i32
    return %c0_i32, %c0_i32_0 : i32, i32
  }
  func.func @transform_5(%arg0: i32, %arg1: i32) -> (i32, i32) {
    %c0_i32 = arith.constant 0 : i32
    %c0_i32_0 = arith.constant 0 : i32
    %c0_i32_1 = arith.constant 0 : i32
    return %c0_i32, %c0_i32_0 : i32, i32
  }
  func.func @transform_6(%arg0: i32, %arg1: i32) -> (i32, i32) {
    %c0_i32 = arith.constant 0 : i32
    %c0_i32_0 = arith.constant 0 : i32
    %c0_i32_1 = arith.constant 0 : i32
    return %c0_i32, %c0_i32_0 : i32, i32
  }
  func.func @transform_7(%arg0: i32, %arg1: i32) -> (i32, i32, i32, i32, i32) {
    %c0_i32 = arith.constant 0 : i32
    %c0_i32_0 = arith.constant 0 : i32
    %c0_i32_1 = arith.constant 0 : i32
    %c0_i32_2 = arith.constant 0 : i32
    return %arg0, %arg1, %c0_i32, %c0_i32_0, %c0_i32_1 : i32, i32, i32, i32, i32
  }
}

</mosaic_0001>

<llo_original>
// kernel: tpu_custom_call.1
$region0: #{tpu_custom_call.1}
  #allocation0 [shape = 'u32[]', space=smem, size = 0x4, offset = 0x4, fixed_abs, tag = 'smem constant byte address 0x4 - core index']
  #allocation1 [shape = 'u32[144,128]{1,0:T(1,128)}', space=vmem, size = 0x12000, scoped, tag = 'internal scratch']
  %s0 = inlined_call_operand.vmem [shape: bf16[2,2,12,24,4], index: 0, kind: input, shape index: {}]
  %s1 = inlined_call_operand.vmem [shape: f32[1,4], index: 1, kind: input, shape index: {}]
  %s2 = inlined_call_operand.vmem [shape: f32[1,4], index: 2, kind: input, shape index: {}]
  %s3 = inlined_call_operand.vmem [shape: bf16[4,128], index: 3, kind: input, shape index: {}]
  %s4 = inlined_call_operand.vmem [shape: f32[1,128], index: 4, kind: input, shape index: {}]
  %s5 = inlined_call_operand.vmem [shape: bf16[128,800], index: 5, kind: input, shape index: {}]
  %s6 = inlined_call_operand.vmem [shape: f32[1,32], index: 6, kind: input, shape index: {}]
  %s7 = inlined_call_operand.hbm [shape: f32[2,2,8,16,32], index: 7, kind: output, shape index: {}]
  %s8 = sld [smem:[#allocation0]]
  $region61: #{tpu_custom_call.1} parent=0
    _
  %s10 = ssub.s32 1, %s8
  %s11 = scalar_select 0, %s10, %s8
  $region1: #{tpu_custom_call.1} parent=0
    #allocation2 [shape = 'u8[131072]{0}', space=vmem, size = 0x20000, scoped, tag = 'output window, operand 0']
    #allocation3 [shape = 's32[2]{0}', space=sflag, size = 0x8, scoped, tag = 'scoped memory for tpu_custom_call.1']
    %12 = vsyncpa [#allocation3], 0
    %s13 = scalar_lea.sflag [#allocation3], 1
    %14 = vsyncpa %s13, 0
    loop: start=0, step=1, limit=6
    $region2: #{tpu_custom_call.1} parent=1 // loop_pre_header
      _
    $region3: #{tpu_custom_call.1} parent=1 // loop_header
      %s16 = sphi 0, %s20
      %p17 = scmp.ge.s32.totalorder %s16, 6
      %s23 = sphi 0, %s35
      %s24 = sphi 0, %s31
      %s25 = sphi 0, %s23
      %s26 = sphi 0, %s24
      %s27 = sphi 0, %s25
      %s28 = sphi 0, %s26
      %s40 = sphi 0, %s42
      %s43 = sphi 0, %s40
      %s44 = sphi 0, %s43
      %s60 = sphi 0, %s44
      %s64 = sphi 0, %s64
      %s66 = sphi 0, %s64
      %s67 = sphi 0, %s66
      %s81 = sphi 0, %s67
      %s85 = sphi 0, %s85
      %s87 = sphi 0, %s85
      %s88 = sphi 0, %s87
      %s102 = sphi 0, %s88
      %s106 = sphi 0, %s106
      %s108 = sphi 0, %s106
      %s109 = sphi 0, %s108
      %s123 = sphi 0, %s109
      %s127 = sphi 0, %s127
      %s129 = sphi 0, %s127
      %s130 = sphi 0, %s129
      %s144 = sphi 0, %s130
      %s148 = sphi 0, %s148
      %s150 = sphi 0, %s148
      %s151 = sphi 0, %s150
      %s165 = sphi 0, %s151
      %s169 = sphi 0, %s169
      %s171 = sphi 0, %s169
      %s172 = sphi 0, %s171
      %s186 = sphi 0, %s172
      %s194 = sphi 0, %s196
      %s197 = sphi 0, %s194
      %s198 = sphi 0, %s197
      %s214 = sphi 0, %s198
    $region4: #{tpu_custom_call.1} parent=1 // loop_header_branch
      %19 = sbr.rel (%p17) target = $region8
    $region5: #{tpu_custom_call.1} parent=1 // loop_body
      %s21 = ssub.s32 %s16, 1
      %s22 = ssub.s32 %s16, 2
      %s29 = sadd.s32 1, %s24
      %p30 = scmp.ge.s32.totalorder %s29, 2
      %s31 = scalar_select %p30, 0, %s29
      %s32 = sadd.s32 1, %s23
      %s33 = scalar_select %p30, %s32, %s23
      %p34 = scmp.ge.s32.totalorder %s33, 2
      %s35 = scalar_select %p34, 0, %s33
      %s36 = ssub.s32 %s23, %s35
      %s37 = ssub.s32 %s24, %s31
      %s38 = sor.u32 %s36, %s37
      %p39 = scmp.eq.s32.totalorder %s38, 0
      %s41 = sadd.s32 %s40, 1
      %s42 = scalar_select %p39, %s40, %s41
      %p45 = pneg %p39
      %p46 = scmp.eq.s32.totalorder %s16, 3
      %p47 = por %p45, %p46
      %p48 = scmp.ne.s32.totalorder %s40, %s43
      %p49 = scmp.eq.s32.totalorder %s16, 0
      %p50 = por %p48, %p49
      %p51 = scmp.ne.s32.totalorder %s40, %s43
      %p52 = scmp.eq.s32.totalorder %s21, 3
      %p53 = por %p51, %p52
      %p54 = scmp.ne.s32.totalorder %s43, %s44
      %p55 = scmp.eq.s32.totalorder %s21, 0
      %p56 = por %p54, %p55
      %p57 = scmp.ne.s32.totalorder %s43, %s44
      %p58 = scmp.eq.s32.totalorder %s22, 3
      %p59 = por %p57, %p58
      %p61 = scmp.ne.s32.totalorder %s44, %s60
      %p62 = scmp.eq.s32.totalorder %s22, 0
      %p63 = por %p61, %p62
      %s65 = sadd.s32 %s64, 1
      %p68 = scmp.eq.s32.totalorder %s16, 3
      %p69 = scmp.ne.s32.totalorder %s64, %s66
      %p70 = scmp.eq.s32.totalorder %s16, 0
      %p71 = por %p69, %p70
      %p72 = scmp.ne.s32.totalorder %s64, %s66
      %p73 = scmp.eq.s32.totalorder %s21, 3
      %p74 = por %p72, %p73
      %p75 = scmp.ne.s32.totalorder %s66, %s67
      %p76 = scmp.eq.s32.totalorder %s21, 0
      %p77 = por %p75, %p76
      %p78 = scmp.ne.s32.totalorder %s66, %s67
      %p79 = scmp.eq.s32.totalorder %s22, 3
      %p80 = por %p78, %p79
      %p82 = scmp.ne.s32.totalorder %s67, %s81
      %p83 = scmp.eq.s32.totalorder %s22, 0
      %p84 = por %p82, %p83
      %s86 = sadd.s32 %s85, 1
      %p89 = scmp.eq.s32.totalorder %s16, 3
      %p90 = scmp.ne.s32.totalorder %s85, %s87
      %p91 = scmp.eq.s32.totalorder %s16, 0
      %p92 = por %p90, %p91
      %p93 = scmp.ne.s32.totalorder %s85, %s87
      %p94 = scmp.eq.s32.totalorder %s21, 3
      %p95 = por %p93, %p94
      %p96 = scmp.ne.s32.totalorder %s87, %s88
      %p97 = scmp.eq.s32.totalorder %s21, 0
      %p98 = por %p96, %p97
      %p99 = scmp.ne.s32.totalorder %s87, %s88
      %p100 = scmp.eq.s32.totalorder %s22, 3
      %p101 = por %p99, %p100
      %p103 = scmp.ne.s32.totalorder %s88, %s102
      %p104 = scmp.eq.s32.totalorder %s22, 0
      %p105 = por %p103, %p104
      %s107 = sadd.s32 %s106, 1
      %p110 = scmp.eq.s32.totalorder %s16, 3
      %p111 = scmp.ne.s32.totalorder %s106, %s108
      %p112 = scmp.eq.s32.totalorder %s16, 0
      %p113 = por %p111, %p112
      %p114 = scmp.ne.s32.totalorder %s106, %s108
      %p115 = scmp.eq.s32.totalorder %s21, 3
      %p116 = por %p114, %p115
      %p117 = scmp.ne.s32.totalorder %s108, %s109
      %p118 = scmp.eq.s32.totalorder %s21, 0
      %p119 = por %p117, %p118
      %p120 = scmp.ne.s32.totalorder %s108, %s109
      %p121 = scmp.eq.s32.totalorder %s22, 3
      %p122 = por %p120, %p121
      %p124 = scmp.ne.s32.totalorder %s109, %s123
      %p125 = scmp.eq.s32.totalorder %s22, 0
      %p126 = por %p124, %p125
      %s128 = sadd.s32 %s127, 1
      %p131 = scmp.eq.s32.totalorder %s16, 3
      %p132 = scmp.ne.s32.totalorder %s127, %s129
      %p133 = scmp.eq.s32.totalorder %s16, 0
      %p134 = por %p132, %p133
      %p135 = scmp.ne.s32.totalorder %s127, %s129
      %p136 = scmp.eq.s32.totalorder %s21, 3
      %p137 = por %p135, %p136
      %p138 = scmp.ne.s32.totalorder %s129, %s130
      %p139 = scmp.eq.s32.totalorder %s21, 0
      %p140 = por %p138, %p139
      %p141 = scmp.ne.s32.totalorder %s129, %s130
      %p142 = scmp.eq.s32.totalorder %s22, 3
      %p143 = por %p141, %p142
      %p145 = scmp.ne.s32.totalorder %s130, %s144
      %p146 = scmp.eq.s32.totalorder %s22, 0
      %p147 = por %p145, %p146
      %s149 = sadd.s32 %s148, 1
      %p152 = scmp.eq.s32.totalorder %s16, 3
      %p153 = scmp.ne.s32.totalorder %s148, %s150
      %p154 = scmp.eq.s32.totalorder %s16, 0
      %p155 = por %p153, %p154
      %p156 = scmp.ne.s32.totalorder %s148, %s150
      %p157 = scmp.eq.s32.totalorder %s21, 3
      %p158 = por %p156, %p157
      %p159 = scmp.ne.s32.totalorder %s150, %s151
      %p160 = scmp.eq.s32.totalorder %s21, 0
      %p161 = por %p159, %p160
      %p162 = scmp.ne.s32.totalorder %s150, %s151
      %p163 = scmp.eq.s32.totalorder %s22, 3
      %p164 = por %p162, %p163
      %p166 = scmp.ne.s32.totalorder %s151, %s165
      %p167 = scmp.eq.s32.totalorder %s22, 0
      %p168 = por %p166, %p167
      %s170 = sadd.s32 %s169, 1
      %p173 = scmp.eq.s32.totalorder %s16, 3
      %p174 = scmp.ne.s32.totalorder %s169, %s171
      %p175 = scmp.eq.s32.totalorder %s16, 0
      %p176 = por %p174, %p175
      %p177 = scmp.ne.s32.totalorder %s169, %s171
      %p178 = scmp.eq.s32.totalorder %s21, 3
      %p179 = por %p177, %p178
      %p180 = scmp.ne.s32.totalorder %s171, %s172
      %p181 = scmp.eq.s32.totalorder %s21, 0
      %p182 = por %p180, %p181
      %p183 = scmp.ne.s32.totalorder %s171, %s172
      %p184 = scmp.eq.s32.totalorder %s22, 3
      %p185 = por %p183, %p184
      %p187 = scmp.ne.s32.totalorder %s172, %s186
      %p188 = scmp.eq.s32.totalorder %s22, 0
      %p189 = por %p187, %p188
      %s190 = ssub.s32 %s23, %s35
      %s191 = ssub.s32 %s24, %s31
      %s192 = sor.u32 %s190, %s191
      %p193 = scmp.eq.s32.totalorder %s192, 0
      %s195 = sadd.s32 %s194, 1
      %s196 = scalar_select %p193, %s194, %s195
      %p199 = pneg %p193
      %p200 = scmp.eq.s32.totalorder %s16, 3
      %p201 = por %p199, %p200
      %p202 = scmp.ne.s32.totalorder %s194, %s197
      %p203 = scmp.eq.s32.totalorder %s16, 0
      %p204 = por %p202, %p203
      %p205 = scmp.ne.s32.totalorder %s194, %s197
      %p206 = scmp.eq.s32.totalorder %s21, 3
      %p207 = por %p205, %p206
      %p208 = scmp.ne.s32.totalorder %s197, %s198
      %p209 = scmp.eq.s32.totalorder %s21, 0
      %p210 = por %p208, %p209
      %p211 = scmp.ne.s32.totalorder %s197, %s198
      %p212 = scmp.eq.s32.totalorder %s22, 3
      %p213 = por %p211, %p212
      %p215 = scmp.ne.s32.totalorder %s198, %s214
      %p216 = scmp.eq.s32.totalorder %s22, 0
      %p217 = por %p215, %p216
      %p218 = scmp.le.s32.totalorder 1, %s16
      %p219 = scmp.lt.s32.totalorder %s16, 5
      %p220 = pnand %p218, %p219
      %p221 = pneg %p220
      // Predicated region
      $region9: #{tpu_custom_call.1} parent=5 // pred_check
        _
      $region10: #{tpu_custom_call.1} parent=5 // pred_check_branch
        %223 = sbr.rel (%p220) target = $region12
      $region11: #{tpu_custom_call.1} parent=5 // pred_region
        %s224 = ssub.s32 %s16, 1
        // Predicated region
        $region13: #{tpu_custom_call.1} parent=11 // pred_check
          %p225 = pneg %p77
        $region14: #{tpu_custom_call.1} parent=11 // pred_check_branch
          %227 = sbr.rel (%p225) target = $region16
        $region15: #{tpu_custom_call.1} parent=11 // pred_region
          _
        $region16: #{tpu_custom_call.1} parent=11 // pred_fallthru
          _
        // Predicated region
        $region17: #{tpu_custom_call.1} parent=11 // pred_check
          %p228 = pneg %p98
        $region18: #{tpu_custom_call.1} parent=11 // pred_check_branch
          %230 = sbr.rel (%p228) target = $region20
        $region19: #{tpu_custom_call.1} parent=11 // pred_region
          _
        $region20: #{tpu_custom_call.1} parent=11 // pred_fallthru
          _
        // Predicated region
        $region21: #{tpu_custom_call.1} parent=11 // pred_check
          %p231 = pneg %p119
        $region22: #{tpu_custom_call.1} parent=11 // pred_check_branch
          %233 = sbr.rel (%p231) target = $region24
        $region23: #{tpu_custom_call.1} parent=11 // pred_region
          _
        $region24: #{tpu_custom_call.1} parent=11 // pred_fallthru
          _
        // Predicated region
        $region25: #{tpu_custom_call.1} parent=11 // pred_check
          %p234 = pneg %p140
        $region26: #{tpu_custom_call.1} parent=11 // pred_check_branch
          %236 = sbr.rel (%p234) target = $region28
        $region27: #{tpu_custom_call.1} parent=11 // pred_region
          _
        $region28: #{tpu_custom_call.1} parent=11 // pred_fallthru
          _
        // Predicated region
        $region29: #{tpu_custom_call.1} parent=11 // pred_check
          %p237 = pneg %p161
        $region30: #{tpu_custom_call.1} parent=11 // pred_check_branch
          %239 = sbr.rel (%p237) target = $region32
        $region31: #{tpu_custom_call.1} parent=11 // pred_region
          _
        $region32: #{tpu_custom_call.1} parent=11 // pred_fallthru
          _
        // Predicated region
        $region33: #{tpu_custom_call.1} parent=11 // pred_check
          %p240 = pneg %p182
        $region34: #{tpu_custom_call.1} parent=11 // pred_check_branch
          %242 = sbr.rel (%p240) target = $region36
        $region35: #{tpu_custom_call.1} parent=11 // pred_region
          _
        $region36: #{tpu_custom_call.1} parent=11 // pred_fallthru
          _
      $region12: #{tpu_custom_call.1} parent=5 // pred_fallthru
        _
      %p243 = scmp.lt.s32.totalorder %s16, 4
      // Predicated region
      $region37: #{tpu_custom_call.1} parent=5 // pred_check
        %p244 = pneg %p243
      $region38: #{tpu_custom_call.1} parent=5 // pred_check_branch
        %246 = sbr.rel (%p244) target = $region40
      $region39: #{tpu_custom_call.1} parent=5 // pred_region
        // Predicated region
        $region41: #{tpu_custom_call.1} parent=39 // pred_check
          %p247 = pneg %p50
        $region42: #{tpu_custom_call.1} parent=39 // pred_check_branch
          %249 = sbr.rel (%p247) target = $region44
        $region43: #{tpu_custom_call.1} parent=39 // pred_region
          %p250 = scmp.lt.s32.totalorder %s23, 1
          %s251 = scalar_select %p250, %s23, 1
          %p252 = scmp.lt.s32.totalorder %s24, 1
          %s253 = scalar_select %p252, %s24, 1
          %s254 = smul.addr %s253, 36
          %s255 = smul.addr %s251, 72
          %s256 = sadd.s32 %s254, %s255
          %s257 = smul.addr %s256, 4
          %s258 = scalar_lea.vmem %s0, %s257
        $region44: #{tpu_custom_call.1} parent=39 // pred_fallthru
          _
      $region40: #{tpu_custom_call.1} parent=5 // pred_fallthru
        _
      %p259 = scmp.le.s32.totalorder 1, %s16
      %p260 = scmp.lt.s32.totalorder %s16, 5
      %p261 = pnand %p259, %p260
      %p262 = pneg %p261
      // Predicated region
      $region45: #{tpu_custom_call.1} parent=5 // pred_check
        _
      $region46: #{tpu_custom_call.1} parent=5 // pred_check_branch
        %264 = sbr.rel (%p261) target = $region48
      $region47: #{tpu_custom_call.1} parent=5 // pred_region
        %s265 = ssub.s32 %s16, 1
        %p266 = scmp.lt.s32.totalorder %s25, 1
        %s267 = scalar_select %p266, %s25, 1
        %p268 = scmp.lt.s32.totalorder %s26, 1
        %s269 = scalar_select %p268, %s26, 1
        %s270 = smul.addr %s269, 36
        %s271 = smul.addr %s267, 72
        %s272 = sadd.s32 %s270, %s271
        %s273 = smul.addr %s272, 4
        %s274 = scalar_lea.vmem %s0, %s273
        %p275 = pneg %p56
        %p276 = pneg %p53
        %p277 = pneg %p77
        %p278 = pneg %p74
        %p279 = pneg %p98
        %p280 = pneg %p95
        %p281 = pneg %p119
        %p282 = pneg %p116
        %p283 = pneg %p140
        %p284 = pneg %p137
        %p285 = pneg %p161
        %p286 = pneg %p158
        %p287 = pneg %p182
        %p288 = pneg %p179
        %p289 = pneg %p210
        %p290 = pneg %p207
        %s291 = sand.u32 %s197, 1
        %s292 = scalar_lea.sflag [#allocation3], %s291
        %s293 = sand.u32 %s197, 1
        %s294 = smul.addr %s293, 128
        %s295 = scalar_lea.vmem [#allocation2], %s294
        %p296 = scmp.lt.s32.totalorder %s25, 1
        %s297 = scalar_select %p296, %s25, 1
        %p298 = scmp.lt.s32.totalorder %s26, 1
        %s299 = scalar_select %p298, %s26, 1
        %s300 = smul.addr %s299, 36
        %s301 = smul.addr %s297, 72
        %s302 = sadd.s32 %s300, %s301
        %s303 = smul.addr %s302, 4
        %s304 = scalar_lea.vmem %s0, %s303
        %v306 = vld [vmem:[%s304] sm:$0xf]
        %v307 = vld [vmem:[%s304 + $0x4] sm:$0xf]
        %v308 = vld [vmem:[%s304 + $0x8] sm:$0xf]
        %v309 = vld [vmem:[%s304 + $0xc] sm:$0xf]
        %v310 = vld [vmem:[%s304 + $0x10] sm:$0xf]
        %v311 = vld [vmem:[%s304 + $0x14] sm:$0xf]
        %v312 = vld [vmem:[%s304 + $0x18] sm:$0xf]
        %v313 = vld [vmem:[%s304 + $0x1c] sm:$0xf]
        %v314 = vld [vmem:[%s304 + $0x20] sm:$0xf]
        %v315 = vld [vmem:[%s304 + $0x24] sm:$0xf]
        %v316 = vld [vmem:[%s304 + $0x28] sm:$0xf]
        %v317 = vld [vmem:[%s304 + $0x2c] sm:$0xf]
        %v318 = vld [vmem:[%s304 + $0x30] sm:$0xf]
        %v319 = vld [vmem:[%s304 + $0x34] sm:$0xf]
        %v320 = vld [vmem:[%s304 + $0x38] sm:$0xf]
        %v321 = vld [vmem:[%s304 + $0x3c] sm:$0xf]
        %v322 = vld [vmem:[%s304 + $0x40] sm:$0xf]
        %v323 = vld [vmem:[%s304 + $0x44] sm:$0xf]
        %v324 = vld [vmem:[%s304 + $0x48] sm:$0xf]
        %v325 = vld [vmem:[%s304 + $0x4c] sm:$0xf]
        %v326 = vld [vmem:[%s304 + $0x50] sm:$0xf]
        %v327 = vld [vmem:[%s304 + $0x54] sm:$0xf]
        %v328 = vld [vmem:[%s304 + $0x58] sm:$0xf]
        %v329 = vld [vmem:[%s304 + $0x5c] sm:$0xf]
        %v330 = vld [vmem:[%s304 + $0x60] sm:$0xf]
        %v331 = vld [vmem:[%s304 + $0x64] sm:$0xf]
        %v332 = vld [vmem:[%s304 + $0x68] sm:$0xf]
        %v333 = vld [vmem:[%s304 + $0x6c] sm:$0xf]
        %v334 = vld [vmem:[%s304 + $0x70] sm:$0xf]
        %v335 = vld [vmem:[%s304 + $0x74] sm:$0xf]
        %v336 = vld [vmem:[%s304 + $0x78] sm:$0xf]
        %v337 = vld [vmem:[%s304 + $0x7c] sm:$0xf]
        %v338 = vld [vmem:[%s304 + $0x80] sm:$0xf]
        %v339 = vld [vmem:[%s304 + $0x84] sm:$0xf]
        %v340 = vld [vmem:[%s304 + $0x88] sm:$0xf]
        %v341 = vld [vmem:[%s304 + $0x8c] sm:$0xf]
        %v342 = vunpack.c.l.bf16 %v306
        %v343 = vunpack.c.l.bf16 %v307
        %v344 = vunpack.c.l.bf16 %v308
        %v345 = vunpack.c.l.bf16 %v309
        %v346 = vunpack.c.l.bf16 %v310
        %v347 = vunpack.c.l.bf16 %v311
        %v348 = vunpack.c.l.bf16 %v312
        %v349 = vunpack.c.l.bf16 %v313
        %v350 = vunpack.c.l.bf16 %v314
        %v351 = vunpack.c.l.bf16 %v315
        %v352 = vunpack.c.l.bf16 %v316
        %v353 = vunpack.c.l.bf16 %v317
        %v354 = vunpack.c.l.bf16 %v318
        %v355 = vunpack.c.l.bf16 %v319
        %v356 = vunpack.c.l.bf16 %v320
        %v357 = vunpack.c.l.bf16 %v321
        %v358 = vunpack.c.l.bf16 %v322
        %v359 = vunpack.c.l.bf16 %v323
        %v360 = vunpack.c.l.bf16 %v324
        %v361 = vunpack.c.l.bf16 %v325
        %v362 = vunpack.c.l.bf16 %v326
        %v363 = vunpack.c.l.bf16 %v327
        %v364 = vunpack.c.l.bf16 %v328
        %v365 = vunpack.c.l.bf16 %v329
        %v366 = vunpack.c.l.bf16 %v330
        %v367 = vunpack.c.l.bf16 %v331
        %v368 = vunpack.c.l.bf16 %v332
        %v369 = vunpack.c.l.bf16 %v333
        %v370 = vunpack.c.l.bf16 %v334
        %v371 = vunpack.c.l.bf16 %v335
        %v372 = vunpack.c.l.bf16 %v336
        %v373 = vunpack.c.l.bf16 %v337
        %v374 = vunpack.c.l.bf16 %v338
        %v375 = vunpack.c.l.bf16 %v339
        %v376 = vunpack.c.l.bf16 %v340
        %v377 = vunpack.c.l.bf16 %v341
        %v378 = vld [vmem:[%s1] sm:$0x1]
        %v380 = vlaneseq
        %v381 = vshrl.u32 %v380, 7
        %v382 = vsub.s32 0, %v381
        %v383 = vrot.slane %v378, %v382
        %v385 = vmul.f32 %v342, %v383
        %v386 = vmul.f32 %v343, %v383
        %v387 = vmul.f32 %v344, %v383
        %v388 = vmul.f32 %v345, %v383
        %v389 = vmul.f32 %v346, %v383
        %v390 = vmul.f32 %v347, %v383
        %v391 = vmul.f32 %v348, %v383
        %v392 = vmul.f32 %v349, %v383
        %v393 = vmul.f32 %v350, %v383
        %v394 = vmul.f32 %v351, %v383
        %v395 = vmul.f32 %v352, %v383
        %v396 = vmul.f32 %v353, %v383
        %v397 = vmul.f32 %v354, %v383
        %v398 = vmul.f32 %v355, %v383
        %v399 = vmul.f32 %v356, %v383
        %v400 = vmul.f32 %v357, %v383
        %v401 = vmul.f32 %v358, %v383
        %v402 = vmul.f32 %v359, %v383
        %v403 = vmul.f32 %v360, %v383
        %v404 = vmul.f32 %v361, %v383
        %v405 = vmul.f32 %v362, %v383
        %v406 = vmul.f32 %v363, %v383
        %v407 = vmul.f32 %v364, %v383
        %v408 = vmul.f32 %v365, %v383
        %v409 = vmul.f32 %v366, %v383
        %v410 = vmul.f32 %v367, %v383
        %v411 = vmul.f32 %v368, %v383
        %v412 = vmul.f32 %v369, %v383
        %v413 = vmul.f32 %v370, %v383
        %v414 = vmul.f32 %v371, %v383
        %v415 = vmul.f32 %v372, %v383
        %v416 = vmul.f32 %v373, %v383
        %v417 = vmul.f32 %v374, %v383
        %v418 = vmul.f32 %v375, %v383
        %v419 = vmul.f32 %v376, %v383
        %v420 = vmul.f32 %v377, %v383
        %v421 = vld [vmem:[%s2] sm:$0x1]
        %v423 = vlaneseq
        %v424 = vshrl.u32 %v423, 7
        %v425 = vsub.s32 0, %v424
        %v426 = vrot.slane %v421, %v425
        %v428 = vadd.f32 %v385, %v426
        %v429 = vadd.f32 %v386, %v426
        %v430 = vadd.f32 %v387, %v426
        %v431 = vadd.f32 %v388, %v426
        %v432 = vadd.f32 %v389, %v426
        %v433 = vadd.f32 %v390, %v426
        %v434 = vadd.f32 %v391, %v426
        %v435 = vadd.f32 %v392, %v426
        %v436 = vadd.f32 %v393, %v426
        %v437 = vadd.f32 %v394, %v426
        %v438 = vadd.f32 %v395, %v426
        %v439 = vadd.f32 %v396, %v426
        %v440 = vadd.f32 %v397, %v426
        %v441 = vadd.f32 %v398, %v426
        %v442 = vadd.f32 %v399, %v426
        %v443 = vadd.f32 %v400, %v426
        %v444 = vadd.f32 %v401, %v426
        %v445 = vadd.f32 %v402, %v426
        %v446 = vadd.f32 %v403, %v426
        %v447 = vadd.f32 %v404, %v426
        %v448 = vadd.f32 %v405, %v426
        %v449 = vadd.f32 %v406, %v426
        %v450 = vadd.f32 %v407, %v426
        %v451 = vadd.f32 %v408, %v426
        %v452 = vadd.f32 %v409, %v426
        %v453 = vadd.f32 %v410, %v426
        %v454 = vadd.f32 %v411, %v426
        %v455 = vadd.f32 %v412, %v426
        %v456 = vadd.f32 %v413, %v426
        %v457 = vadd.f32 %v414, %v426
        %v458 = vadd.f32 %v415, %v426
        %v459 = vadd.f32 %v416, %v426
        %v460 = vadd.f32 %v417, %v426
        %v461 = vadd.f32 %v418, %v426
        %v462 = vadd.f32 %v419, %v426
        %v463 = vadd.f32 %v420, %v426
        %v464 = vmax.f32 %v428, 0.0
        %v465 = vmax.f32 %v429, 0.0
        %v466 = vmax.f32 %v430, 0.0
        %v467 = vmax.f32 %v431, 0.0
        %v468 = vmax.f32 %v432, 0.0
        %v469 = vmax.f32 %v433, 0.0
        %v470 = vmax.f32 %v434, 0.0
        %v471 = vmax.f32 %v435, 0.0
        %v472 = vmax.f32 %v436, 0.0
        %v473 = vmax.f32 %v437, 0.0
        %v474 = vmax.f32 %v438, 0.0
        %v475 = vmax.f32 %v439, 0.0
        %v476 = vmax.f32 %v440, 0.0
        %v477 = vmax.f32 %v441, 0.0
        %v478 = vmax.f32 %v442, 0.0
        %v479 = vmax.f32 %v443, 0.0
        %v480 = vmax.f32 %v444, 0.0
        %v481 = vmax.f32 %v445, 0.0
        %v482 = vmax.f32 %v446, 0.0
        %v483 = vmax.f32 %v447, 0.0
        %v484 = vmax.f32 %v448, 0.0
        %v485 = vmax.f32 %v449, 0.0
        %v486 = vmax.f32 %v450, 0.0
        %v487 = vmax.f32 %v451, 0.0
        %v488 = vmax.f32 %v452, 0.0
        %v489 = vmax.f32 %v453, 0.0
        %v490 = vmax.f32 %v454, 0.0
        %v491 = vmax.f32 %v455, 0.0
        %v492 = vmax.f32 %v456, 0.0
        %v493 = vmax.f32 %v457, 0.0
        %v494 = vmax.f32 %v458, 0.0
        %v495 = vmax.f32 %v459, 0.0
        %v496 = vmax.f32 %v460, 0.0
        %v497 = vmax.f32 %v461, 0.0
        %v498 = vmax.f32 %v462, 0.0
        %v499 = vmax.f32 %v463, 0.0
        %v500 = vpack.c.bf16 %v465, %v464
        %v501 = vpack.c.bf16 %v467, %v466
        %v502 = vpack.c.bf16 %v469, %v468
        %v503 = vpack.c.bf16 %v471, %v470
        %v504 = vpack.c.bf16 %v473, %v472
        %v505 = vpack.c.bf16 %v475, %v474
        %v506 = vpack.c.bf16 %v477, %v476
        %v507 = vpack.c.bf16 %v479, %v478
        %v508 = vpack.c.bf16 %v481, %v480
        %v509 = vpack.c.bf16 %v483, %v482
        %v510 = vpack.c.bf16 %v485, %v484
        %v511 = vpack.c.bf16 %v487, %v486
        %v512 = vpack.c.bf16 %v489, %v488
        %v513 = vpack.c.bf16 %v491, %v490
        %v514 = vpack.c.bf16 %v493, %v492
        %v515 = vpack.c.bf16 %v495, %v494
        %v516 = vpack.c.bf16 %v497, %v496
        %v517 = vpack.c.bf16 %v499, %v498
        %v518 = vld [vmem:[%s3] sm:$0x3]
        %v519 = vld [vmem:[%s4] sm:$0x1]
        %v521 = vlaneseq
        %v522 = vshrl.u32 %v521, 7
        %v523 = vsub.s32 0, %v522
        %v524 = vrot.slane %v519, %v523
        %vm526 = vcmask 31744
        %v528 = vsel %vm526, %v500, 0
        %v531 = vsel %vm526, %v501, 0
        %v534 = vsel %vm526, %v502, 0
        %v537 = vsel %vm526, %v503, 0
        %v540 = vsel %vm526, %v504, 0
        %v543 = vsel %vm526, %v505, 0
        %v546 = vsel %vm526, %v506, 0
        %v549 = vsel %vm526, %v507, 0
        %v552 = vsel %vm526, %v508, 0
        %v555 = vsel %vm526, %v509, 0
        %v558 = vsel %vm526, %v510, 0
        %v561 = vsel %vm526, %v511, 0
        %v564 = vsel %vm526, %v512, 0
        %v567 = vsel %vm526, %v513, 0
        %v570 = vsel %vm526, %v514, 0
        %v573 = vsel %vm526, %v515, 0
        %v576 = vsel %vm526, %v516, 0
        %v579 = vsel %vm526, %v517, 0
        %vm581 = vcmask 1041408
        %v583 = vsel %vm581, %v518, 0
        %585 = vmatprep.subr.bf16.mxu0 0
        %586 = vmatpush1.bf16.msra.mxu0 %v583
        %587 = vmatprep.subr.bf16.mxu0 0
        %588 = vmatpush1.bf16.msra.mxu0 0
        %589 = vmatprep.subr.bf16.mxu0 0
        %590 = vmatpush1.bf16.msra.mxu0 0
        %591 = vmatprep.subr.bf16.mxu0 0
        %592 = vmatpush1.bf16.msra.mxu0 0
        %593 = vmatprep.subr.bf16.mxu0 0
        %594 = vmatpush1.bf16.msra.mxu0 0
        %595 = vmatprep.subr.bf16.mxu0 0
        %596 = vmatpush1.bf16.msra.mxu0 0
        %597 = vmatprep.subr.bf16.mxu0 0
        %598 = vmatpush1.bf16.msra.mxu0 0
        %599 = vmatprep.subr.bf16.mxu0 0
        %600 = vmatpush1.bf16.msra.mxu0 0
        %601 = vmatprep.subr.bf16.mxu0 0
        %602 = vmatpush1.bf16.msra.mxu0 0
        %603 = vmatprep.subr.bf16.mxu0 0
        %604 = vmatpush1.bf16.msra.mxu0 0
        %605 = vmatprep.subr.bf16.mxu0 0
        %606 = vmatpush1.bf16.msra.mxu0 0
        %607 = vmatprep.subr.bf16.mxu0 0
        %608 = vmatpush1.bf16.msra.mxu0 0
        %609 = vmatprep.subr.bf16.mxu0 0
        %610 = vmatpush1.bf16.msra.mxu0 0
        %611 = vmatprep.subr.bf16.mxu0 0
        %612 = vmatpush1.bf16.msra.mxu0 0
        %613 = vmatprep.subr.bf16.mxu0 0
        %614 = vmatpush1.bf16.msra.mxu0 0
        %615 = vmatprep.subr.bf16.mxu0 0
        %616 = vmatpush1.bf16.msra.mxu0 0
        %617 = vmatprep.mubr.bf16.mxu0 0
        %618 = vmatmul.mubr.bf16.gmra.mrb[0].mxu0 %v528
        %v619 = vpop.f32.mrb[0].mxu0
        %v620 = vadd.f32 %v524, %v619
        %v621 = vpop.f32.mrb[0].mxu0
        %v622 = vpop.f32.mrb[0].mxu0
        %v623 = vadd.f32 %v524, %v622
        %v624 = vpop.f32.mrb[0].mxu0
        %625 = vmatprep.mubr.bf16.mxu0 0
        %626 = vmatmul.mubr.bf16.gmra.mrb[0].mxu0 %v531
        %v627 = vpop.f32.mrb[0].mxu0
        %v628 = vadd.f32 %v524, %v627
        %v629 = vpop.f32.mrb[0].mxu0
        %v630 = vpop.f32.mrb[0].mxu0
        %v631 = vadd.f32 %v524, %v630
        %v632 = vpop.f32.mrb[0].mxu0
        %633 = vmatprep.mubr.bf16.mxu0 0
        %634 = vmatmul.mubr.bf16.gmra.mrb[0].mxu0 %v534
        %v635 = vpop.f32.mrb[0].mxu0
        %v636 = vadd.f32 %v524, %v635
        %v637 = vpop.f32.mrb[0].mxu0
        %v638 = vpop.f32.mrb[0].mxu0
        %v639 = vadd.f32 %v524, %v638
        %v640 = vpop.f32.mrb[0].mxu0
        %641 = vmatprep.mubr.bf16.mxu0 0
        %642 = vmatmul.mubr.bf16.gmra.mrb[0].mxu0 %v537
        %v643 = vpop.f32.mrb[0].mxu0
        %v644 = vadd.f32 %v524, %v643
        %v645 = vpop.f32.mrb[0].mxu0
        %v646 = vpop.f32.mrb[0].mxu0
        %v647 = vadd.f32 %v524, %v646
        %v648 = vpop.f32.mrb[0].mxu0
        %649 = vmatprep.mubr.bf16.mxu0 0
        %650 = vmatmul.mubr.bf16.gmra.mrb[0].mxu0 %v540
        %v651 = vpop.f32.mrb[0].mxu0
        %v652 = vadd.f32 %v524, %v651
        %v653 = vpop.f32.mrb[0].mxu0
        %v654 = vpop.f32.mrb[0].mxu0
        %v655 = vadd.f32 %v524, %v654
        %v656 = vpop.f32.mrb[0].mxu0
        %657 = vmatprep.mubr.bf16.mxu0 0
        %658 = vmatmul.mubr.bf16.gmra.mrb[0].mxu0 %v543
        %v659 = vpop.f32.mrb[0].mxu0
        %v660 = vadd.f32 %v524, %v659
        %v661 = vpop.f32.mrb[0].mxu0
        %v662 = vpop.f32.mrb[0].mxu0
        %v663 = vadd.f32 %v524, %v662
        %v664 = vpop.f32.mrb[0].mxu0
        %665 = vmatprep.mubr.bf16.mxu0 0
        %666 = vmatmul.mubr.bf16.gmra.mrb[0].mxu0 %v546
        %v667 = vpop.f32.mrb[0].mxu0
        %v668 = vadd.f32 %v524, %v667
        %v669 = vpop.f32.mrb[0].mxu0
        %v670 = vpop.f32.mrb[0].mxu0
        %v671 = vadd.f32 %v524, %v670
        %v672 = vpop.f32.mrb[0].mxu0
        %673 = vmatprep.mubr.bf16.mxu0 0
        %674 = vmatmul.mubr.bf16.gmra.mrb[0].mxu0 %v549
        %v675 = vpop.f32.mrb[0].mxu0
        %v676 = vadd.f32 %v524, %v675
        %v677 = vpop.f32.mrb[0].mxu0
        %v678 = vpop.f32.mrb[0].mxu0
        %v679 = vadd.f32 %v524, %v678
        %v680 = vpop.f32.mrb[0].mxu0
        %681 = vmatprep.mubr.bf16.mxu0 0
        %682 = vmatmul.mubr.bf16.gmra.mrb[0].mxu0 %v552
        %v683 = vpop.f32.mrb[0].mxu0
        %v684 = vadd.f32 %v524, %v683
        %v685 = vpop.f32.mrb[0].mxu0
        %v686 = vpop.f32.mrb[0].mxu0
        %v687 = vadd.f32 %v524, %v686
        %v688 = vpop.f32.mrb[0].mxu0
        %689 = vmatprep.mubr.bf16.mxu0 0
        %690 = vmatmul.mubr.bf16.gmra.mrb[0].mxu0 %v555
        %v691 = vpop.f32.mrb[0].mxu0
        %v692 = vadd.f32 %v524, %v691
        %v693 = vpop.f32.mrb[0].mxu0
        %v694 = vpop.f32.mrb[0].mxu0
        %v695 = vadd.f32 %v524, %v694
        %v696 = vpop.f32.mrb[0].mxu0
        %697 = vmatprep.mubr.bf16.mxu0 0
        %698 = vmatmul.mubr.bf16.gmra.mrb[0].mxu0 %v558
        %v699 = vpop.f32.mrb[0].mxu0
        %v700 = vadd.f32 %v524, %v699
        %v701 = vpop.f32.mrb[0].mxu0
        %v702 = vpop.f32.mrb[0].mxu0
        %v703 = vadd.f32 %v524, %v702
        %v704 = vpop.f32.mrb[0].mxu0
        %705 = vmatprep.mubr.bf16.mxu0 0
        %706 = vmatmul.mubr.bf16.gmra.mrb[0].mxu0 %v561
        %v707 = vpop.f32.mrb[0].mxu0
        %v708 = vadd.f32 %v524, %v707
        %v709 = vpop.f32.mrb[0].mxu0
        %v710 = vpop.f32.mrb[0].mxu0
        %v711 = vadd.f32 %v524, %v710
        %v712 = vpop.f32.mrb[0].mxu0
        %713 = vmatprep.mubr.bf16.mxu0 0
        %714 = vmatmul.mubr.bf16.gmra.mrb[0].mxu0 %v564
        %v715 = vpop.f32.mrb[0].mxu0
        %v716 = vadd.f32 %v524, %v715
        %v717 = vpop.f32.mrb[0].mxu0
        %v718 = vpop.f32.mrb[0].mxu0
        %v719 = vadd.f32 %v524, %v718
        %v720 = vpop.f32.mrb[0].mxu0
        %721 = vmatprep.mubr.bf16.mxu0 0
        %722 = vmatmul.mubr.bf16.gmra.mrb[0].mxu0 %v567
        %v723 = vpop.f32.mrb[0].mxu0
        %v724 = vadd.f32 %v524, %v723
        %v725 = vpop.f32.mrb[0].mxu0
        %v726 = vpop.f32.mrb[0].mxu0
        %v727 = vadd.f32 %v524, %v726
        %v728 = vpop.f32.mrb[0].mxu0
        %729 = vmatprep.mubr.bf16.mxu0 0
        %730 = vmatmul.mubr.bf16.gmra.mrb[0].mxu0 %v570
        %v731 = vpop.f32.mrb[0].mxu0
        %v732 = vadd.f32 %v524, %v731
        %v733 = vpop.f32.mrb[0].mxu0
        %v734 = vpop.f32.mrb[0].mxu0
        %v735 = vadd.f32 %v524, %v734
        %v736 = vpop.f32.mrb[0].mxu0
        %737 = vmatprep.mubr.bf16.mxu0 0
        %738 = vmatmul.mubr.bf16.gmra.mrb[0].mxu0 %v573
        %v739 = vpop.f32.mrb[0].mxu0
        %v740 = vadd.f32 %v524, %v739
        %v741 = vpop.f32.mrb[0].mxu0
        %v742 = vpop.f32.mrb[0].mxu0
        %v743 = vadd.f32 %v524, %v742
        %v744 = vpop.f32.mrb[0].mxu0
        %745 = vmatprep.mubr.bf16.mxu0 0
        %746 = vmatmul.mubr.bf16.gmra.mrb[0].mxu0 %v576
        %v747 = vpop.f32.mrb[0].mxu0
        %v748 = vadd.f32 %v524, %v747
        %v749 = vpop.f32.mrb[0].mxu0
        %v750 = vpop.f32.mrb[0].mxu0
        %v751 = vadd.f32 %v524, %v750
        %v752 = vpop.f32.mrb[0].mxu0
        %753 = vmatprep.mubr.bf16.mxu0 0
        %754 = vmatmul.mubr.bf16.gmra.mrb[0].mxu0 %v579
        %v755 = vpop.f32.mrb[0].mxu0
        %v756 = vadd.f32 %v524, %v755
        %v757 = vpop.f32.mrb[0].mxu0
        %v758 = vpop.f32.mrb[0].mxu0
        %v759 = vadd.f32 %v524, %v758
        %v760 = vpop.f32.mrb[0].mxu0
        %761 = vdwg.mxu0
        %v762 = vmax.f32 %v620, 0.0
        %v763 = vmax.f32 %v623, 0.0
        %v764 = vmax.f32 %v628, 0.0
        %v765 = vmax.f32 %v631, 0.0
        %v766 = vmax.f32 %v636, 0.0
        %v767 = vmax.f32 %v639, 0.0
        %v768 = vmax.f32 %v644, 0.0
        %v769 = vmax.f32 %v647, 0.0
        %v770 = vmax.f32 %v652, 0.0
        %v771 = vmax.f32 %v655, 0.0
        %v772 = vmax.f32 %v660, 0.0
        %v773 = vmax.f32 %v663, 0.0
        %v774 = vmax.f32 %v668, 0.0
        %v775 = vmax.f32 %v671, 0.0
        %v776 = vmax.f32 %v676, 0.0
        %v777 = vmax.f32 %v679, 0.0
        %v778 = vmax.f32 %v684, 0.0
        %v779 = vmax.f32 %v687, 0.0
        %v780 = vmax.f32 %v692, 0.0
        %v781 = vmax.f32 %v695, 0.0
        %v782 = vmax.f32 %v700, 0.0
        %v783 = vmax.f32 %v703, 0.0
        %v784 = vmax.f32 %v708, 0.0
        %v785 = vmax.f32 %v711, 0.0
        %v786 = vmax.f32 %v716, 0.0
        %v787 = vmax.f32 %v719, 0.0
        %v788 = vmax.f32 %v724, 0.0
        %v789 = vmax.f32 %v727, 0.0
        %v790 = vmax.f32 %v732, 0.0
        %v791 = vmax.f32 %v735, 0.0
        %v792 = vmax.f32 %v740, 0.0
        %v793 = vmax.f32 %v743, 0.0
        %v794 = vmax.f32 %v748, 0.0
        %v795 = vmax.f32 %v751, 0.0
        %v796 = vmax.f32 %v756, 0.0
        %v797 = vmax.f32 %v759, 0.0
        %v798 = vlaneseq
        %v799 = vshrl.u32 %v798, 7
        %v800 = vadd.s32 %v799, 8
        %v801 = vadd.s32 %v799, 16
        %s802 = smul.u32 %s26, 8
        %v803 = vstv %s802
        %v804 = vadd.s32 %v803, 1
        %v805 = vadd.s32 %v803, 3
        %v806 = vadd.s32 %v803, 4
        %v807 = vadd.s32 %v803, 5
        %v808 = vadd.s32 %v803, 6
        %v809 = vadd.s32 %v803, 7
        %v810 = vadd.s32 %v803, 8
        %v811 = vadd.s32 %v803, 9
        %v812 = vadd.s32 %v803, 10
        %v813 = vadd.s32 %v803, 11
        %v814 = vsub.s32 %v803, 2
        %v815 = vsub.s32 %v804, 2
        %v816 = vsub.s32 %v805, 2
        %v817 = vsub.s32 %v806, 2
        %v818 = vsub.s32 %v807, 2
        %v819 = vsub.s32 %v808, 2
        %v820 = vsub.s32 %v809, 2
        %v821 = vsub.s32 %v810, 2
        %v822 = vsub.s32 %v811, 2
        %v823 = vsub.s32 %v812, 2
        %v824 = vsub.s32 %v813, 2
        %vm825 = vcmp.ge.s32.totalorder %v814, 0
        %vm826 = vcmp.ge.s32.totalorder %v815, 0
        %vm827 = vcmp.ge.s32.totalorder %v803, 0
        %vm828 = vcmp.ge.s32.totalorder %v816, 0
        %vm829 = vcmp.ge.s32.totalorder %v817, 0
        %vm830 = vcmp.ge.s32.totalorder %v818, 0
        %vm831 = vcmp.ge.s32.totalorder %v819, 0
        %vm832 = vcmp.ge.s32.totalorder %v820, 0
        %vm833 = vcmp.ge.s32.totalorder %v821, 0
        %vm834 = vcmp.ge.s32.totalorder %v822, 0
        %vm835 = vcmp.ge.s32.totalorder %v823, 0
        %vm836 = vcmp.ge.s32.totalorder %v824, 0
        %vm837 = vcmp.lt.s32.totalorder %v814, 16
        %vm838 = vcmp.lt.s32.totalorder %v815, 16
        %vm839 = vcmp.lt.s32.totalorder %v803, 16
        %vm840 = vcmp.lt.s32.totalorder %v816, 16
        %vm841 = vcmp.lt.s32.totalorder %v817, 16
        %vm842 = vcmp.lt.s32.totalorder %v818, 16
        %vm843 = vcmp.lt.s32.totalorder %v819, 16
        %vm844 = vcmp.lt.s32.totalorder %v820, 16
        %vm845 = vcmp.lt.s32.totalorder %v821, 16
        %vm846 = vcmp.lt.s32.totalorder %v822, 16
        %vm847 = vcmp.lt.s32.totalorder %v823, 16
        %vm848 = vcmp.lt.s32.totalorder %v824, 16
        %vm849 = vmand %vm825, %vm837
        %vm850 = vmand %vm826, %vm838
        %vm851 = vmand %vm827, %vm839
        %vm852 = vmand %vm828, %vm840
        %vm853 = vmand %vm829, %vm841
        %vm854 = vmand %vm830, %vm842
        %vm855 = vmand %vm831, %vm843
        %vm856 = vmand %vm832, %vm844
        %vm857 = vmand %vm833, %vm845
        %vm858 = vmand %vm834, %vm846
        %vm859 = vmand %vm835, %vm847
        %vm860 = vmand %vm836, %vm848
        %vm861 = vcmp.ge.s32.totalorder %v799, 2
        %vm862 = vcmp.ge.s32.totalorder %v800, 2
        %vm863 = vcmp.ge.s32.totalorder %v801, 2
        %vm864 = vmand %vm849, %vm861
        %vm865 = vmand %vm849, %vm862
        %vm866 = vmand %vm849, %vm863
        %vm867 = vmand %vm850, %vm861
        %vm868 = vmand %vm850, %vm862
        %vm869 = vmand %vm850, %vm863
        %vm870 = vmand %vm851, %vm861
        %vm871 = vmand %vm851, %vm862
        %vm872 = vmand %vm851, %vm863
        %vm873 = vmand %vm852, %vm861
        %vm874 = vmand %vm852, %vm862
        %vm875 = vmand %vm852, %vm863
        %vm876 = vmand %vm853, %vm861
        %vm877 = vmand %vm853, %vm862
        %vm878 = vmand %vm853, %vm863
        %vm879 = vmand %vm854, %vm861
        %vm880 = vmand %vm854, %vm862
        %vm881 = vmand %vm854, %vm863
        %vm882 = vmand %vm855, %vm861
        %vm883 = vmand %vm855, %vm862
        %vm884 = vmand %vm855, %vm863
        %vm885 = vmand %vm856, %vm861
        %vm886 = vmand %vm856, %vm862
        %vm887 = vmand %vm856, %vm863
        %vm888 = vmand %vm857, %vm861
        %vm889 = vmand %vm857, %vm862
        %vm890 = vmand %vm857, %vm863
        %vm891 = vmand %vm858, %vm861
        %vm892 = vmand %vm858, %vm862
        %vm893 = vmand %vm858, %vm863
        %vm894 = vmand %vm859, %vm861
        %vm895 = vmand %vm859, %vm862
        %vm896 = vmand %vm859, %vm863
        %vm897 = vmand %vm860, %vm861
        %vm898 = vmand %vm860, %vm862
        %vm899 = vmand %vm860, %vm863
        %vm900 = vcmp.lt.s32.totalorder %v799, 18
        %vm901 = vcmp.lt.s32.totalorder %v800, 18
        %vm902 = vcmp.lt.s32.totalorder %v801, 18
        %vm903 = vmand %vm864, %vm900
        %vm904 = vmand %vm865, %vm901
        %vm905 = vmand %vm866, %vm902
        %vm906 = vmand %vm867, %vm900
        %vm907 = vmand %vm868, %vm901
        %vm908 = vmand %vm869, %vm902
        %vm909 = vmand %vm870, %vm900
        %vm910 = vmand %vm871, %vm901
        %vm911 = vmand %vm872, %vm902
        %vm912 = vmand %vm873, %vm900
        %vm913 = vmand %vm874, %vm901
        %vm914 = vmand %vm875, %vm902
        %vm915 = vmand %vm876, %vm900
        %vm916 = vmand %vm877, %vm901
        %vm917 = vmand %vm878, %vm902
        %vm918 = vmand %vm879, %vm900
        %vm919 = vmand %vm880, %vm901
        %vm920 = vmand %vm881, %vm902
        %vm921 = vmand %vm882, %vm900
        %vm922 = vmand %vm883, %vm901
        %vm923 = vmand %vm884, %vm902
        %vm924 = vmand %vm885, %vm900
        %vm925 = vmand %vm886, %vm901
        %vm926 = vmand %vm887, %vm902
        %vm927 = vmand %vm888, %vm900
        %vm928 = vmand %vm889, %vm901
        %vm929 = vmand %vm890, %vm902
        %vm930 = vmand %vm891, %vm900
        %vm931 = vmand %vm892, %vm901
        %vm932 = vmand %vm893, %vm902
        %vm933 = vmand %vm894, %vm900
        %vm934 = vmand %vm895, %vm901
        %vm935 = vmand %vm896, %vm902
        %vm936 = vmand %vm897, %vm900
        %vm937 = vmand %vm898, %vm901
        %vm938 = vmand %vm899, %vm902
        %v939 = vsel %vm903, %v762, 0.0
        %v940 = vsel %vm904, %v763, 0.0
        %v941 = vsel %vm905, %v764, 0.0
        %v942 = vsel %vm906, %v765, 0.0
        %v943 = vsel %vm907, %v766, 0.0
        %v944 = vsel %vm908, %v767, 0.0
        %v945 = vsel %vm909, %v768, 0.0
        %v946 = vsel %vm910, %v769, 0.0
        %v947 = vsel %vm911, %v770, 0.0
        %v948 = vsel %vm912, %v771, 0.0
        %v949 = vsel %vm913, %v772, 0.0
        %v950 = vsel %vm914, %v773, 0.0
        %v951 = vsel %vm915, %v774, 0.0
        %v952 = vsel %vm916, %v775, 0.0
        %v953 = vsel %vm917, %v776, 0.0
        %v954 = vsel %vm918, %v777, 0.0
        %v955 = vsel %vm919, %v778, 0.0
        %v956 = vsel %vm920, %v779, 0.0
        %v957 = vsel %vm921, %v780, 0.0
        %v958 = vsel %vm922, %v781, 0.0
        %v959 = vsel %vm923, %v782, 0.0
        %v960 = vsel %vm924, %v783, 0.0
        %v961 = vsel %vm925, %v784, 0.0
        %v962 = vsel %vm926, %v785, 0.0
        %v963 = vsel %vm927, %v786, 0.0
        %v964 = vsel %vm928, %v787, 0.0
        %v965 = vsel %vm929, %v788, 0.0
        %v966 = vsel %vm930, %v789, 0.0
        %v967 = vsel %vm931, %v790, 0.0
        %v968 = vsel %vm932, %v791, 0.0
        %v969 = vsel %vm933, %v792, 0.0
        %v970 = vsel %vm934, %v793, 0.0
        %v971 = vsel %vm935, %v794, 0.0
        %v972 = vsel %vm936, %v795, 0.0
        %v973 = vsel %vm937, %v796, 0.0
        %v974 = vsel %vm938, %v797, 0.0
        %v975 = vpack.c.bf16 %v940, %v939
        %v976 = vpack.c.bf16 %v941, %v941
        %v977 = vpack.c.bf16 %v943, %v942
        %v978 = vpack.c.bf16 %v944, %v944
        %v979 = vpack.c.bf16 %v946, %v945
        %v980 = vpack.c.bf16 %v947, %v947
        %v981 = vpack.c.bf16 %v949, %v948
        %v982 = vpack.c.bf16 %v950, %v950
        %v983 = vpack.c.bf16 %v952, %v951
        %v984 = vpack.c.bf16 %v953, %v953
        %v985 = vpack.c.bf16 %v955, %v954
        %v986 = vpack.c.bf16 %v956, %v956
        %v987 = vpack.c.bf16 %v958, %v957
        %v988 = vpack.c.bf16 %v959, %v959
        %v989 = vpack.c.bf16 %v961, %v960
        %v990 = vpack.c.bf16 %v962, %v962
        %v991 = vpack.c.bf16 %v964, %v963
        %v992 = vpack.c.bf16 %v965, %v965
        %v993 = vpack.c.bf16 %v967, %v966
        %v994 = vpack.c.bf16 %v968, %v968
        %v995 = vpack.c.bf16 %v970, %v969
        %v996 = vpack.c.bf16 %v971, %v971
        %v997 = vpack.c.bf16 %v973, %v972
        %v998 = vpack.c.bf16 %v974, %v974
        %v1023 = vunpack.c.l.b16 %v975
        %v1024 = vunpack.c.h.b16 %v975
        %v1025 = vunpack.c.l.b16 %v976
        %v1026 = vunpack.c.l.b16 %v977
        %v1027 = vunpack.c.h.b16 %v977
        %v1028 = vunpack.c.l.b16 %v978
        %v1029 = vunpack.c.l.b16 %v979
        %v1030 = vunpack.c.h.b16 %v979
        %v1031 = vunpack.c.l.b16 %v980
        %v1032 = vunpack.c.l.b16 %v981
        %v1033 = vunpack.c.h.b16 %v981
        %v1034 = vunpack.c.l.b16 %v982
        %v1035 = vunpack.c.l.b16 %v983
        %v1036 = vunpack.c.h.b16 %v983
        %v1037 = vunpack.c.l.b16 %v984
        %v1038 = vunpack.c.l.b16 %v985
        %v1039 = vunpack.c.h.b16 %v985
        %v1040 = vunpack.c.l.b16 %v986
        %v1041 = vunpack.c.l.b16 %v987
        %v1042 = vunpack.c.h.b16 %v987
        %v1043 = vunpack.c.l.b16 %v988
        %v1044 = vunpack.c.l.b16 %v989
        %v1045 = vunpack.c.h.b16 %v989
        %v1046 = vunpack.c.l.b16 %v990
        %v1047 = vunpack.c.l.b16 %v991
        %v1048 = vunpack.c.h.b16 %v991
        %v1049 = vunpack.c.l.b16 %v992
        %v1050 = vunpack.c.l.b16 %v993
        %v1051 = vunpack.c.h.b16 %v993
        %v1052 = vunpack.c.l.b16 %v994
        %v1053 = vunpack.c.l.b16 %v995
        %v1054 = vunpack.c.h.b16 %v995
        %v1055 = vunpack.c.l.b16 %v996
        %v1056 = vunpack.c.l.b16 %v997
        %v1057 = vunpack.c.h.b16 %v997
        %v1058 = vunpack.c.l.b16 %v998
        %v1059 = vld [vmem:[%s5] sm:$0xff]
        %v1060 = vld [vmem:[%s5 + $0x8] sm:$0xff]
        %v1061 = vld [vmem:[%s5 + $0x10] sm:$0xff]
        %v1062 = vld [vmem:[%s5 + $0x18] sm:$0xf]
        %v1063 = vld [vmem:[%s5 + $0x1c] sm:$0xff]
        %v1064 = vld [vmem:[%s5 + $0x24] sm:$0xff]
        %v1065 = vld [vmem:[%s5 + $0x2c] sm:$0xff]
        %v1066 = vld [vmem:[%s5 + $0x34] sm:$0xf]
        %v1067 = vld [vmem:[%s5 + $0x38] sm:$0xff]
        %v1068 = vld [vmem:[%s5 + $0x40] sm:$0xff]
        %v1069 = vld [vmem:[%s5 + $0x48] sm:$0xff]
        %v1070 = vld [vmem:[%s5 + $0x50] sm:$0xf]
        %v1071 = vld [vmem:[%s5 + $0x54] sm:$0xff]
        %v1072 = vld [vmem:[%s5 + $0x5c] sm:$0xff]
        %v1073 = vld [vmem:[%s5 + $0x64] sm:$0xff]
        %v1074 = vld [vmem:[%s5 + $0x6c] sm:$0xf]
        %v1075 = vld [vmem:[%s5 + $0x70] sm:$0xff]
        %v1076 = vld [vmem:[%s5 + $0x78] sm:$0xff]
        %v1077 = vld [vmem:[%s5 + $0x80] sm:$0xff]
        %v1078 = vld [vmem:[%s5 + $0x88] sm:$0xf]
        %v1079 = vld [vmem:[%s5 + $0x8c] sm:$0xff]
        %v1080 = vld [vmem:[%s5 + $0x94] sm:$0xff]
        %v1081 = vld [vmem:[%s5 + $0x9c] sm:$0xff]
        %v1082 = vld [vmem:[%s5 + $0xa4] sm:$0xf]
        %v1083 = vld [vmem:[%s5 + $0xa8] sm:$0xff]
        %v1084 = vld [vmem:[%s5 + $0xb0] sm:$0xff]
        %v1085 = vld [vmem:[%s5 + $0xb8] sm:$0xff]
        %v1086 = vld [vmem:[%s5 + $0xc0] sm:$0xf]
        %v1087 = vld [vmem:[%s5 + $0xc4] sm:$0xff]
        %v1088 = vld [vmem:[%s5 + $0xcc] sm:$0xff]
        %v1089 = vld [vmem:[%s5 + $0xd4] sm:$0xff]
        %v1090 = vld [vmem:[%s5 + $0xdc] sm:$0xf]
        %v1091 = vld [vmem:[%s5 + $0xe0] sm:$0xff]
        %v1092 = vld [vmem:[%s5 + $0xe8] sm:$0xff]
        %v1093 = vld [vmem:[%s5 + $0xf0] sm:$0xff]
        %v1094 = vld [vmem:[%s5 + $0xf8] sm:$0xf]
        %v1095 = vld [vmem:[%s5 + $0xfc] sm:$0xff]
        %v1096 = vld [vmem:[%s5 + $0x104] sm:$0xff]
        %v1097 = vld [vmem:[%s5 + $0x10c] sm:$0xff]
        %v1098 = vld [vmem:[%s5 + $0x114] sm:$0xf]
        %v1099 = vld [vmem:[%s5 + $0x118] sm:$0xff]
        %v1100 = vld [vmem:[%s5 + $0x120] sm:$0xff]
        %v1101 = vld [vmem:[%s5 + $0x128] sm:$0xff]
        %v1102 = vld [vmem:[%s5 + $0x130] sm:$0xf]
        %v1103 = vld [vmem:[%s5 + $0x134] sm:$0xff]
        %v1104 = vld [vmem:[%s5 + $0x13c] sm:$0xff]
        %v1105 = vld [vmem:[%s5 + $0x144] sm:$0xff]
        %v1106 = vld [vmem:[%s5 + $0x14c] sm:$0xf]
        %v1107 = vld [vmem:[%s5 + $0x150] sm:$0xff]
        %v1108 = vld [vmem:[%s5 + $0x158] sm:$0xff]
        %v1109 = vld [vmem:[%s5 + $0x160] sm:$0xff]
        %v1110 = vld [vmem:[%s5 + $0x168] sm:$0xf]
        %v1111 = vld [vmem:[%s5 + $0x16c] sm:$0xff]
        %v1112 = vld [vmem:[%s5 + $0x174] sm:$0xff]
        %v1113 = vld [vmem:[%s5 + $0x17c] sm:$0xff]
        %v1114 = vld [vmem:[%s5 + $0x184] sm:$0xf]
        %v1115 = vld [vmem:[%s5 + $0x188] sm:$0xff]
        %v1116 = vld [vmem:[%s5 + $0x190] sm:$0xff]
        %v1117 = vld [vmem:[%s5 + $0x198] sm:$0xff]
        %v1118 = vld [vmem:[%s5 + $0x1a0] sm:$0xf]
        %v1119 = vld [vmem:[%s5 + $0x1a4] sm:$0xff]
        %v1120 = vld [vmem:[%s5 + $0x1ac] sm:$0xff]
        %v1121 = vld [vmem:[%s5 + $0x1b4] sm:$0xff]
        %v1122 = vld [vmem:[%s5 + $0x1bc] sm:$0xf]
        %v1123 = vpack.c.b16 %v1024, %v1023
        %v1124 = vpack.c.b16 %v1026, %v1025
        %v1125 = vpack.c.b16 %v1028, %v1027
        %v1126 = vpack.c.b16 %v1030, %v1029
        %v1127 = vpack.c.b16 %v1032, %v1031
        %v1128 = vpack.c.b16 %v1034, %v1033
        %v1129 = vpack.c.b16 %v1036, %v1035
        %v1130 = vpack.c.b16 %v1038, %v1037
        %v1131 = vpack.c.b16 %v1040, %v1039
        %v1132 = vpack.c.b16 %v1042, %v1041
        %v1133 = vpack.c.b16 %v1044, %v1043
        %v1134 = vpack.c.b16 %v1046, %v1045
        %v1135 = vpack.c.b16 %v1048, %v1047
        %v1136 = vpack.c.b16 %v1050, %v1049
        %v1137 = vpack.c.b16 %v1052, %v1051
        %v1138 = vpack.c.b16 %v1054, %v1053
        %v1139 = vpack.c.b16 %v1056, %v1055
        %v1140 = vpack.c.b16 %v1058, %v1057
        %v1223 = vunpack.c.l.b16 %v1059
        %v1224 = vunpack.c.h.b16 %v1059
        %v1225 = vunpack.c.l.b16 %v1060
        %v1226 = vunpack.c.h.b16 %v1060
        %v1227 = vunpack.c.l.b16 %v1061
        %v1228 = vunpack.c.h.b16 %v1061
        %v1229 = vunpack.c.l.b16 %v1062
        %v1230 = vunpack.c.l.b16 %v1063
        %v1231 = vunpack.c.h.b16 %v1063
        %v1232 = vunpack.c.l.b16 %v1064
        %v1233 = vunpack.c.h.b16 %v1064
        %v1234 = vunpack.c.l.b16 %v1065
        %v1235 = vunpack.c.h.b16 %v1065
        %v1236 = vunpack.c.l.b16 %v1066
        %v1237 = vunpack.c.l.b16 %v1067
        %v1238 = vunpack.c.h.b16 %v1067
        %v1239 = vunpack.c.l.b16 %v1068
        %v1240 = vunpack.c.h.b16 %v1068
        %v1241 = vunpack.c.l.b16 %v1069
        %v1242 = vunpack.c.h.b16 %v1069
        %v1243 = vunpack.c.l.b16 %v1070
        %v1244 = vunpack.c.l.b16 %v1071
        %v1245 = vunpack.c.h.b16 %v1071
        %v1246 = vunpack.c.l.b16 %v1072
        %v1247 = vunpack.c.h.b16 %v1072
        %v1248 = vunpack.c.l.b16 %v1073
        %v1249 = vunpack.c.h.b16 %v1073
        %v1250 = vunpack.c.l.b16 %v1074
        %v1251 = vunpack.c.l.b16 %v1075
        %v1252 = vunpack.c.h.b16 %v1075
        %v1253 = vunpack.c.l.b16 %v1076
        %v1254 = vunpack.c.h.b16 %v1076
        %v1255 = vunpack.c.l.b16 %v1077
        %v1256 = vunpack.c.h.b16 %v1077
        %v1257 = vunpack.c.l.b16 %v1078
        %v1258 = vunpack.c.l.b16 %v1079
        %v1259 = vunpack.c.h.b16 %v1079
        %v1260 = vunpack.c.l.b16 %v1080
        %v1261 = vunpack.c.h.b16 %v1080
        %v1262 = vunpack.c.l.b16 %v1081
        %v1263 = vunpack.c.h.b16 %v1081
        %v1264 = vunpack.c.l.b16 %v1082
        %v1265 = vunpack.c.l.b16 %v1083
        %v1266 = vunpack.c.h.b16 %v1083
        %v1267 = vunpack.c.l.b16 %v1084
        %v1268 = vunpack.c.h.b16 %v1084
        %v1269 = vunpack.c.l.b16 %v1085
        %v1270 = vunpack.c.h.b16 %v1085
        %v1271 = vunpack.c.l.b16 %v1086
        %v1272 = vunpack.c.l.b16 %v1087
        %v1273 = vunpack.c.h.b16 %v1087
        %v1274 = vunpack.c.l.b16 %v1088
        %v1275 = vunpack.c.h.b16 %v1088
        %v1276 = vunpack.c.l.b16 %v1089
        %v1277 = vunpack.c.h.b16 %v1089
        %v1278 = vunpack.c.l.b16 %v1090
        %v1279 = vunpack.c.l.b16 %v1091
        %v1280 = vunpack.c.h.b16 %v1091
        %v1281 = vunpack.c.l.b16 %v1092
        %v1282 = vunpack.c.h.b16 %v1092
        %v1283 = vunpack.c.l.b16 %v1093
        %v1284 = vunpack.c.h.b16 %v1093
        %v1285 = vunpack.c.l.b16 %v1094
        %v1286 = vunpack.c.l.b16 %v1095
        %v1287 = vunpack.c.h.b16 %v1095
        %v1288 = vunpack.c.l.b16 %v1096
        %v1289 = vunpack.c.h.b16 %v1096
        %v1290 = vunpack.c.l.b16 %v1097
        %v1291 = vunpack.c.h.b16 %v1097
        %v1292 = vunpack.c.l.b16 %v1098
        %v1293 = vunpack.c.l.b16 %v1099
        %v1294 = vunpack.c.h.b16 %v1099
        %v1295 = vunpack.c.l.b16 %v1100
        %v1296 = vunpack.c.h.b16 %v1100
        %v1297 = vunpack.c.l.b16 %v1101
        %v1298 = vunpack.c.h.b16 %v1101
        %v1299 = vunpack.c.l.b16 %v1102
        %v1300 = vunpack.c.l.b16 %v1103
        %v1301 = vunpack.c.h.b16 %v1103
        %v1302 = vunpack.c.l.b16 %v1104
        %v1303 = vunpack.c.h.b16 %v1104
        %v1304 = vunpack.c.l.b16 %v1105
        %v1305 = vunpack.c.h.b16 %v1105
        %v1306 = vunpack.c.l.b16 %v1106
        %v1307 = vunpack.c.l.b16 %v1107
        %v1308 = vunpack.c.h.b16 %v1107
        %v1309 = vunpack.c.l.b16 %v1108
        %v1310 = vunpack.c.h.b16 %v1108
        %v1311 = vunpack.c.l.b16 %v1109
        %v1312 = vunpack.c.h.b16 %v1109
        %v1313 = vunpack.c.l.b16 %v1110
        %v1314 = vunpack.c.l.b16 %v1111
        %v1315 = vunpack.c.h.b16 %v1111
        %v1316 = vunpack.c.l.b16 %v1112
        %v1317 = vunpack.c.h.b16 %v1112
        %v1318 = vunpack.c.l.b16 %v1113
        %v1319 = vunpack.c.h.b16 %v1113
        %v1320 = vunpack.c.l.b16 %v1114
        %v1321 = vunpack.c.l.b16 %v1115
        %v1322 = vunpack.c.h.b16 %v1115
        %v1323 = vunpack.c.l.b16 %v1116
        %v1324 = vunpack.c.h.b16 %v1116
        %v1325 = vunpack.c.l.b16 %v1117
        %v1326 = vunpack.c.h.b16 %v1117
        %v1327 = vunpack.c.l.b16 %v1118
        %v1328 = vunpack.c.l.b16 %v1119
        %v1329 = vunpack.c.h.b16 %v1119
        %v1330 = vunpack.c.l.b16 %v1120
        %v1331 = vunpack.c.h.b16 %v1120
        %v1332 = vunpack.c.l.b16 %v1121
        %v1333 = vunpack.c.h.b16 %v1121
        %v1334 = vunpack.c.l.b16 %v1122
        %v1335 = vpack.c.b16 %v1230, %v1223
        %v1336 = vpack.c.b16 %v1231, %v1224
        %v1337 = vpack.c.b16 %v1232, %v1225
        %v1338 = vpack.c.b16 %v1233, %v1226
        %v1339 = vpack.c.b16 %v1234, %v1227
        %v1340 = vpack.c.b16 %v1235, %v1228
        %v1341 = vpack.c.b16 %v1236, %v1229
        %v1342 = vpack.c.b16 %v1244, %v1237
        %v1343 = vpack.c.b16 %v1245, %v1238
        %v1344 = vpack.c.b16 %v1246, %v1239
        %v1345 = vpack.c.b16 %v1247, %v1240
        %v1346 = vpack.c.b16 %v1248, %v1241
        %v1347 = vpack.c.b16 %v1249, %v1242
        %v1348 = vpack.c.b16 %v1250, %v1243
        %v1349 = vpack.c.b16 %v1258, %v1251
        %v1350 = vpack.c.b16 %v1259, %v1252
        %v1351 = vpack.c.b16 %v1260, %v1253
        %v1352 = vpack.c.b16 %v1261, %v1254
        %v1353 = vpack.c.b16 %v1262, %v1255
        %v1354 = vpack.c.b16 %v1263, %v1256
        %v1355 = vpack.c.b16 %v1264, %v1257
        %v1356 = vpack.c.b16 %v1272, %v1265
        %v1357 = vpack.c.b16 %v1273, %v1266
        %v1358 = vpack.c.b16 %v1274, %v1267
        %v1359 = vpack.c.b16 %v1275, %v1268
        %v1360 = vpack.c.b16 %v1276, %v1269
        %v1361 = vpack.c.b16 %v1277, %v1270
        %v1362 = vpack.c.b16 %v1278, %v1271
        %v1363 = vpack.c.b16 %v1286, %v1279
        %v1364 = vpack.c.b16 %v1287, %v1280
        %v1365 = vpack.c.b16 %v1288, %v1281
        %v1366 = vpack.c.b16 %v1289, %v1282
        %v1367 = vpack.c.b16 %v1290, %v1283
        %v1368 = vpack.c.b16 %v1291, %v1284
        %v1369 = vpack.c.b16 %v1292, %v1285
        %v1370 = vpack.c.b16 %v1300, %v1293
        %v1371 = vpack.c.b16 %v1301, %v1294
        %v1372 = vpack.c.b16 %v1302, %v1295
        %v1373 = vpack.c.b16 %v1303, %v1296
        %v1374 = vpack.c.b16 %v1304, %v1297
        %v1375 = vpack.c.b16 %v1305, %v1298
        %v1376 = vpack.c.b16 %v1306, %v1299
        %v1377 = vpack.c.b16 %v1314, %v1307
        %v1378 = vpack.c.b16 %v1315, %v1308
        %v1379 = vpack.c.b16 %v1316, %v1309
        %v1380 = vpack.c.b16 %v1317, %v1310
        %v1381 = vpack.c.b16 %v1318, %v1311
        %v1382 = vpack.c.b16 %v1319, %v1312
        %v1383 = vpack.c.b16 %v1320, %v1313
        %v1384 = vpack.c.b16 %v1328, %v1321
        %v1385 = vpack.c.b16 %v1329, %v1322
        %v1386 = vpack.c.b16 %v1330, %v1323
        %v1387 = vpack.c.b16 %v1331, %v1324
        %v1388 = vpack.c.b16 %v1332, %v1325
        %v1389 = vpack.c.b16 %v1333, %v1326
        %v1390 = vpack.c.b16 %v1334, %v1327
        %1447 = vmatprep.subr.bf16.mxu0 %v1336
        %1448 = vmatpush1.bf16.msra.mxu0 %v1335
        %1449 = vmatprep.subr.bf16.mxu0 %v1343
        %1450 = vmatpush1.bf16.msra.mxu0 %v1342
        %1451 = vmatprep.subr.bf16.mxu0 %v1350
        %1452 = vmatpush1.bf16.msra.mxu0 %v1349
        %1453 = vmatprep.subr.bf16.mxu0 %v1357
        %1454 = vmatpush1.bf16.msra.mxu0 %v1356
        %1455 = vmatprep.subr.bf16.mxu0 %v1364
        %1456 = vmatpush1.bf16.msra.mxu0 %v1363
        %1457 = vmatprep.subr.bf16.mxu0 %v1371
        %1458 = vmatpush1.bf16.msra.mxu0 %v1370
        %1459 = vmatprep.subr.bf16.mxu0 %v1378
        %1460 = vmatpush1.bf16.msra.mxu0 %v1377
        %1461 = vmatprep.subr.bf16.mxu0 %v1385
        %1462 = vmatpush1.bf16.msra.mxu0 %v1384
        %1463 = vmatprep.subr.bf16.mxu0 0
        %1464 = vmatpush1.bf16.msra.mxu0 0
        %1465 = vmatprep.subr.bf16.mxu0 0
        %1466 = vmatpush1.bf16.msra.mxu0 0
        %1467 = vmatprep.subr.bf16.mxu0 0
        %1468 = vmatpush1.bf16.msra.mxu0 0
        %1469 = vmatprep.subr.bf16.mxu0 0
        %1470 = vmatpush1.bf16.msra.mxu0 0
        %1471 = vmatprep.subr.bf16.mxu0 0
        %1472 = vmatpush1.bf16.msra.mxu0 0
        %1473 = vmatprep.subr.bf16.mxu0 0
        %1474 = vmatpush1.bf16.msra.mxu0 0
        %1475 = vmatprep.subr.bf16.mxu0 0
        %1476 = vmatpush1.bf16.msra.mxu0 0
        %1477 = vmatprep.subr.bf16.mxu0 0
        %1478 = vmatpush1.bf16.msra.mxu0 0
        %1479 = vmatprep.mubr.bf16.mxu0 0
        %1480 = vmatmul.mubr.bf16.gmra.mrb[0].mxu0 %v1123
        %v1481 = vpop.f32.mrb[0].mxu0
        %v1482 = vadd.f32 0.0, %v1481
        %v1483 = vpop.f32.mrb[0].mxu0
        %v1484 = vadd.f32 0.0, %v1483
        %v1485 = vpop.f32.mrb[0].mxu0
        %v1486 = vadd.f32 0.0, %v1485
        %v1487 = vpop.f32.mrb[0].mxu0
        %v1488 = vadd.f32 0.0, %v1487
        %1489 = vmatprep.mubr.bf16.mxu0 0
        %1490 = vmatmul.mubr.bf16.gmra.mrb[0].mxu0 %v1124
        %v1491 = vpop.f32.mrb[0].mxu0
        %v1492 = vadd.f32 0.0, %v1491
        %v1493 = vpop.f32.mrb[0].mxu0
        %v1494 = vadd.f32 0.0, %v1493
        %v1495 = vpop.f32.mrb[0].mxu0
        %v1496 = vadd.f32 0.0, %v1495
        %v1497 = vpop.f32.mrb[0].mxu0
        %v1498 = vadd.f32 0.0, %v1497
        %1499 = vmatprep.mubr.bf16.mxu0 0
        %1500 = vmatmul.mubr.bf16.gmra.mrb[0].mxu0 %v1125
        %v1501 = vpop.f32.mrb[0].mxu0
        %v1502 = vadd.f32 0.0, %v1501
        %v1503 = vpop.f32.mrb[0].mxu0
        %v1504 = vadd.f32 0.0, %v1503
        %v1505 = vpop.f32.mrb[0].mxu0
        %v1506 = vadd.f32 0.0, %v1505
        %v1507 = vpop.f32.mrb[0].mxu0
        %v1508 = vadd.f32 0.0, %v1507
        %1509 = vmatprep.mubr.bf16.mxu0 0
        %1510 = vmatmul.mubr.bf16.gmra.mrb[0].mxu0 %v1126
        %v1511 = vpop.f32.mrb[0].mxu0
        %v1512 = vadd.f32 0.0, %v1511
        %v1513 = vpop.f32.mrb[0].mxu0
        %v1514 = vadd.f32 0.0, %v1513
        %v1515 = vpop.f32.mrb[0].mxu0
        %v1516 = vadd.f32 0.0, %v1515
        %v1517 = vpop.f32.mrb[0].mxu0
        %v1518 = vadd.f32 0.0, %v1517
        %1519 = vmatprep.mubr.bf16.mxu0 0
        %1520 = vmatmul.mubr.bf16.gmra.mrb[0].mxu0 %v1127
        %v1521 = vpop.f32.mrb[0].mxu0
        %v1522 = vadd.f32 0.0, %v1521
        %v1523 = vpop.f32.mrb[0].mxu0
        %v1524 = vadd.f32 0.0, %v1523
        %v1525 = vpop.f32.mrb[0].mxu0
        %v1526 = vadd.f32 0.0, %v1525
        %v1527 = vpop.f32.mrb[0].mxu0
        %v1528 = vadd.f32 0.0, %v1527
        %1529 = vmatprep.mubr.bf16.mxu0 0
        %1530 = vmatmul.mubr.bf16.gmra.mrb[0].mxu0 %v1128
        %v1531 = vpop.f32.mrb[0].mxu0
        %v1532 = vadd.f32 0.0, %v1531
        %v1533 = vpop.f32.mrb[0].mxu0
        %v1534 = vadd.f32 0.0, %v1533
        %v1535 = vpop.f32.mrb[0].mxu0
        %v1536 = vadd.f32 0.0, %v1535
        %v1537 = vpop.f32.mrb[0].mxu0
        %v1538 = vadd.f32 0.0, %v1537
        %1539 = vmatprep.mubr.bf16.mxu0 0
        %1540 = vmatmul.mubr.bf16.gmra.mrb[0].mxu0 %v1129
        %v1541 = vpop.f32.mrb[0].mxu0
        %v1542 = vadd.f32 0.0, %v1541
        %v1543 = vpop.f32.mrb[0].mxu0
        %v1544 = vadd.f32 0.0, %v1543
        %v1545 = vpop.f32.mrb[0].mxu0
        %v1546 = vadd.f32 0.0, %v1545
        %v1547 = vpop.f32.mrb[0].mxu0
        %v1548 = vadd.f32 0.0, %v1547
        %1549 = vmatprep.mubr.bf16.mxu0 0
        %1550 = vmatmul.mubr.bf16.gmra.mrb[0].mxu0 %v1130
        %v1551 = vpop.f32.mrb[0].mxu0
        %v1552 = vadd.f32 0.0, %v1551
        %v1553 = vpop.f32.mrb[0].mxu0
        %v1554 = vadd.f32 0.0, %v1553
        %v1555 = vpop.f32.mrb[0].mxu0
        %v1556 = vadd.f32 0.0, %v1555
        %v1557 = vpop.f32.mrb[0].mxu0
        %v1558 = vadd.f32 0.0, %v1557
        %1559 = vmatprep.mubr.bf16.mxu0 0
        %1560 = vmatmul.mubr.bf16.gmra.mrb[0].mxu0 %v1131
        %v1561 = vpop.f32.mrb[0].mxu0
        %v1562 = vadd.f32 0.0, %v1561
        %v1563 = vpop.f32.mrb[0].mxu0
        %v1564 = vadd.f32 0.0, %v1563
        %v1565 = vpop.f32.mrb[0].mxu0
        %v1566 = vadd.f32 0.0, %v1565
        %v1567 = vpop.f32.mrb[0].mxu0
        %v1568 = vadd.f32 0.0, %v1567
        %1569 = vmatprep.mubr.bf16.mxu0 0
        %1570 = vmatmul.mubr.bf16.gmra.mrb[0].mxu0 %v1132
        %v1571 = vpop.f32.mrb[0].mxu0
        %v1572 = vadd.f32 0.0, %v1571
        %v1573 = vpop.f32.mrb[0].mxu0
        %v1574 = vadd.f32 0.0, %v1573
        %v1575 = vpop.f32.mrb[0].mxu0
        %v1576 = vadd.f32 0.0, %v1575
        %v1577 = vpop.f32.mrb[0].mxu0
        %v1578 = vadd.f32 0.0, %v1577
        %1579 = vmatprep.mubr.bf16.mxu0 0
        %1580 = vmatmul.mubr.bf16.gmra.mrb[0].mxu0 %v1133
        %v1581 = vpop.f32.mrb[0].mxu0
        %v1582 = vadd.f32 0.0, %v1581
        %v1583 = vpop.f32.mrb[0].mxu0
        %v1584 = vadd.f32 0.0, %v1583
        %v1585 = vpop.f32.mrb[0].mxu0
        %v1586 = vadd.f32 0.0, %v1585
        %v1587 = vpop.f32.mrb[0].mxu0
        %v1588 = vadd.f32 0.0, %v1587
        %1589 = vmatprep.mubr.bf16.mxu0 0
        %1590 = vmatmul.mubr.bf16.gmra.mrb[0].mxu0 %v1134
        %v1591 = vpop.f32.mrb[0].mxu0
        %v1592 = vadd.f32 0.0, %v1591
        %v1593 = vpop.f32.mrb[0].mxu0
        %v1594 = vadd.f32 0.0, %v1593
        %v1595 = vpop.f32.mrb[0].mxu0
        %v1596 = vadd.f32 0.0, %v1595
        %v1597 = vpop.f32.mrb[0].mxu0
        %v1598 = vadd.f32 0.0, %v1597
        %1599 = vmatprep.mubr.bf16.mxu0 0
        %1600 = vmatmul.mubr.bf16.gmra.mrb[0].mxu0 %v1135
        %v1601 = vpop.f32.mrb[0].mxu0
        %v1602 = vpop.f32.mrb[0].mxu0
        %v1603 = vadd.f32 0.0, %v1602
        %v1604 = vpop.f32.mrb[0].mxu0
        %v1605 = vpop.f32.mrb[0].mxu0
        %v1606 = vadd.f32 0.0, %v1605
        %1607 = vmatprep.mubr.bf16.mxu0 0
        %1608 = vmatmul.mubr.bf16.gmra.mrb[0].mxu0 %v1136
        %v1609 = vpop.f32.mrb[0].mxu0
        %v1610 = vpop.f32.mrb[0].mxu0
        %v1611 = vadd.f32 0.0, %v1610
        %v1612 = vpop.f32.mrb[0].mxu0
        %v1613 = vpop.f32.mrb[0].mxu0
        %1614 = vmatprep.mubr.bf16.mxu0 0
        %1615 = vmatmul.mubr.bf16.gmra.mrb[0].mxu0 %v1137
        %v1616 = vpop.f32.mrb[0].mxu0
        %v1617 = vpop.f32.mrb[0].mxu0
        %v1618 = vpop.f32.mrb[0].mxu0
        %v1619 = vpop.f32.mrb[0].mxu0
        %1620 = vmatprep.mubr.bf16.mxu0 0
        %1621 = vmatmul.mubr.bf16.gmra.mrb[0].mxu0 %v1138
        %v1622 = vpop.f32.mrb[0].mxu0
        %v1623 = vpop.f32.mrb[0].mxu0
        %v1624 = vpop.f32.mrb[0].mxu0
        %v1625 = vpop.f32.mrb[0].mxu0
        %1626 = vmatprep.mubr.bf16.mxu0 0
        %1627 = vmatmul.mubr.bf16.gmra.mrb[0].mxu0 %v1139
        %v1628 = vpop.f32.mrb[0].mxu0
        %v1629 = vpop.f32.mrb[0].mxu0
        %v1630 = vpop.f32.mrb[0].mxu0
        %v1631 = vpop.f32.mrb[0].mxu0
        %1632 = vmatprep.mubr.bf16.mxu0 0
        %1633 = vmatmul.mubr.bf16.gmra.mrb[0].mxu0 %v1140
        %v1634 = vpop.f32.mrb[0].mxu0
        %v1635 = vpop.f32.mrb[0].mxu0
        %v1636 = vpop.f32.mrb[0].mxu0
        %v1637 = vpop.f32.mrb[0].mxu0
        %1638 = vdwg.mxu0
        %1639 = vmatprep.subr.bf16.mxu0 %v1338
        %1640 = vmatpush1.bf16.msra.mxu0 %v1337
        %1641 = vmatprep.subr.bf16.mxu0 %v1345
        %1642 = vmatpush1.bf16.msra.mxu0 %v1344
        %1643 = vmatprep.subr.bf16.mxu0 %v1352
        %1644 = vmatpush1.bf16.msra.mxu0 %v1351
        %1645 = vmatprep.subr.bf16.mxu0 %v1359
        %1646 = vmatpush1.bf16.msra.mxu0 %v1358
        %1647 = vmatprep.subr.bf16.mxu0 %v1366
        %1648 = vmatpush1.bf16.msra.mxu0 %v1365
        %1649 = vmatprep.subr.bf16.mxu0 %v1373
        %1650 = vmatpush1.bf16.msra.mxu0 %v1372
        %1651 = vmatprep.subr.bf16.mxu0 %v1380
        %1652 = vmatpush1.bf16.msra.mxu0 %v1379
        %1653 = vmatprep.subr.bf16.mxu0 %v1387
        %1654 = vmatpush1.bf16.msra.mxu0 %v1386
        %1655 = vmatprep.subr.bf16.mxu0 0
        %1656 = vmatpush1.bf16.msra.mxu0 0
        %1657 = vmatprep.subr.bf16.mxu0 0
        %1658 = vmatpush1.bf16.msra.mxu0 0
        %1659 = vmatprep.subr.bf16.mxu0 0
        %1660 = vmatpush1.bf16.msra.mxu0 0
        %1661 = vmatprep.subr.bf16.mxu0 0
        %1662 = vmatpush1.bf16.msra.mxu0 0
        %1663 = vmatprep.subr.bf16.mxu0 0
        %1664 = vmatpush1.bf16.msra.mxu0 0
        %1665 = vmatprep.subr.bf16.mxu0 0
        %1666 = vmatpush1.bf16.msra.mxu0 0
        %1667 = vmatprep.subr.bf16.mxu0 0
        %1668 = vmatpush1.bf16.msra.mxu0 0
        %1669 = vmatprep.subr.bf16.mxu0 0
        %1670 = vmatpush1.bf16.msra.mxu0 0
        %1671 = vmatprep.mubr.bf16.mxu0 0
        %1672 = vmatmul.mubr.bf16.gmra.mrb[0].mxu0 %v1123
        %v1673 = vpop.f32.mrb[0].mxu0
        %v1674 = vpop.f32.mrb[0].mxu0
        %v1675 = vpop.f32.mrb[0].mxu0
        %v1676 = vpop.f32.mrb[0].mxu0
        %1677 = vmatprep.mubr.bf16.mxu0 0
        %1678 = vmatmul.mubr.bf16.gmra.mrb[0].mxu0 %v1124
        %v1679 = vpop.f32.mrb[0].mxu0
        %v1680 = vpop.f32.mrb[0].mxu0
        %v1681 = vpop.f32.mrb[0].mxu0
        %v1682 = vadd.f32 0.0, %v1681
        %v1683 = vpop.f32.mrb[0].mxu0
        %1684 = vmatprep.mubr.bf16.mxu0 0
        %1685 = vmatmul.mubr.bf16.gmra.mrb[0].mxu0 %v1125
        %v1686 = vpop.f32.mrb[0].mxu0
        %v1687 = vadd.f32 0.0, %v1686
        %v1688 = vpop.f32.mrb[0].mxu0
        %v1689 = vpop.f32.mrb[0].mxu0
        %v1690 = vadd.f32 0.0, %v1689
        %v1691 = vpop.f32.mrb[0].mxu0
        %1692 = vmatprep.mubr.bf16.mxu0 0
        %1693 = vmatmul.mubr.bf16.gmra.mrb[0].mxu0 %v1126
        %v1694 = vpop.f32.mrb[0].mxu0
        %v1695 = vadd.f32 0.0, %v1694
        %v1696 = vpop.f32.mrb[0].mxu0
        %v1697 = vadd.f32 0.0, %v1696
        %v1698 = vpop.f32.mrb[0].mxu0
        %v1699 = vadd.f32 0.0, %v1698
        %v1700 = vpop.f32.mrb[0].mxu0
        %v1701 = vadd.f32 0.0, %v1700
        %1702 = vmatprep.mubr.bf16.mxu0 0
        %1703 = vmatmul.mubr.bf16.gmra.mrb[0].mxu0 %v1127
        %v1704 = vpop.f32.mrb[0].mxu0
        %v1705 = vadd.f32 0.0, %v1704
        %v1706 = vpop.f32.mrb[0].mxu0
        %v1707 = vadd.f32 0.0, %v1706
        %v1708 = vpop.f32.mrb[0].mxu0
        %v1709 = vadd.f32 0.0, %v1708
        %v1710 = vpop.f32.mrb[0].mxu0
        %v1711 = vadd.f32 0.0, %v1710
        %1712 = vmatprep.mubr.bf16.mxu0 0
        %1713 = vmatmul.mubr.bf16.gmra.mrb[0].mxu0 %v1128
        %v1714 = vpop.f32.mrb[0].mxu0
        %v1715 = vadd.f32 0.0, %v1714
        %v1716 = vpop.f32.mrb[0].mxu0
        %v1717 = vadd.f32 0.0, %v1716
        %v1718 = vpop.f32.mrb[0].mxu0
        %v1719 = vadd.f32 0.0, %v1718
        %v1720 = vpop.f32.mrb[0].mxu0
        %v1721 = vadd.f32 0.0, %v1720
        %1722 = vmatprep.mubr.bf16.mxu0 0
        %1723 = vmatmul.mubr.bf16.gmra.mrb[0].mxu0 %v1129
        %v1724 = vpop.f32.mrb[0].mxu0
        %v1725 = vadd.f32 0.0, %v1724
        %v1726 = vpop.f32.mrb[0].mxu0
        %v1727 = vadd.f32 0.0, %v1726
        %v1728 = vpop.f32.mrb[0].mxu0
        %v1729 = vadd.f32 0.0, %v1728
        %v1730 = vpop.f32.mrb[0].mxu0
        %v1731 = vadd.f32 0.0, %v1730
        %1732 = vmatprep.mubr.bf16.mxu0 0
        %1733 = vmatmul.mubr.bf16.gmra.mrb[0].mxu0 %v1130
        %v1734 = vpop.f32.mrb[0].mxu0
        %v1735 = vadd.f32 0.0, %v1734
        %v1736 = vpop.f32.mrb[0].mxu0
        %v1737 = vadd.f32 0.0, %v1736
        %v1738 = vpop.f32.mrb[0].mxu0
        %v1739 = vadd.f32 0.0, %v1738
        %v1740 = vpop.f32.mrb[0].mxu0
        %v1741 = vadd.f32 0.0, %v1740
        %1742 = vmatprep.mubr.bf16.mxu0 0
        %1743 = vmatmul.mubr.bf16.gmra.mrb[0].mxu0 %v1131
        %v1744 = vpop.f32.mrb[0].mxu0
        %v1745 = vadd.f32 0.0, %v1744
        %v1746 = vpop.f32.mrb[0].mxu0
        %v1747 = vadd.f32 0.0, %v1746
        %v1748 = vpop.f32.mrb[0].mxu0
        %v1749 = vadd.f32 0.0, %v1748
        %v1750 = vpop.f32.mrb[0].mxu0
        %v1751 = vadd.f32 0.0, %v1750
        %1752 = vmatprep.mubr.bf16.mxu0 0
        %1753 = vmatmul.mubr.bf16.gmra.mrb[0].mxu0 %v1132
        %v1754 = vpop.f32.mrb[0].mxu0
        %v1755 = vadd.f32 0.0, %v1754
        %v1756 = vpop.f32.mrb[0].mxu0
        %v1757 = vadd.f32 0.0, %v1756
        %v1758 = vpop.f32.mrb[0].mxu0
        %v1759 = vadd.f32 0.0, %v1758
        %v1760 = vpop.f32.mrb[0].mxu0
        %v1761 = vadd.f32 0.0, %v1760
        %1762 = vmatprep.mubr.bf16.mxu0 0
        %1763 = vmatmul.mubr.bf16.gmra.mrb[0].mxu0 %v1133
        %v1764 = vpop.f32.mrb[0].mxu0
        %v1765 = vadd.f32 0.0, %v1764
        %v1766 = vpop.f32.mrb[0].mxu0
        %v1767 = vadd.f32 0.0, %v1766
        %v1768 = vpop.f32.mrb[0].mxu0
        %v1769 = vadd.f32 0.0, %v1768
        %v1770 = vpop.f32.mrb[0].mxu0
        %v1771 = vadd.f32 0.0, %v1770
        %1772 = vmatprep.mubr.bf16.mxu0 0
        %1773 = vmatmul.mubr.bf16.gmra.mrb[0].mxu0 %v1134
        %v1774 = vpop.f32.mrb[0].mxu0
        %v1775 = vadd.f32 0.0, %v1774
        %v1776 = vpop.f32.mrb[0].mxu0
        %v1777 = vadd.f32 0.0, %v1776
        %v1778 = vpop.f32.mrb[0].mxu0
        %v1779 = vadd.f32 0.0, %v1778
        %v1780 = vpop.f32.mrb[0].mxu0
        %v1781 = vadd.f32 0.0, %v1780
        %1782 = vmatprep.mubr.bf16.mxu0 0
        %1783 = vmatmul.mubr.bf16.gmra.mrb[0].mxu0 %v1135
        %v1784 = vpop.f32.mrb[0].mxu0
        %v1785 = vadd.f32 0.0, %v1784
        %v1786 = vpop.f32.mrb[0].mxu0
        %v1787 = vadd.f32 0.0, %v1786
        %v1788 = vpop.f32.mrb[0].mxu0
        %v1789 = vadd.f32 0.0, %v1788
        %v1790 = vpop.f32.mrb[0].mxu0
        %v1791 = vadd.f32 0.0, %v1790
        %1792 = vmatprep.mubr.bf16.mxu0 0
        %1793 = vmatmul.mubr.bf16.gmra.mrb[0].mxu0 %v1136
        %v1794 = vpop.f32.mrb[0].mxu0
        %v1795 = vadd.f32 0.0, %v1794
        %v1796 = vpop.f32.mrb[0].mxu0
        %v1797 = vadd.f32 0.0, %v1796
        %v1798 = vpop.f32.mrb[0].mxu0
        %v1799 = vadd.f32 0.0, %v1798
        %v1800 = vpop.f32.mrb[0].mxu0
        %v1801 = vadd.f32 0.0, %v1800
        %1802 = vmatprep.mubr.bf16.mxu0 0
        %1803 = vmatmul.mubr.bf16.gmra.mrb[0].mxu0 %v1137
        %v1804 = vpop.f32.mrb[0].mxu0
        %v1805 = vadd.f32 0.0, %v1804
        %v1806 = vpop.f32.mrb[0].mxu0
        %v1807 = vadd.f32 0.0, %v1806
        %v1808 = vpop.f32.mrb[0].mxu0
        %v1809 = vadd.f32 0.0, %v1808
        %v1810 = vpop.f32.mrb[0].mxu0
        %v1811 = vadd.f32 0.0, %v1810
        %1812 = vmatprep.mubr.bf16.mxu0 0
        %1813 = vmatmul.mubr.bf16.gmra.mrb[0].mxu0 %v1138
        %v1814 = vpop.f32.mrb[0].mxu0
        %v1815 = vpop.f32.mrb[0].mxu0
        %v1816 = vadd.f32 0.0, %v1815
        %v1817 = vpop.f32.mrb[0].mxu0
        %v1818 = vpop.f32.mrb[0].mxu0
        %v1819 = vadd.f32 0.0, %v1818
        %1820 = vmatprep.mubr.bf16.mxu0 0
        %1821 = vmatmul.mubr.bf16.gmra.mrb[0].mxu0 %v1139
        %v1822 = vpop.f32.mrb[0].mxu0
        %v1823 = vpop.f32.mrb[0].mxu0
        %v1824 = vpop.f32.mrb[0].mxu0
        %v1825 = vpop.f32.mrb[0].mxu0
        %1826 = vmatprep.mubr.bf16.mxu0 0
        %1827 = vmatmul.mubr.bf16.gmra.mrb[0].mxu0 %v1140
        %v1828 = vpop.f32.mrb[0].mxu0
        %v1829 = vpop.f32.mrb[0].mxu0
        %v1830 = vpop.f32.mrb[0].mxu0
        %v1831 = vpop.f32.mrb[0].mxu0
        %1832 = vdwg.mxu0
        %1833 = vmatprep.subr.bf16.mxu0 %v1340
        %1834 = vmatpush1.bf16.msra.mxu0 %v1339
        %1835 = vmatprep.subr.bf16.mxu0 %v1347
        %1836 = vmatpush1.bf16.msra.mxu0 %v1346
        %1837 = vmatprep.subr.bf16.mxu0 %v1354
        %1838 = vmatpush1.bf16.msra.mxu0 %v1353
        %1839 = vmatprep.subr.bf16.mxu0 %v1361
        %1840 = vmatpush1.bf16.msra.mxu0 %v1360
        %1841 = vmatprep.subr.bf16.mxu0 %v1368
        %1842 = vmatpush1.bf16.msra.mxu0 %v1367
        %1843 = vmatprep.subr.bf16.mxu0 %v1375
        %1844 = vmatpush1.bf16.msra.mxu0 %v1374
        %1845 = vmatprep.subr.bf16.mxu0 %v1382
        %1846 = vmatpush1.bf16.msra.mxu0 %v1381
        %1847 = vmatprep.subr.bf16.mxu0 %v1389
        %1848 = vmatpush1.bf16.msra.mxu0 %v1388
        %1849 = vmatprep.subr.bf16.mxu0 0
        %1850 = vmatpush1.bf16.msra.mxu0 0
        %1851 = vmatprep.subr.bf16.mxu0 0
        %1852 = vmatpush1.bf16.msra.mxu0 0
        %1853 = vmatprep.subr.bf16.mxu0 0
        %1854 = vmatpush1.bf16.msra.mxu0 0
        %1855 = vmatprep.subr.bf16.mxu0 0
        %1856 = vmatpush1.bf16.msra.mxu0 0
        %1857 = vmatprep.subr.bf16.mxu0 0
        %1858 = vmatpush1.bf16.msra.mxu0 0
        %1859 = vmatprep.subr.bf16.mxu0 0
        %1860 = vmatpush1.bf16.msra.mxu0 0
        %1861 = vmatprep.subr.bf16.mxu0 0
        %1862 = vmatpush1.bf16.msra.mxu0 0
        %1863 = vmatprep.subr.bf16.mxu0 0
        %1864 = vmatpush1.bf16.msra.mxu0 0
        %1865 = vmatprep.mubr.bf16.mxu0 0
        %1866 = vmatmul.mubr.bf16.gmra.mrb[0].mxu0 %v1123
        %v1867 = vpop.f32.mrb[0].mxu0
        %v1868 = vpop.f32.mrb[0].mxu0
        %v1869 = vpop.f32.mrb[0].mxu0
        %v1870 = vpop.f32.mrb[0].mxu0
        %1871 = vmatprep.mubr.bf16.mxu0 0
        %1872 = vmatmul.mubr.bf16.gmra.mrb[0].mxu0 %v1124
        %v1873 = vpop.f32.mrb[0].mxu0
        %v1874 = vpop.f32.mrb[0].mxu0
        %v1875 = vpop.f32.mrb[0].mxu0
        %v1876 = vpop.f32.mrb[0].mxu0
        %1877 = vmatprep.mubr.bf16.mxu0 0
        %1878 = vmatmul.mubr.bf16.gmra.mrb[0].mxu0 %v1125
        %v1879 = vpop.f32.mrb[0].mxu0
        %v1880 = vpop.f32.mrb[0].mxu0
        %v1881 = vpop.f32.mrb[0].mxu0
        %v1882 = vpop.f32.mrb[0].mxu0
        %1883 = vmatprep.mubr.bf16.mxu0 0
        %1884 = vmatmul.mubr.bf16.gmra.mrb[0].mxu0 %v1126
        %v1885 = vpop.f32.mrb[0].mxu0
        %v1886 = vpop.f32.mrb[0].mxu0
        %v1887 = vpop.f32.mrb[0].mxu0
        %v1888 = vpop.f32.mrb[0].mxu0
        %1889 = vmatprep.mubr.bf16.mxu0 0
        %1890 = vmatmul.mubr.bf16.gmra.mrb[0].mxu0 %v1127
        %v1891 = vpop.f32.mrb[0].mxu0
        %v1892 = vpop.f32.mrb[0].mxu0
        %v1893 = vpop.f32.mrb[0].mxu0
        %v1894 = vadd.f32 0.0, %v1893
        %v1895 = vpop.f32.mrb[0].mxu0
        %1896 = vmatprep.mubr.bf16.mxu0 0
        %1897 = vmatmul.mubr.bf16.gmra.mrb[0].mxu0 %v1128
        %v1898 = vpop.f32.mrb[0].mxu0
        %v1899 = vadd.f32 0.0, %v1898
        %v1900 = vpop.f32.mrb[0].mxu0
        %v1901 = vpop.f32.mrb[0].mxu0
        %v1902 = vadd.f32 0.0, %v1901
        %v1903 = vpop.f32.mrb[0].mxu0
        %1904 = vmatprep.mubr.bf16.mxu0 0
        %1905 = vmatmul.mubr.bf16.gmra.mrb[0].mxu0 %v1129
        %v1906 = vpop.f32.mrb[0].mxu0
        %v1907 = vadd.f32 0.0, %v1906
        %v1908 = vpop.f32.mrb[0].mxu0
        %v1909 = vadd.f32 0.0, %v1908
        %v1910 = vpop.f32.mrb[0].mxu0
        %v1911 = vadd.f32 0.0, %v1910
        %v1912 = vpop.f32.mrb[0].mxu0
        %v1913 = vadd.f32 0.0, %v1912
        %1914 = vmatprep.mubr.bf16.mxu0 0
        %1915 = vmatmul.mubr.bf16.gmra.mrb[0].mxu0 %v1130
        %v1916 = vpop.f32.mrb[0].mxu0
        %v1917 = vadd.f32 0.0, %v1916
        %v1918 = vpop.f32.mrb[0].mxu0
        %v1919 = vadd.f32 0.0, %v1918
        %v1920 = vpop.f32.mrb[0].mxu0
        %v1921 = vadd.f32 0.0, %v1920
        %v1922 = vpop.f32.mrb[0].mxu0
        %v1923 = vadd.f32 0.0, %v1922
        %1924 = vmatprep.mubr.bf16.mxu0 0
        %1925 = vmatmul.mubr.bf16.gmra.mrb[0].mxu0 %v1131
        %v1926 = vpop.f32.mrb[0].mxu0
        %v1927 = vadd.f32 0.0, %v1926
        %v1928 = vpop.f32.mrb[0].mxu0
        %v1929 = vadd.f32 0.0, %v1928
        %v1930 = vpop.f32.mrb[0].mxu0
        %v1931 = vadd.f32 0.0, %v1930
        %v1932 = vpop.f32.mrb[0].mxu0
        %v1933 = vadd.f32 0.0, %v1932
        %1934 = vmatprep.mubr.bf16.mxu0 0
        %1935 = vmatmul.mubr.bf16.gmra.mrb[0].mxu0 %v1132
        %v1936 = vpop.f32.mrb[0].mxu0
        %v1937 = vadd.f32 0.0, %v1936
        %v1938 = vpop.f32.mrb[0].mxu0
        %v1939 = vadd.f32 0.0, %v1938
        %v1940 = vpop.f32.mrb[0].mxu0
        %v1941 = vadd.f32 0.0, %v1940
        %v1942 = vpop.f32.mrb[0].mxu0
        %v1943 = vadd.f32 0.0, %v1942
        %1944 = vmatprep.mubr.bf16.mxu0 0
        %1945 = vmatmul.mubr.bf16.gmra.mrb[0].mxu0 %v1133
        %v1946 = vpop.f32.mrb[0].mxu0
        %v1947 = vadd.f32 0.0, %v1946
        %v1948 = vpop.f32.mrb[0].mxu0
        %v1949 = vadd.f32 0.0, %v1948
        %v1950 = vpop.f32.mrb[0].mxu0
        %v1951 = vadd.f32 0.0, %v1950
        %v1952 = vpop.f32.mrb[0].mxu0
        %v1953 = vadd.f32 0.0, %v1952
        %1954 = vmatprep.mubr.bf16.mxu0 0
        %1955 = vmatmul.mubr.bf16.gmra.mrb[0].mxu0 %v1134
        %v1956 = vpop.f32.mrb[0].mxu0
        %v1957 = vadd.f32 0.0, %v1956
        %v1958 = vpop.f32.mrb[0].mxu0
        %v1959 = vadd.f32 0.0, %v1958
        %v1960 = vpop.f32.mrb[0].mxu0
        %v1961 = vadd.f32 0.0, %v1960
        %v1962 = vpop.f32.mrb[0].mxu0
        %v1963 = vadd.f32 0.0, %v1962
        %1964 = vmatprep.mubr.bf16.mxu0 0
        %1965 = vmatmul.mubr.bf16.gmra.mrb[0].mxu0 %v1135
        %v1966 = vpop.f32.mrb[0].mxu0
        %v1967 = vadd.f32 0.0, %v1966
        %v1968 = vpop.f32.mrb[0].mxu0
        %v1969 = vadd.f32 0.0, %v1968
        %v1970 = vpop.f32.mrb[0].mxu0
        %v1971 = vadd.f32 0.0, %v1970
        %v1972 = vpop.f32.mrb[0].mxu0
        %v1973 = vadd.f32 0.0, %v1972
        %1974 = vmatprep.mubr.bf16.mxu0 0
        %1975 = vmatmul.mubr.bf16.gmra.mrb[0].mxu0 %v1136
        %v1976 = vpop.f32.mrb[0].mxu0
        %v1977 = vadd.f32 0.0, %v1976
        %v1978 = vpop.f32.mrb[0].mxu0
        %v1979 = vadd.f32 0.0, %v1978
        %v1980 = vpop.f32.mrb[0].mxu0
        %v1981 = vadd.f32 0.0, %v1980
        %v1982 = vpop.f32.mrb[0].mxu0
        %v1983 = vadd.f32 0.0, %v1982
        %1984 = vmatprep.mubr.bf16.mxu0 0
        %1985 = vmatmul.mubr.bf16.gmra.mrb[0].mxu0 %v1137
        %v1986 = vpop.f32.mrb[0].mxu0
        %v1987 = vadd.f32 0.0, %v1986
        %v1988 = vpop.f32.mrb[0].mxu0
        %v1989 = vadd.f32 0.0, %v1988
        %v1990 = vpop.f32.mrb[0].mxu0
        %v1991 = vadd.f32 0.0, %v1990
        %v1992 = vpop.f32.mrb[0].mxu0
        %v1993 = vadd.f32 0.0, %v1992
        %1994 = vmatprep.mubr.bf16.mxu0 0
        %1995 = vmatmul.mubr.bf16.gmra.mrb[0].mxu0 %v1138
        %v1996 = vpop.f32.mrb[0].mxu0
        %v1997 = vadd.f32 0.0, %v1996
        %v1998 = vpop.f32.mrb[0].mxu0
        %v1999 = vadd.f32 0.0, %v1998
        %v2000 = vpop.f32.mrb[0].mxu0
        %v2001 = vadd.f32 0.0, %v2000
        %v2002 = vpop.f32.mrb[0].mxu0
        %v2003 = vadd.f32 0.0, %v2002
        %2004 = vmatprep.mubr.bf16.mxu0 0
        %2005 = vmatmul.mubr.bf16.gmra.mrb[0].mxu0 %v1139
        %v2006 = vpop.f32.mrb[0].mxu0
        %v2007 = vadd.f32 0.0, %v2006
        %v2008 = vpop.f32.mrb[0].mxu0
        %v2009 = vadd.f32 0.0, %v2008
        %v2010 = vpop.f32.mrb[0].mxu0
        %v2011 = vpop.f32.mrb[0].mxu0
        %v2012 = vadd.f32 0.0, %v2011
        %2013 = vmatprep.mubr.bf16.mxu0 0
        %2014 = vmatmul.mubr.bf16.gmra.mrb[0].mxu0 %v1140
        %v2015 = vpop.f32.mrb[0].mxu0
        %v2016 = vpop.f32.mrb[0].mxu0
        %v2017 = vadd.f32 0.0, %v2016
        %v2018 = vpop.f32.mrb[0].mxu0
        %v2019 = vpop.f32.mrb[0].mxu0
        %v2020 = vadd.f32 0.0, %v2019
        %2021 = vdwg.mxu0
        %2022 = vmatprep.subr.bf16.mxu0 0
        %2023 = vmatpush1.bf16.msra.mxu0 %v1341
        %2024 = vmatprep.subr.bf16.mxu0 0
        %2025 = vmatpush1.bf16.msra.mxu0 %v1348
        %2026 = vmatprep.subr.bf16.mxu0 0
        %2027 = vmatpush1.bf16.msra.mxu0 %v1355
        %2028 = vmatprep.subr.bf16.mxu0 0
        %2029 = vmatpush1.bf16.msra.mxu0 %v1362
        %2030 = vmatprep.subr.bf16.mxu0 0
        %2031 = vmatpush1.bf16.msra.mxu0 %v1369
        %2032 = vmatprep.subr.bf16.mxu0 0
        %2033 = vmatpush1.bf16.msra.mxu0 %v1376
        %2034 = vmatprep.subr.bf16.mxu0 0
        %2035 = vmatpush1.bf16.msra.mxu0 %v1383
        %2036 = vmatprep.subr.bf16.mxu0 0
        %2037 = vmatpush1.bf16.msra.mxu0 %v1390
        %2038 = vmatprep.subr.bf16.mxu0 0
        %2039 = vmatpush1.bf16.msra.mxu0 0
        %2040 = vmatprep.subr.bf16.mxu0 0
        %2041 = vmatpush1.bf16.msra.mxu0 0
        %2042 = vmatprep.subr.bf16.mxu0 0
        %2043 = vmatpush1.bf16.msra.mxu0 0
        %2044 = vmatprep.subr.bf16.mxu0 0
        %2045 = vmatpush1.bf16.msra.mxu0 0
        %2046 = vmatprep.subr.bf16.mxu0 0
        %2047 = vmatpush1.bf16.msra.mxu0 0
        %2048 = vmatprep.subr.bf16.mxu0 0
        %2049 = vmatpush1.bf16.msra.mxu0 0
        %2050 = vmatprep.subr.bf16.mxu0 0
        %2051 = vmatpush1.bf16.msra.mxu0 0
        %2052 = vmatprep.subr.bf16.mxu0 0
        %2053 = vmatpush1.bf16.msra.mxu0 0
        %2054 = vmatprep.mubr.bf16.mxu0 0
        %2055 = vmatmul.mubr.bf16.gmra.mrb[0].mxu0 %v1123
        %v2056 = vpop.f32.mrb[0].mxu0
        %v2057 = vpop.f32.mrb[0].mxu0
        %v2058 = vpop.f32.mrb[0].mxu0
        %v2059 = vpop.f32.mrb[0].mxu0
        %2060 = vmatprep.mubr.bf16.mxu0 0
        %2061 = vmatmul.mubr.bf16.gmra.mrb[0].mxu0 %v1124
        %v2062 = vpop.f32.mrb[0].mxu0
        %v2063 = vpop.f32.mrb[0].mxu0
        %v2064 = vpop.f32.mrb[0].mxu0
        %v2065 = vpop.f32.mrb[0].mxu0
        %2066 = vmatprep.mubr.bf16.mxu0 0
        %2067 = vmatmul.mubr.bf16.gmra.mrb[0].mxu0 %v1125
        %v2068 = vpop.f32.mrb[0].mxu0
        %v2069 = vpop.f32.mrb[0].mxu0
        %v2070 = vpop.f32.mrb[0].mxu0
        %v2071 = vpop.f32.mrb[0].mxu0
        %2072 = vmatprep.mubr.bf16.mxu0 0
        %2073 = vmatmul.mubr.bf16.gmra.mrb[0].mxu0 %v1126
        %v2074 = vpop.f32.mrb[0].mxu0
        %v2075 = vpop.f32.mrb[0].mxu0
        %v2076 = vpop.f32.mrb[0].mxu0
        %v2077 = vpop.f32.mrb[0].mxu0
        %2078 = vmatprep.mubr.bf16.mxu0 0
        %2079 = vmatmul.mubr.bf16.gmra.mrb[0].mxu0 %v1127
        %v2080 = vpop.f32.mrb[0].mxu0
        %v2081 = vpop.f32.mrb[0].mxu0
        %v2082 = vpop.f32.mrb[0].mxu0
        %v2083 = vpop.f32.mrb[0].mxu0
        %2084 = vmatprep.mubr.bf16.mxu0 0
        %2085 = vmatmul.mubr.bf16.gmra.mrb[0].mxu0 %v1128
        %v2086 = vpop.f32.mrb[0].mxu0
        %v2087 = vpop.f32.mrb[0].mxu0
        %v2088 = vpop.f32.mrb[0].mxu0
        %v2089 = vpop.f32.mrb[0].mxu0
        %2090 = vmatprep.mubr.bf16.mxu0 0
        %2091 = vmatmul.mubr.bf16.gmra.mrb[0].mxu0 %v1129
        %v2092 = vpop.f32.mrb[0].mxu0
        %v2093 = vadd.f32 0.0, %v2092
        %v2094 = vpop.f32.mrb[0].mxu0
        %v2095 = vpop.f32.mrb[0].mxu0
        %v2096 = vadd.f32 0.0, %v2095
        %v2097 = vpop.f32.mrb[0].mxu0
        %2098 = vmatprep.mubr.bf16.mxu0 0
        %2099 = vmatmul.mubr.bf16.gmra.mrb[0].mxu0 %v1130
        %v2100 = vpop.f32.mrb[0].mxu0
        %v2101 = vadd.f32 0.0, %v2100
        %v2102 = vpop.f32.mrb[0].mxu0
        %v2103 = vpop.f32.mrb[0].mxu0
        %v2104 = vadd.f32 0.0, %v2103
        %v2105 = vpop.f32.mrb[0].mxu0
        %2106 = vmatprep.mubr.bf16.mxu0 0
        %2107 = vmatmul.mubr.bf16.gmra.mrb[0].mxu0 %v1131
        %v2108 = vpop.f32.mrb[0].mxu0
        %v2109 = vadd.f32 0.0, %v2108
        %v2110 = vpop.f32.mrb[0].mxu0
        %v2111 = vpop.f32.mrb[0].mxu0
        %v2112 = vadd.f32 0.0, %v2111
        %v2113 = vpop.f32.mrb[0].mxu0
        %2114 = vmatprep.mubr.bf16.mxu0 0
        %2115 = vmatmul.mubr.bf16.gmra.mrb[0].mxu0 %v1132
        %v2116 = vpop.f32.mrb[0].mxu0
        %v2117 = vadd.f32 0.0, %v2116
        %v2118 = vpop.f32.mrb[0].mxu0
        %v2119 = vpop.f32.mrb[0].mxu0
        %v2120 = vadd.f32 0.0, %v2119
        %v2121 = vpop.f32.mrb[0].mxu0
        %2122 = vmatprep.mubr.bf16.mxu0 0
        %2123 = vmatmul.mubr.bf16.gmra.mrb[0].mxu0 %v1133
        %v2124 = vpop.f32.mrb[0].mxu0
        %v2125 = vadd.f32 0.0, %v2124
        %v2126 = vpop.f32.mrb[0].mxu0
        %v2127 = vpop.f32.mrb[0].mxu0
        %v2128 = vadd.f32 0.0, %v2127
        %v2129 = vpop.f32.mrb[0].mxu0
        %2130 = vmatprep.mubr.bf16.mxu0 0
        %2131 = vmatmul.mubr.bf16.gmra.mrb[0].mxu0 %v1134
        %v2132 = vpop.f32.mrb[0].mxu0
        %v2133 = vadd.f32 0.0, %v2132
        %v2134 = vpop.f32.mrb[0].mxu0
        %v2135 = vpop.f32.mrb[0].mxu0
        %v2136 = vadd.f32 0.0, %v2135
        %v2137 = vpop.f32.mrb[0].mxu0
        %2138 = vmatprep.mubr.bf16.mxu0 0
        %2139 = vmatmul.mubr.bf16.gmra.mrb[0].mxu0 %v1135
        %v2140 = vpop.f32.mrb[0].mxu0
        %v2141 = vadd.f32 0.0, %v2140
        %v2142 = vpop.f32.mrb[0].mxu0
        %v2143 = vpop.f32.mrb[0].mxu0
        %v2144 = vadd.f32 0.0, %v2143
        %v2145 = vpop.f32.mrb[0].mxu0
        %2146 = vmatprep.mubr.bf16.mxu0 0
        %2147 = vmatmul.mubr.bf16.gmra.mrb[0].mxu0 %v1136
        %v2148 = vpop.f32.mrb[0].mxu0
        %v2149 = vadd.f32 0.0, %v2148
        %v2150 = vpop.f32.mrb[0].mxu0
        %v2151 = vpop.f32.mrb[0].mxu0
        %v2152 = vadd.f32 0.0, %v2151
        %v2153 = vpop.f32.mrb[0].mxu0
        %2154 = vmatprep.mubr.bf16.mxu0 0
        %2155 = vmatmul.mubr.bf16.gmra.mrb[0].mxu0 %v1137
        %v2156 = vpop.f32.mrb[0].mxu0
        %v2157 = vadd.f32 0.0, %v2156
        %v2158 = vpop.f32.mrb[0].mxu0
        %v2159 = vpop.f32.mrb[0].mxu0
        %v2160 = vadd.f32 0.0, %v2159
        %v2161 = vpop.f32.mrb[0].mxu0
        %2162 = vmatprep.mubr.bf16.mxu0 0
        %2163 = vmatmul.mubr.bf16.gmra.mrb[0].mxu0 %v1138
        %v2164 = vpop.f32.mrb[0].mxu0
        %v2165 = vadd.f32 0.0, %v2164
        %v2166 = vpop.f32.mrb[0].mxu0
        %v2167 = vpop.f32.mrb[0].mxu0
        %v2168 = vadd.f32 0.0, %v2167
        %v2169 = vpop.f32.mrb[0].mxu0
        %2170 = vmatprep.mubr.bf16.mxu0 0
        %2171 = vmatmul.mubr.bf16.gmra.mrb[0].mxu0 %v1139
        %v2172 = vpop.f32.mrb[0].mxu0
        %v2173 = vadd.f32 0.0, %v2172
        %v2174 = vpop.f32.mrb[0].mxu0
        %v2175 = vpop.f32.mrb[0].mxu0
        %v2176 = vadd.f32 0.0, %v2175
        %v2177 = vpop.f32.mrb[0].mxu0
        %2178 = vmatprep.mubr.bf16.mxu0 0
        %2179 = vmatmul.mubr.bf16.gmra.mrb[0].mxu0 %v1140
        %v2180 = vpop.f32.mrb[0].mxu0
        %v2181 = vadd.f32 0.0, %v2180
        %v2182 = vpop.f32.mrb[0].mxu0
        %v2183 = vpop.f32.mrb[0].mxu0
        %v2184 = vadd.f32 0.0, %v2183
        %v2185 = vpop.f32.mrb[0].mxu0
        %2186 = vdwg.mxu0
        %v2187 = vld [vmem:[%s6] sm:$0x1]
        %v2189 = vlaneseq
        %v2190 = vshrl.u32 %v2189, 7
        %v2191 = vsub.s32 0, %v2190
        %v2192 = vrot.slane %v2187, %v2191
        %v2194 = vadd.f32 %v1697, %v2192
        %v2195 = vadd.f32 %v1701, %v2192
        %v2196 = vadd.f32 %v1707, %v2192
        %v2197 = vadd.f32 %v1711, %v2192
        %v2198 = vadd.f32 %v1717, %v2192
        %v2199 = vadd.f32 %v1721, %v2192
        %v2200 = vadd.f32 %v1727, %v2192
        %v2201 = vadd.f32 %v1731, %v2192
        %v2202 = vadd.f32 %v1737, %v2192
        %v2203 = vadd.f32 %v1741, %v2192
        %v2204 = vadd.f32 %v1747, %v2192
        %v2205 = vadd.f32 %v1751, %v2192
        %v2206 = vadd.f32 %v1757, %v2192
        %v2207 = vadd.f32 %v1761, %v2192
        %v2208 = vadd.f32 %v1767, %v2192
        %v2209 = vadd.f32 %v1771, %v2192
        %v2210 = vadd.f32 %v1777, %v2192
        %v2211 = vadd.f32 %v1781, %v2192
        %v2212 = vadd.f32 %v1787, %v2192
        %v2213 = vadd.f32 %v1791, %v2192
        %v2214 = vadd.f32 %v1797, %v2192
        %v2215 = vadd.f32 %v1801, %v2192
        %v2216 = vadd.f32 %v1807, %v2192
        %v2217 = vadd.f32 %v1811, %v2192
        %v2234 = vrot.slane %v1482, 6
        %v2235 = vrot.slane %v1486, 6
        %v2236 = vsel %vm581, %v2234, %v2235
        %v2237 = vrot.slane %v1496, 6
        %v2238 = vrot.slane %v1502, 6
        %v2239 = vsel %vm581, %v2237, %v2238
        %v2240 = vrot.slane %v1512, 6
        %v2241 = vrot.slane %v1516, 6
        %v2242 = vsel %vm581, %v2240, %v2241
        %v2243 = vrot.slane %v1526, 6
        %v2244 = vrot.slane %v1532, 6
        %v2245 = vsel %vm581, %v2243, %v2244
        %v2246 = vrot.slane %v1542, 6
        %v2247 = vrot.slane %v1546, 6
        %v2248 = vsel %vm581, %v2246, %v2247
        %v2249 = vrot.slane %v1556, 6
        %v2250 = vrot.slane %v1562, 6
        %v2251 = vsel %vm581, %v2249, %v2250
        %v2252 = vrot.slane %v1572, 6
        %v2253 = vrot.slane %v1576, 6
        %v2254 = vsel %vm581, %v2252, %v2253
        %v2255 = vrot.slane %v1586, 6
        %v2256 = vrot.slane %v1592, 6
        %v2257 = vsel %vm581, %v2255, %v2256
        %v2282 = vadd.f32 %v2194, %v2234
        %v2283 = vadd.f32 %v2195, %v2236
        %v2284 = vadd.f32 %v2196, %v2235
        %v2285 = vadd.f32 %v2197, %v2237
        %v2286 = vadd.f32 %v2198, %v2239
        %v2287 = vadd.f32 %v2199, %v2238
        %v2288 = vadd.f32 %v2200, %v2240
        %v2289 = vadd.f32 %v2201, %v2242
        %v2290 = vadd.f32 %v2202, %v2241
        %v2291 = vadd.f32 %v2203, %v2243
        %v2292 = vadd.f32 %v2204, %v2245
        %v2293 = vadd.f32 %v2205, %v2244
        %v2294 = vadd.f32 %v2206, %v2246
        %v2295 = vadd.f32 %v2207, %v2248
        %v2296 = vadd.f32 %v2208, %v2247
        %v2297 = vadd.f32 %v2209, %v2249
        %v2298 = vadd.f32 %v2210, %v2251
        %v2299 = vadd.f32 %v2211, %v2250
        %v2300 = vadd.f32 %v2212, %v2252
        %v2301 = vadd.f32 %v2213, %v2254
        %v2302 = vadd.f32 %v2214, %v2253
        %v2303 = vadd.f32 %v2215, %v2255
        %v2304 = vadd.f32 %v2216, %v2257
        %v2305 = vadd.f32 %v2217, %v2256
        %vm2314 = vcmask 1040384
        %v2315 = vrot.slane %v1482, 7
        %v2316 = vrot.slane %v1486, 7
        %v2317 = vsel %vm2314, %v2315, %v2316
        %v2318 = vrot.slane %v1492, 7
        %v2319 = vsel %vm2314, %v2316, %v2318
        %v2320 = vrot.slane %v1496, 7
        %v2321 = vrot.slane %v1502, 7
        %v2322 = vsel %vm2314, %v2320, %v2321
        %v2323 = vrot.slane %v1506, 7
        %v2324 = vsel %vm2314, %v2321, %v2323
        %v2325 = vrot.slane %v1512, 7
        %v2326 = vrot.slane %v1516, 7
        %v2327 = vsel %vm2314, %v2325, %v2326
        %v2328 = vrot.slane %v1522, 7
        %v2329 = vsel %vm2314, %v2326, %v2328
        %v2330 = vrot.slane %v1526, 7
        %v2331 = vrot.slane %v1532, 7
        %v2332 = vsel %vm2314, %v2330, %v2331
        %v2333 = vrot.slane %v1536, 7
        %v2334 = vsel %vm2314, %v2331, %v2333
        %v2335 = vrot.slane %v1542, 7
        %v2336 = vrot.slane %v1546, 7
        %v2337 = vsel %vm2314, %v2335, %v2336
        %v2338 = vrot.slane %v1552, 7
        %v2339 = vsel %vm2314, %v2336, %v2338
        %v2340 = vrot.slane %v1556, 7
        %v2341 = vrot.slane %v1562, 7
        %v2342 = vsel %vm2314, %v2340, %v2341
        %v2343 = vrot.slane %v1566, 7
        %v2344 = vsel %vm2314, %v2341, %v2343
        %v2345 = vrot.slane %v1572, 7
        %v2346 = vrot.slane %v1576, 7
        %v2347 = vsel %vm2314, %v2345, %v2346
        %v2348 = vrot.slane %v1582, 7
        %v2349 = vsel %vm2314, %v2346, %v2348
        %v2350 = vrot.slane %v1586, 7
        %v2351 = vrot.slane %v1592, 7
        %v2352 = vsel %vm2314, %v2350, %v2351
        %v2353 = vrot.slane %v1596, 7
        %v2354 = vsel %vm2314, %v2351, %v2353
        %2355 = vrot.lane.b32.xlu0 %v2315, 96
        %v2356 = vpop.permute.xlu0 %2355
        %2357 = vrot.lane.b32.xlu0 %v2317, 96
        %v2358 = vpop.permute.xlu0 %2357
        %2359 = vrot.lane.b32.xlu0 %v2319, 96
        %v2360 = vpop.permute.xlu0 %2359
        %2361 = vrot.lane.b32.xlu0 %v2320, 96
        %v2362 = vpop.permute.xlu0 %2361
        %2363 = vrot.lane.b32.xlu0 %v2322, 96
        %v2364 = vpop.permute.xlu0 %2363
        %2365 = vrot.lane.b32.xlu0 %v2324, 96
        %v2366 = vpop.permute.xlu0 %2365
        %2367 = vrot.lane.b32.xlu0 %v2325, 96
        %v2368 = vpop.permute.xlu0 %2367
        %2369 = vrot.lane.b32.xlu0 %v2327, 96
        %v2370 = vpop.permute.xlu0 %2369
        %2371 = vrot.lane.b32.xlu0 %v2329, 96
        %v2372 = vpop.permute.xlu0 %2371
        %2373 = vrot.lane.b32.xlu0 %v2330, 96
        %v2374 = vpop.permute.xlu0 %2373
        %2375 = vrot.lane.b32.xlu0 %v2332, 96
        %v2376 = vpop.permute.xlu0 %2375
        %2377 = vrot.lane.b32.xlu0 %v2334, 96
        %v2378 = vpop.permute.xlu0 %2377
        %2379 = vrot.lane.b32.xlu0 %v2335, 96
        %v2380 = vpop.permute.xlu0 %2379
        %2381 = vrot.lane.b32.xlu0 %v2337, 96
        %v2382 = vpop.permute.xlu0 %2381
        %2383 = vrot.lane.b32.xlu0 %v2339, 96
        %v2384 = vpop.permute.xlu0 %2383
        %2385 = vrot.lane.b32.xlu0 %v2340, 96
        %v2386 = vpop.permute.xlu0 %2385
        %2387 = vrot.lane.b32.xlu0 %v2342, 96
        %v2388 = vpop.permute.xlu0 %2387
        %2389 = vrot.lane.b32.xlu0 %v2344, 96
        %v2390 = vpop.permute.xlu0 %2389
        %2391 = vrot.lane.b32.xlu0 %v2345, 96
        %v2392 = vpop.permute.xlu0 %2391
        %2393 = vrot.lane.b32.xlu0 %v2347, 96
        %v2394 = vpop.permute.xlu0 %2393
        %2395 = vrot.lane.b32.xlu0 %v2349, 96
        %v2396 = vpop.permute.xlu0 %2395
        %2397 = vrot.lane.b32.xlu0 %v2350, 96
        %v2398 = vpop.permute.xlu0 %2397
        %2399 = vrot.lane.b32.xlu0 %v2352, 96
        %v2400 = vpop.permute.xlu0 %2399
        %2401 = vrot.lane.b32.xlu0 %v2354, 96
        %v2402 = vpop.permute.xlu0 %2401
        %v2427 = vadd.f32 %v2282, %v2356
        %v2428 = vadd.f32 %v2283, %v2358
        %v2429 = vadd.f32 %v2284, %v2360
        %v2430 = vadd.f32 %v2285, %v2362
        %v2431 = vadd.f32 %v2286, %v2364
        %v2432 = vadd.f32 %v2287, %v2366
        %v2433 = vadd.f32 %v2288, %v2368
        %v2434 = vadd.f32 %v2289, %v2370
        %v2435 = vadd.f32 %v2290, %v2372
        %v2436 = vadd.f32 %v2291, %v2374
        %v2437 = vadd.f32 %v2292, %v2376
        %v2438 = vadd.f32 %v2293, %v2378
        %v2439 = vadd.f32 %v2294, %v2380
        %v2440 = vadd.f32 %v2295, %v2382
        %v2441 = vadd.f32 %v2296, %v2384
        %v2442 = vadd.f32 %v2297, %v2386
        %v2443 = vadd.f32 %v2298, %v2388
        %v2444 = vadd.f32 %v2299, %v2390
        %v2445 = vadd.f32 %v2300, %v2392
        %v2446 = vadd.f32 %v2301, %v2394
        %v2447 = vadd.f32 %v2302, %v2396
        %v2448 = vadd.f32 %v2303, %v2398
        %v2449 = vadd.f32 %v2304, %v2400
        %v2450 = vadd.f32 %v2305, %v2402
        %2451 = vrot.lane.b32.xlu0 %v1482, 64
        %v2452 = vpop.permute.xlu0 %2451
        %2453 = vrot.lane.b32.xlu0 %v1486, 64
        %v2454 = vpop.permute.xlu0 %2453
        %2455 = vrot.lane.b32.xlu0 %v1492, 64
        %v2456 = vpop.permute.xlu0 %2455
        %2457 = vrot.lane.b32.xlu0 %v1496, 64
        %v2458 = vpop.permute.xlu0 %2457
        %2459 = vrot.lane.b32.xlu0 %v1502, 64
        %v2460 = vpop.permute.xlu0 %2459
        %2461 = vrot.lane.b32.xlu0 %v1506, 64
        %v2462 = vpop.permute.xlu0 %2461
        %2463 = vrot.lane.b32.xlu0 %v1512, 64
        %v2464 = vpop.permute.xlu0 %2463
        %2465 = vrot.lane.b32.xlu0 %v1516, 64
        %v2466 = vpop.permute.xlu0 %2465
        %2467 = vrot.lane.b32.xlu0 %v1522, 64
        %v2468 = vpop.permute.xlu0 %2467
        %2469 = vrot.lane.b32.xlu0 %v1526, 64
        %v2470 = vpop.permute.xlu0 %2469
        %2471 = vrot.lane.b32.xlu0 %v1532, 64
        %v2472 = vpop.permute.xlu0 %2471
        %2473 = vrot.lane.b32.xlu0 %v1536, 64
        %v2474 = vpop.permute.xlu0 %2473
        %2475 = vrot.lane.b32.xlu0 %v1542, 64
        %v2476 = vpop.permute.xlu0 %2475
        %2477 = vrot.lane.b32.xlu0 %v1546, 64
        %v2478 = vpop.permute.xlu0 %2477
        %2479 = vrot.lane.b32.xlu0 %v1552, 64
        %v2480 = vpop.permute.xlu0 %2479
        %2481 = vrot.lane.b32.xlu0 %v1556, 64
        %v2482 = vpop.permute.xlu0 %2481
        %2483 = vrot.lane.b32.xlu0 %v1562, 64
        %v2484 = vpop.permute.xlu0 %2483
        %2485 = vrot.lane.b32.xlu0 %v1566, 64
        %v2486 = vpop.permute.xlu0 %2485
        %2487 = vrot.lane.b32.xlu0 %v1572, 64
        %v2488 = vpop.permute.xlu0 %2487
        %2489 = vrot.lane.b32.xlu0 %v1576, 64
        %v2490 = vpop.permute.xlu0 %2489
        %2491 = vrot.lane.b32.xlu0 %v1582, 64
        %v2492 = vpop.permute.xlu0 %2491
        %2493 = vrot.lane.b32.xlu0 %v1586, 64
        %v2494 = vpop.permute.xlu0 %2493
        %2495 = vrot.lane.b32.xlu0 %v1592, 64
        %v2496 = vpop.permute.xlu0 %2495
        %2497 = vrot.lane.b32.xlu0 %v1596, 64
        %v2498 = vpop.permute.xlu0 %2497
        %v2523 = vadd.f32 %v2427, %v2452
        %v2524 = vadd.f32 %v2428, %v2454
        %v2525 = vadd.f32 %v2429, %v2456
        %v2526 = vadd.f32 %v2430, %v2458
        %v2527 = vadd.f32 %v2431, %v2460
        %v2528 = vadd.f32 %v2432, %v2462
        %v2529 = vadd.f32 %v2433, %v2464
        %v2530 = vadd.f32 %v2434, %v2466
        %v2531 = vadd.f32 %v2435, %v2468
        %v2532 = vadd.f32 %v2436, %v2470
        %v2533 = vadd.f32 %v2437, %v2472
        %v2534 = vadd.f32 %v2438, %v2474
        %v2535 = vadd.f32 %v2439, %v2476
        %v2536 = vadd.f32 %v2440, %v2478
        %v2537 = vadd.f32 %v2441, %v2480
        %v2538 = vadd.f32 %v2442, %v2482
        %v2539 = vadd.f32 %v2443, %v2484
        %v2540 = vadd.f32 %v2444, %v2486
        %v2541 = vadd.f32 %v2445, %v2488
        %v2542 = vadd.f32 %v2446, %v2490
        %v2543 = vadd.f32 %v2447, %v2492
        %v2544 = vadd.f32 %v2448, %v2494
        %v2545 = vadd.f32 %v2449, %v2496
        %v2546 = vadd.f32 %v2450, %v2498
        %vm2547 = vcmask 1046528
        %v2548 = vrot.slane %v1482, 1
        %v2549 = vrot.slane %v1486, 1
        %v2550 = vsel %vm2547, %v2548, %v2549
        %v2551 = vrot.slane %v1492, 1
        %v2552 = vsel %vm2547, %v2549, %v2551
        %v2553 = vrot.slane %v1496, 1
        %v2554 = vrot.slane %v1502, 1
        %v2555 = vsel %vm2547, %v2553, %v2554
        %v2556 = vrot.slane %v1506, 1
        %v2557 = vsel %vm2547, %v2554, %v2556
        %v2558 = vrot.slane %v1512, 1
        %v2559 = vrot.slane %v1516, 1
        %v2560 = vsel %vm2547, %v2558, %v2559
        %v2561 = vrot.slane %v1522, 1
        %v2562 = vsel %vm2547, %v2559, %v2561
        %v2563 = vrot.slane %v1526, 1
        %v2564 = vrot.slane %v1532, 1
        %v2565 = vsel %vm2547, %v2563, %v2564
        %v2566 = vrot.slane %v1536, 1
        %v2567 = vsel %vm2547, %v2564, %v2566
        %v2568 = vrot.slane %v1542, 1
        %v2569 = vrot.slane %v1546, 1
        %v2570 = vsel %vm2547, %v2568, %v2569
        %v2571 = vrot.slane %v1552, 1
        %v2572 = vsel %vm2547, %v2569, %v2571
        %v2573 = vrot.slane %v1556, 1
        %v2574 = vrot.slane %v1562, 1
        %v2575 = vsel %vm2547, %v2573, %v2574
        %v2576 = vrot.slane %v1566, 1
        %v2577 = vsel %vm2547, %v2574, %v2576
        %v2578 = vrot.slane %v1572, 1
        %v2579 = vrot.slane %v1576, 1
        %v2580 = vsel %vm2547, %v2578, %v2579
        %v2581 = vrot.slane %v1582, 1
        %v2582 = vsel %vm2547, %v2579, %v2581
        %v2583 = vrot.slane %v1586, 1
        %v2584 = vrot.slane %v1592, 1
        %v2585 = vsel %vm2547, %v2583, %v2584
        %v2586 = vrot.slane %v1596, 1
        %v2587 = vsel %vm2547, %v2584, %v2586
        %2588 = vrot.lane.b32.xlu0 %v2550, 32
        %v2589 = vpop.permute.xlu0 %2588
        %2590 = vrot.lane.b32.xlu0 %v2552, 32
        %v2591 = vpop.permute.xlu0 %2590
        %2592 = vrot.lane.b32.xlu0 %v2551, 32
        %v2593 = vpop.permute.xlu0 %2592
        %2594 = vrot.lane.b32.xlu0 %v2555, 32
        %v2595 = vpop.permute.xlu0 %2594
        %2596 = vrot.lane.b32.xlu0 %v2557, 32
        %v2597 = vpop.permute.xlu0 %2596
        %2598 = vrot.lane.b32.xlu0 %v2556, 32
        %v2599 = vpop.permute.xlu0 %2598
        %2600 = vrot.lane.b32.xlu0 %v2560, 32
        %v2601 = vpop.permute.xlu0 %2600
        %2602 = vrot.lane.b32.xlu0 %v2562, 32
        %v2603 = vpop.permute.xlu0 %2602
        %2604 = vrot.lane.b32.xlu0 %v2561, 32
        %v2605 = vpop.permute.xlu0 %2604
        %2606 = vrot.lane.b32.xlu0 %v2565, 32
        %v2607 = vpop.permute.xlu0 %2606
        %2608 = vrot.lane.b32.xlu0 %v2567, 32
        %v2609 = vpop.permute.xlu0 %2608
        %2610 = vrot.lane.b32.xlu0 %v2566, 32
        %v2611 = vpop.permute.xlu0 %2610
        %2612 = vrot.lane.b32.xlu0 %v2570, 32
        %v2613 = vpop.permute.xlu0 %2612
        %2614 = vrot.lane.b32.xlu0 %v2572, 32
        %v2615 = vpop.permute.xlu0 %2614
        %2616 = vrot.lane.b32.xlu0 %v2571, 32
        %v2617 = vpop.permute.xlu0 %2616
        %2618 = vrot.lane.b32.xlu0 %v2575, 32
        %v2619 = vpop.permute.xlu0 %2618
        %2620 = vrot.lane.b32.xlu0 %v2577, 32
        %v2621 = vpop.permute.xlu0 %2620
        %2622 = vrot.lane.b32.xlu0 %v2576, 32
        %v2623 = vpop.permute.xlu0 %2622
        %2624 = vrot.lane.b32.xlu0 %v2580, 32
        %v2625 = vpop.permute.xlu0 %2624
        %2626 = vrot.lane.b32.xlu0 %v2582, 32
        %v2627 = vpop.permute.xlu0 %2626
        %2628 = vrot.lane.b32.xlu0 %v2581, 32
        %v2629 = vpop.permute.xlu0 %2628
        %2630 = vrot.lane.b32.xlu0 %v2585, 32
        %v2631 = vpop.permute.xlu0 %2630
        %2632 = vrot.lane.b32.xlu0 %v2587, 32
        %v2633 = vpop.permute.xlu0 %2632
        %2634 = vrot.lane.b32.xlu0 %v2586, 32
        %v2635 = vpop.permute.xlu0 %2634
        %v2660 = vadd.f32 %v2523, %v2589
        %v2661 = vadd.f32 %v2524, %v2591
        %v2662 = vadd.f32 %v2525, %v2593
        %v2663 = vadd.f32 %v2526, %v2595
        %v2664 = vadd.f32 %v2527, %v2597
        %v2665 = vadd.f32 %v2528, %v2599
        %v2666 = vadd.f32 %v2529, %v2601
        %v2667 = vadd.f32 %v2530, %v2603
        %v2668 = vadd.f32 %v2531, %v2605
        %v2669 = vadd.f32 %v2532, %v2607
        %v2670 = vadd.f32 %v2533, %v2609
        %v2671 = vadd.f32 %v2534, %v2611
        %v2672 = vadd.f32 %v2535, %v2613
        %v2673 = vadd.f32 %v2536, %v2615
        %v2674 = vadd.f32 %v2537, %v2617
        %v2675 = vadd.f32 %v2538, %v2619
        %v2676 = vadd.f32 %v2539, %v2621
        %v2677 = vadd.f32 %v2540, %v2623
        %v2678 = vadd.f32 %v2541, %v2625
        %v2679 = vadd.f32 %v2542, %v2627
        %v2680 = vadd.f32 %v2543, %v2629
        %v2681 = vadd.f32 %v2544, %v2631
        %v2682 = vadd.f32 %v2545, %v2633
        %v2683 = vadd.f32 %v2546, %v2635
        %vm2708 = vcmask 1045504
        %v2709 = vrot.slane %v1484, 2
        %v2710 = vrot.slane %v1488, 2
        %v2711 = vsel %vm2708, %v2709, %v2710
        %v2712 = vrot.slane %v1494, 2
        %v2713 = vsel %vm2708, %v2710, %v2712
        %v2714 = vrot.slane %v1498, 2
        %v2715 = vrot.slane %v1504, 2
        %v2716 = vsel %vm2708, %v2714, %v2715
        %v2717 = vrot.slane %v1508, 2
        %v2718 = vsel %vm2708, %v2715, %v2717
        %v2719 = vrot.slane %v1514, 2
        %v2720 = vrot.slane %v1518, 2
        %v2721 = vsel %vm2708, %v2719, %v2720
        %v2722 = vrot.slane %v1524, 2
        %v2723 = vsel %vm2708, %v2720, %v2722
        %v2724 = vrot.slane %v1528, 2
        %v2725 = vrot.slane %v1534, 2
        %v2726 = vsel %vm2708, %v2724, %v2725
        %v2727 = vrot.slane %v1538, 2
        %v2728 = vsel %vm2708, %v2725, %v2727
        %v2729 = vrot.slane %v1544, 2
        %v2730 = vrot.slane %v1548, 2
        %v2731 = vsel %vm2708, %v2729, %v2730
        %v2732 = vrot.slane %v1554, 2
        %v2733 = vsel %vm2708, %v2730, %v2732
        %v2734 = vrot.slane %v1558, 2
        %v2735 = vrot.slane %v1564, 2
        %v2736 = vsel %vm2708, %v2734, %v2735
        %v2737 = vrot.slane %v1568, 2
        %v2738 = vsel %vm2708, %v2735, %v2737
        %v2739 = vrot.slane %v1574, 2
        %v2740 = vrot.slane %v1578, 2
        %v2741 = vsel %vm2708, %v2739, %v2740
        %v2742 = vrot.slane %v1584, 2
        %v2743 = vsel %vm2708, %v2740, %v2742
        %v2744 = vrot.slane %v1588, 2
        %v2745 = vrot.slane %v1594, 2
        %v2746 = vsel %vm2708, %v2744, %v2745
        %v2747 = vrot.slane %v1598, 2
        %v2748 = vsel %vm2708, %v2745, %v2747
        %v2773 = vadd.f32 %v2660, %v2711
        %v2774 = vadd.f32 %v2661, %v2713
        %v2775 = vadd.f32 %v2662, %v2712
        %v2776 = vadd.f32 %v2663, %v2716
        %v2777 = vadd.f32 %v2664, %v2718
        %v2778 = vadd.f32 %v2665, %v2717
        %v2779 = vadd.f32 %v2666, %v2721
        %v2780 = vadd.f32 %v2667, %v2723
        %v2781 = vadd.f32 %v2668, %v2722
        %v2782 = vadd.f32 %v2669, %v2726
        %v2783 = vadd.f32 %v2670, %v2728
        %v2784 = vadd.f32 %v2671, %v2727
        %v2785 = vadd.f32 %v2672, %v2731
        %v2786 = vadd.f32 %v2673, %v2733
        %v2787 = vadd.f32 %v2674, %v2732
        %v2788 = vadd.f32 %v2675, %v2736
        %v2789 = vadd.f32 %v2676, %v2738
        %v2790 = vadd.f32 %v2677, %v2737
        %v2791 = vadd.f32 %v2678, %v2741
        %v2792 = vadd.f32 %v2679, %v2743
        %v2793 = vadd.f32 %v2680, %v2742
        %v2794 = vadd.f32 %v2681, %v2746
        %v2795 = vadd.f32 %v2682, %v2748
        %v2796 = vadd.f32 %v2683, %v2747
        %v2799 = vrot.slane %v1498, 6
        %v2800 = vrot.slane %v1504, 6
        %v2801 = vsel %vm581, %v2799, %v2800
        %v2802 = vrot.slane %v1514, 6
        %v2803 = vrot.slane %v1518, 6
        %v2804 = vsel %vm581, %v2802, %v2803
        %v2805 = vrot.slane %v1528, 6
        %v2806 = vrot.slane %v1534, 6
        %v2807 = vsel %vm581, %v2805, %v2806
        %v2808 = vrot.slane %v1544, 6
        %v2809 = vrot.slane %v1548, 6
        %v2810 = vsel %vm581, %v2808, %v2809
        %v2811 = vrot.slane %v1558, 6
        %v2812 = vrot.slane %v1564, 6
        %v2813 = vsel %vm581, %v2811, %v2812
        %v2814 = vrot.slane %v1574, 6
        %v2815 = vrot.slane %v1578, 6
        %v2816 = vsel %vm581, %v2814, %v2815
        %v2817 = vrot.slane %v1588, 6
        %v2818 = vrot.slane %v1594, 6
        %v2819 = vsel %vm581, %v2817, %v2818
        %v2820 = vrot.slane %v1603, 6
        %v2821 = vrot.slane %v1606, 6
        %v2822 = vsel %vm581, %v2820, %v2821
        %2823 = vrot.lane.b32.xlu0 %v2799, 96
        %v2824 = vpop.permute.xlu0 %2823
        %2825 = vrot.lane.b32.xlu0 %v2801, 96
        %v2826 = vpop.permute.xlu0 %2825
        %2827 = vrot.lane.b32.xlu0 %v2800, 96
        %v2828 = vpop.permute.xlu0 %2827
        %2829 = vrot.lane.b32.xlu0 %v2802, 96
        %v2830 = vpop.permute.xlu0 %2829
        %2831 = vrot.lane.b32.xlu0 %v2804, 96
        %v2832 = vpop.permute.xlu0 %2831
        %2833 = vrot.lane.b32.xlu0 %v2803, 96
        %v2834 = vpop.permute.xlu0 %2833
        %2835 = vrot.lane.b32.xlu0 %v2805, 96
        %v2836 = vpop.permute.xlu0 %2835
        %2837 = vrot.lane.b32.xlu0 %v2807, 96
        %v2838 = vpop.permute.xlu0 %2837
        %2839 = vrot.lane.b32.xlu0 %v2806, 96
        %v2840 = vpop.permute.xlu0 %2839
        %2841 = vrot.lane.b32.xlu0 %v2808, 96
        %v2842 = vpop.permute.xlu0 %2841
        %2843 = vrot.lane.b32.xlu0 %v2810, 96
        %v2844 = vpop.permute.xlu0 %2843
        %2845 = vrot.lane.b32.xlu0 %v2809, 96
        %v2846 = vpop.permute.xlu0 %2845
        %2847 = vrot.lane.b32.xlu0 %v2811, 96
        %v2848 = vpop.permute.xlu0 %2847
        %2849 = vrot.lane.b32.xlu0 %v2813, 96
        %v2850 = vpop.permute.xlu0 %2849
        %2851 = vrot.lane.b32.xlu0 %v2812, 96
        %v2852 = vpop.permute.xlu0 %2851
        %2853 = vrot.lane.b32.xlu0 %v2814, 96
        %v2854 = vpop.permute.xlu0 %2853
        %2855 = vrot.lane.b32.xlu0 %v2816, 96
        %v2856 = vpop.permute.xlu0 %2855
        %2857 = vrot.lane.b32.xlu0 %v2815, 96
        %v2858 = vpop.permute.xlu0 %2857
        %2859 = vrot.lane.b32.xlu0 %v2817, 96
        %v2860 = vpop.permute.xlu0 %2859
        %2861 = vrot.lane.b32.xlu0 %v2819, 96
        %v2862 = vpop.permute.xlu0 %2861
        %2863 = vrot.lane.b32.xlu0 %v2818, 96
        %v2864 = vpop.permute.xlu0 %2863
        %2865 = vrot.lane.b32.xlu0 %v2820, 96
        %v2866 = vpop.permute.xlu0 %2865
        %2867 = vrot.lane.b32.xlu0 %v2822, 96
        %v2868 = vpop.permute.xlu0 %2867
        %2869 = vrot.lane.b32.xlu0 %v2821, 96
        %v2870 = vpop.permute.xlu0 %2869
        %v2895 = vadd.f32 %v2773, %v2824
        %v2896 = vadd.f32 %v2774, %v2826
        %v2897 = vadd.f32 %v2775, %v2828
        %v2898 = vadd.f32 %v2776, %v2830
        %v2899 = vadd.f32 %v2777, %v2832
        %v2900 = vadd.f32 %v2778, %v2834
        %v2901 = vadd.f32 %v2779, %v2836
        %v2902 = vadd.f32 %v2780, %v2838
        %v2903 = vadd.f32 %v2781, %v2840
        %v2904 = vadd.f32 %v2782, %v2842
        %v2905 = vadd.f32 %v2783, %v2844
        %v2906 = vadd.f32 %v2784, %v2846
        %v2907 = vadd.f32 %v2785, %v2848
        %v2908 = vadd.f32 %v2786, %v2850
        %v2909 = vadd.f32 %v2787, %v2852
        %v2910 = vadd.f32 %v2788, %v2854
        %v2911 = vadd.f32 %v2789, %v2856
        %v2912 = vadd.f32 %v2790, %v2858
        %v2913 = vadd.f32 %v2791, %v2860
        %v2914 = vadd.f32 %v2792, %v2862
        %v2915 = vadd.f32 %v2793, %v2864
        %v2916 = vadd.f32 %v2794, %v2866
        %v2917 = vadd.f32 %v2795, %v2868
        %v2918 = vadd.f32 %v2796, %v2870
        %v2920 = vrot.slane %v1498, 7
        %v2921 = vrot.slane %v1504, 7
        %v2922 = vsel %vm2314, %v2920, %v2921
        %v2923 = vrot.slane %v1508, 7
        %v2924 = vsel %vm2314, %v2921, %v2923
        %v2925 = vrot.slane %v1514, 7
        %v2926 = vrot.slane %v1518, 7
        %v2927 = vsel %vm2314, %v2925, %v2926
        %v2928 = vrot.slane %v1524, 7
        %v2929 = vsel %vm2314, %v2926, %v2928
        %v2930 = vrot.slane %v1528, 7
        %v2931 = vrot.slane %v1534, 7
        %v2932 = vsel %vm2314, %v2930, %v2931
        %v2933 = vrot.slane %v1538, 7
        %v2934 = vsel %vm2314, %v2931, %v2933
        %v2935 = vrot.slane %v1544, 7
        %v2936 = vrot.slane %v1548, 7
        %v2937 = vsel %vm2314, %v2935, %v2936
        %v2938 = vrot.slane %v1554, 7
        %v2939 = vsel %vm2314, %v2936, %v2938
        %v2940 = vrot.slane %v1558, 7
        %v2941 = vrot.slane %v1564, 7
        %v2942 = vsel %vm2314, %v2940, %v2941
        %v2943 = vrot.slane %v1568, 7
        %v2944 = vsel %vm2314, %v2941, %v2943
        %v2945 = vrot.slane %v1574, 7
        %v2946 = vrot.slane %v1578, 7
        %v2947 = vsel %vm2314, %v2945, %v2946
        %v2948 = vrot.slane %v1584, 7
        %v2949 = vsel %vm2314, %v2946, %v2948
        %v2950 = vrot.slane %v1588, 7
        %v2951 = vrot.slane %v1594, 7
        %v2952 = vsel %vm2314, %v2950, %v2951
        %v2953 = vrot.slane %v1598, 7
        %v2954 = vsel %vm2314, %v2951, %v2953
        %v2955 = vrot.slane %v1603, 7
        %v2956 = vrot.slane %v1606, 7
        %v2957 = vsel %vm2314, %v2955, %v2956
        %v2958 = vrot.slane %v1611, 7
        %v2959 = vsel %vm2314, %v2956, %v2958
        %2960 = vrot.lane.b32.xlu0 %v2920, 64
        %v2961 = vpop.permute.xlu0 %2960
        %2962 = vrot.lane.b32.xlu0 %v2922, 64
        %v2963 = vpop.permute.xlu0 %2962
        %2964 = vrot.lane.b32.xlu0 %v2924, 64
        %v2965 = vpop.permute.xlu0 %2964
        %2966 = vrot.lane.b32.xlu0 %v2925, 64
        %v2967 = vpop.permute.xlu0 %2966
        %2968 = vrot.lane.b32.xlu0 %v2927, 64
        %v2969 = vpop.permute.xlu0 %2968
        %2970 = vrot.lane.b32.xlu0 %v2929, 64
        %v2971 = vpop.permute.xlu0 %2970
        %2972 = vrot.lane.b32.xlu0 %v2930, 64
        %v2973 = vpop.permute.xlu0 %2972
        %2974 = vrot.lane.b32.xlu0 %v2932, 64
        %v2975 = vpop.permute.xlu0 %2974
        %2976 = vrot.lane.b32.xlu0 %v2934, 64
        %v2977 = vpop.permute.xlu0 %2976
        %2978 = vrot.lane.b32.xlu0 %v2935, 64
        %v2979 = vpop.permute.xlu0 %2978
        %2980 = vrot.lane.b32.xlu0 %v2937, 64
        %v2981 = vpop.permute.xlu0 %2980
        %2982 = vrot.lane.b32.xlu0 %v2939, 64
        %v2983 = vpop.permute.xlu0 %2982
        %2984 = vrot.lane.b32.xlu0 %v2940, 64
        %v2985 = vpop.permute.xlu0 %2984
        %2986 = vrot.lane.b32.xlu0 %v2942, 64
        %v2987 = vpop.permute.xlu0 %2986
        %2988 = vrot.lane.b32.xlu0 %v2944, 64
        %v2989 = vpop.permute.xlu0 %2988
        %2990 = vrot.lane.b32.xlu0 %v2945, 64
        %v2991 = vpop.permute.xlu0 %2990
        %2992 = vrot.lane.b32.xlu0 %v2947, 64
        %v2993 = vpop.permute.xlu0 %2992
        %2994 = vrot.lane.b32.xlu0 %v2949, 64
        %v2995 = vpop.permute.xlu0 %2994
        %2996 = vrot.lane.b32.xlu0 %v2950, 64
        %v2997 = vpop.permute.xlu0 %2996
        %2998 = vrot.lane.b32.xlu0 %v2952, 64
        %v2999 = vpop.permute.xlu0 %2998
        %3000 = vrot.lane.b32.xlu0 %v2954, 64
        %v3001 = vpop.permute.xlu0 %3000
        %3002 = vrot.lane.b32.xlu0 %v2955, 64
        %v3003 = vpop.permute.xlu0 %3002
        %3004 = vrot.lane.b32.xlu0 %v2957, 64
        %v3005 = vpop.permute.xlu0 %3004
        %3006 = vrot.lane.b32.xlu0 %v2959, 64
        %v3007 = vpop.permute.xlu0 %3006
        %v3032 = vadd.f32 %v2895, %v2961
        %v3033 = vadd.f32 %v2896, %v2963
        %v3034 = vadd.f32 %v2897, %v2965
        %v3035 = vadd.f32 %v2898, %v2967
        %v3036 = vadd.f32 %v2899, %v2969
        %v3037 = vadd.f32 %v2900, %v2971
        %v3038 = vadd.f32 %v2901, %v2973
        %v3039 = vadd.f32 %v2902, %v2975
        %v3040 = vadd.f32 %v2903, %v2977
        %v3041 = vadd.f32 %v2904, %v2979
        %v3042 = vadd.f32 %v2905, %v2981
        %v3043 = vadd.f32 %v2906, %v2983
        %v3044 = vadd.f32 %v2907, %v2985
        %v3045 = vadd.f32 %v2908, %v2987
        %v3046 = vadd.f32 %v2909, %v2989
        %v3047 = vadd.f32 %v2910, %v2991
        %v3048 = vadd.f32 %v2911, %v2993
        %v3049 = vadd.f32 %v2912, %v2995
        %v3050 = vadd.f32 %v2913, %v2997
        %v3051 = vadd.f32 %v2914, %v2999
        %v3052 = vadd.f32 %v2915, %v3001
        %v3053 = vadd.f32 %v2916, %v3003
        %v3054 = vadd.f32 %v2917, %v3005
        %v3055 = vadd.f32 %v2918, %v3007
        %3056 = vrot.lane.b32.xlu0 %v1498, 32
        %v3057 = vpop.permute.xlu0 %3056
        %3058 = vrot.lane.b32.xlu0 %v1504, 32
        %v3059 = vpop.permute.xlu0 %3058
        %3060 = vrot.lane.b32.xlu0 %v1508, 32
        %v3061 = vpop.permute.xlu0 %3060
        %3062 = vrot.lane.b32.xlu0 %v1514, 32
        %v3063 = vpop.permute.xlu0 %3062
        %3064 = vrot.lane.b32.xlu0 %v1518, 32
        %v3065 = vpop.permute.xlu0 %3064
        %3066 = vrot.lane.b32.xlu0 %v1524, 32
        %v3067 = vpop.permute.xlu0 %3066
        %3068 = vrot.lane.b32.xlu0 %v1528, 32
        %v3069 = vpop.permute.xlu0 %3068
        %3070 = vrot.lane.b32.xlu0 %v1534, 32
        %v3071 = vpop.permute.xlu0 %3070
        %3072 = vrot.lane.b32.xlu0 %v1538, 32
        %v3073 = vpop.permute.xlu0 %3072
        %3074 = vrot.lane.b32.xlu0 %v1544, 32
        %v3075 = vpop.permute.xlu0 %3074
        %3076 = vrot.lane.b32.xlu0 %v1548, 32
        %v3077 = vpop.permute.xlu0 %3076
        %3078 = vrot.lane.b32.xlu0 %v1554, 32
        %v3079 = vpop.permute.xlu0 %3078
        %3080 = vrot.lane.b32.xlu0 %v1558, 32
        %v3081 = vpop.permute.xlu0 %3080
        %3082 = vrot.lane.b32.xlu0 %v1564, 32
        %v3083 = vpop.permute.xlu0 %3082
        %3084 = vrot.lane.b32.xlu0 %v1568, 32
        %v3085 = vpop.permute.xlu0 %3084
        %3086 = vrot.lane.b32.xlu0 %v1574, 32
        %v3087 = vpop.permute.xlu0 %3086
        %3088 = vrot.lane.b32.xlu0 %v1578, 32
        %v3089 = vpop.permute.xlu0 %3088
        %3090 = vrot.lane.b32.xlu0 %v1584, 32
        %v3091 = vpop.permute.xlu0 %3090
        %3092 = vrot.lane.b32.xlu0 %v1588, 32
        %v3093 = vpop.permute.xlu0 %3092
        %3094 = vrot.lane.b32.xlu0 %v1594, 32
        %v3095 = vpop.permute.xlu0 %3094
        %3096 = vrot.lane.b32.xlu0 %v1598, 32
        %v3097 = vpop.permute.xlu0 %3096
        %3098 = vrot.lane.b32.xlu0 %v1603, 32
        %v3099 = vpop.permute.xlu0 %3098
        %3100 = vrot.lane.b32.xlu0 %v1606, 32
        %v3101 = vpop.permute.xlu0 %3100
        %3102 = vrot.lane.b32.xlu0 %v1611, 32
        %v3103 = vpop.permute.xlu0 %3102
        %v3128 = vadd.f32 %v3032, %v3057
        %v3129 = vadd.f32 %v3033, %v3059
        %v3130 = vadd.f32 %v3034, %v3061
        %v3131 = vadd.f32 %v3035, %v3063
        %v3132 = vadd.f32 %v3036, %v3065
        %v3133 = vadd.f32 %v3037, %v3067
        %v3134 = vadd.f32 %v3038, %v3069
        %v3135 = vadd.f32 %v3039, %v3071
        %v3136 = vadd.f32 %v3040, %v3073
        %v3137 = vadd.f32 %v3041, %v3075
        %v3138 = vadd.f32 %v3042, %v3077
        %v3139 = vadd.f32 %v3043, %v3079
        %v3140 = vadd.f32 %v3044, %v3081
        %v3141 = vadd.f32 %v3045, %v3083
        %v3142 = vadd.f32 %v3046, %v3085
        %v3143 = vadd.f32 %v3047, %v3087
        %v3144 = vadd.f32 %v3048, %v3089
        %v3145 = vadd.f32 %v3049, %v3091
        %v3146 = vadd.f32 %v3050, %v3093
        %v3147 = vadd.f32 %v3051, %v3095
        %v3148 = vadd.f32 %v3052, %v3097
        %v3149 = vadd.f32 %v3053, %v3099
        %v3150 = vadd.f32 %v3054, %v3101
        %v3151 = vadd.f32 %v3055, %v3103
        %v3176 = vrot.slane %v1682, 1
        %v3177 = vrot.slane %v1687, 1
        %v3178 = vsel %vm2547, %v3176, %v3177
        %v3179 = vrot.slane %v1690, 1
        %v3180 = vsel %vm2547, %v3177, %v3179
        %v3181 = vrot.slane %v1695, 1
        %v3182 = vrot.slane %v1699, 1
        %v3183 = vsel %vm2547, %v3181, %v3182
        %v3184 = vrot.slane %v1705, 1
        %v3185 = vsel %vm2547, %v3182, %v3184
        %v3186 = vrot.slane %v1709, 1
        %v3187 = vrot.slane %v1715, 1
        %v3188 = vsel %vm2547, %v3186, %v3187
        %v3189 = vrot.slane %v1719, 1
        %v3190 = vsel %vm2547, %v3187, %v3189
        %v3191 = vrot.slane %v1725, 1
        %v3192 = vrot.slane %v1729, 1
        %v3193 = vsel %vm2547, %v3191, %v3192
        %v3194 = vrot.slane %v1735, 1
        %v3195 = vsel %vm2547, %v3192, %v3194
        %v3196 = vrot.slane %v1739, 1
        %v3197 = vrot.slane %v1745, 1
        %v3198 = vsel %vm2547, %v3196, %v3197
        %v3199 = vrot.slane %v1749, 1
        %v3200 = vsel %vm2547, %v3197, %v3199
        %v3201 = vrot.slane %v1755, 1
        %v3202 = vrot.slane %v1759, 1
        %v3203 = vsel %vm2547, %v3201, %v3202
        %v3204 = vrot.slane %v1765, 1
        %v3205 = vsel %vm2547, %v3202, %v3204
        %v3206 = vrot.slane %v1769, 1
        %v3207 = vrot.slane %v1775, 1
        %v3208 = vsel %vm2547, %v3206, %v3207
        %v3209 = vrot.slane %v1779, 1
        %v3210 = vsel %vm2547, %v3207, %v3209
        %v3211 = vrot.slane %v1785, 1
        %v3212 = vrot.slane %v1789, 1
        %v3213 = vsel %vm2547, %v3211, %v3212
        %v3214 = vrot.slane %v1795, 1
        %v3215 = vsel %vm2547, %v3212, %v3214
        %v3240 = vadd.f32 %v3128, %v3178
        %v3241 = vadd.f32 %v3129, %v3180
        %v3242 = vadd.f32 %v3130, %v3179
        %v3243 = vadd.f32 %v3131, %v3183
        %v3244 = vadd.f32 %v3132, %v3185
        %v3245 = vadd.f32 %v3133, %v3184
        %v3246 = vadd.f32 %v3134, %v3188
        %v3247 = vadd.f32 %v3135, %v3190
        %v3248 = vadd.f32 %v3136, %v3189
        %v3249 = vadd.f32 %v3137, %v3193
        %v3250 = vadd.f32 %v3138, %v3195
        %v3251 = vadd.f32 %v3139, %v3194
        %v3252 = vadd.f32 %v3140, %v3198
        %v3253 = vadd.f32 %v3141, %v3200
        %v3254 = vadd.f32 %v3142, %v3199
        %v3255 = vadd.f32 %v3143, %v3203
        %v3256 = vadd.f32 %v3144, %v3205
        %v3257 = vadd.f32 %v3145, %v3204
        %v3258 = vadd.f32 %v3146, %v3208
        %v3259 = vadd.f32 %v3147, %v3210
        %v3260 = vadd.f32 %v3148, %v3209
        %v3261 = vadd.f32 %v3149, %v3213
        %v3262 = vadd.f32 %v3150, %v3215
        %v3263 = vadd.f32 %v3151, %v3214
        %v3264 = vrot.slane %v1682, 2
        %v3265 = vrot.slane %v1687, 2
        %v3266 = vsel %vm2708, %v3264, %v3265
        %v3267 = vrot.slane %v1690, 2
        %v3268 = vsel %vm2708, %v3265, %v3267
        %v3269 = vrot.slane %v1695, 2
        %v3270 = vrot.slane %v1699, 2
        %v3271 = vsel %vm2708, %v3269, %v3270
        %v3272 = vrot.slane %v1705, 2
        %v3273 = vsel %vm2708, %v3270, %v3272
        %v3274 = vrot.slane %v1709, 2
        %v3275 = vrot.slane %v1715, 2
        %v3276 = vsel %vm2708, %v3274, %v3275
        %v3277 = vrot.slane %v1719, 2
        %v3278 = vsel %vm2708, %v3275, %v3277
        %v3279 = vrot.slane %v1725, 2
        %v3280 = vrot.slane %v1729, 2
        %v3281 = vsel %vm2708, %v3279, %v3280
        %v3282 = vrot.slane %v1735, 2
        %v3283 = vsel %vm2708, %v3280, %v3282
        %v3284 = vrot.slane %v1739, 2
        %v3285 = vrot.slane %v1745, 2
        %v3286 = vsel %vm2708, %v3284, %v3285
        %v3287 = vrot.slane %v1749, 2
        %v3288 = vsel %vm2708, %v3285, %v3287
        %v3289 = vrot.slane %v1755, 2
        %v3290 = vrot.slane %v1759, 2
        %v3291 = vsel %vm2708, %v3289, %v3290
        %v3292 = vrot.slane %v1765, 2
        %v3293 = vsel %vm2708, %v3290, %v3292
        %v3294 = vrot.slane %v1769, 2
        %v3295 = vrot.slane %v1775, 2
        %v3296 = vsel %vm2708, %v3294, %v3295
        %v3297 = vrot.slane %v1779, 2
        %v3298 = vsel %vm2708, %v3295, %v3297
        %v3299 = vrot.slane %v1785, 2
        %v3300 = vrot.slane %v1789, 2
        %v3301 = vsel %vm2708, %v3299, %v3300
        %v3302 = vrot.slane %v1795, 2
        %v3303 = vsel %vm2708, %v3300, %v3302
        %3304 = vrot.lane.b32.xlu0 %v3266, 96
        %v3305 = vpop.permute.xlu0 %3304
        %3306 = vrot.lane.b32.xlu0 %v3268, 96
        %v3307 = vpop.permute.xlu0 %3306
        %3308 = vrot.lane.b32.xlu0 %v3267, 96
        %v3309 = vpop.permute.xlu0 %3308
        %3310 = vrot.lane.b32.xlu0 %v3271, 96
        %v3311 = vpop.permute.xlu0 %3310
        %3312 = vrot.lane.b32.xlu0 %v3273, 96
        %v3313 = vpop.permute.xlu0 %3312
        %3314 = vrot.lane.b32.xlu0 %v3272, 96
        %v3315 = vpop.permute.xlu0 %3314
        %3316 = vrot.lane.b32.xlu0 %v3276, 96
        %v3317 = vpop.permute.xlu0 %3316
        %3318 = vrot.lane.b32.xlu0 %v3278, 96
        %v3319 = vpop.permute.xlu0 %3318
        %3320 = vrot.lane.b32.xlu0 %v3277, 96
        %v3321 = vpop.permute.xlu0 %3320
        %3322 = vrot.lane.b32.xlu0 %v3281, 96
        %v3323 = vpop.permute.xlu0 %3322
        %3324 = vrot.lane.b32.xlu0 %v3283, 96
        %v3325 = vpop.permute.xlu0 %3324
        %3326 = vrot.lane.b32.xlu0 %v3282, 96
        %v3327 = vpop.permute.xlu0 %3326
        %3328 = vrot.lane.b32.xlu0 %v3286, 96
        %v3329 = vpop.permute.xlu0 %3328
        %3330 = vrot.lane.b32.xlu0 %v3288, 96
        %v3331 = vpop.permute.xlu0 %3330
        %3332 = vrot.lane.b32.xlu0 %v3287, 96
        %v3333 = vpop.permute.xlu0 %3332
        %3334 = vrot.lane.b32.xlu0 %v3291, 96
        %v3335 = vpop.permute.xlu0 %3334
        %3336 = vrot.lane.b32.xlu0 %v3293, 96
        %v3337 = vpop.permute.xlu0 %3336
        %3338 = vrot.lane.b32.xlu0 %v3292, 96
        %v3339 = vpop.permute.xlu0 %3338
        %3340 = vrot.lane.b32.xlu0 %v3296, 96
        %v3341 = vpop.permute.xlu0 %3340
        %3342 = vrot.lane.b32.xlu0 %v3298, 96
        %v3343 = vpop.permute.xlu0 %3342
        %3344 = vrot.lane.b32.xlu0 %v3297, 96
        %v3345 = vpop.permute.xlu0 %3344
        %3346 = vrot.lane.b32.xlu0 %v3301, 96
        %v3347 = vpop.permute.xlu0 %3346
        %3348 = vrot.lane.b32.xlu0 %v3303, 96
        %v3349 = vpop.permute.xlu0 %3348
        %3350 = vrot.lane.b32.xlu0 %v3302, 96
        %v3351 = vpop.permute.xlu0 %3350
        %v3376 = vadd.f32 %v3240, %v3305
        %v3377 = vadd.f32 %v3241, %v3307
        %v3378 = vadd.f32 %v3242, %v3309
        %v3379 = vadd.f32 %v3243, %v3311
        %v3380 = vadd.f32 %v3244, %v3313
        %v3381 = vadd.f32 %v3245, %v3315
        %v3382 = vadd.f32 %v3246, %v3317
        %v3383 = vadd.f32 %v3247, %v3319
        %v3384 = vadd.f32 %v3248, %v3321
        %v3385 = vadd.f32 %v3249, %v3323
        %v3386 = vadd.f32 %v3250, %v3325
        %v3387 = vadd.f32 %v3251, %v3327
        %v3388 = vadd.f32 %v3252, %v3329
        %v3389 = vadd.f32 %v3253, %v3331
        %v3390 = vadd.f32 %v3254, %v3333
        %v3391 = vadd.f32 %v3255, %v3335
        %v3392 = vadd.f32 %v3256, %v3337
        %v3393 = vadd.f32 %v3257, %v3339
        %v3394 = vadd.f32 %v3258, %v3341
        %v3395 = vadd.f32 %v3259, %v3343
        %v3396 = vadd.f32 %v3260, %v3345
        %v3397 = vadd.f32 %v3261, %v3347
        %v3398 = vadd.f32 %v3262, %v3349
        %v3399 = vadd.f32 %v3263, %v3351
        %v3402 = vrot.slane %v1695, 6
        %v3403 = vrot.slane %v1699, 6
        %v3404 = vsel %vm581, %v3402, %v3403
        %v3405 = vrot.slane %v1709, 6
        %v3406 = vrot.slane %v1715, 6
        %v3407 = vsel %vm581, %v3405, %v3406
        %v3408 = vrot.slane %v1725, 6
        %v3409 = vrot.slane %v1729, 6
        %v3410 = vsel %vm581, %v3408, %v3409
        %v3411 = vrot.slane %v1739, 6
        %v3412 = vrot.slane %v1745, 6
        %v3413 = vsel %vm581, %v3411, %v3412
        %v3414 = vrot.slane %v1755, 6
        %v3415 = vrot.slane %v1759, 6
        %v3416 = vsel %vm581, %v3414, %v3415
        %v3417 = vrot.slane %v1769, 6
        %v3418 = vrot.slane %v1775, 6
        %v3419 = vsel %vm581, %v3417, %v3418
        %v3420 = vrot.slane %v1785, 6
        %v3421 = vrot.slane %v1789, 6
        %v3422 = vsel %vm581, %v3420, %v3421
        %v3423 = vrot.slane %v1799, 6
        %v3424 = vrot.slane %v1805, 6
        %v3425 = vsel %vm581, %v3423, %v3424
        %3426 = vrot.lane.b32.xlu0 %v3402, 64
        %v3427 = vpop.permute.xlu0 %3426
        %3428 = vrot.lane.b32.xlu0 %v3404, 64
        %v3429 = vpop.permute.xlu0 %3428
        %3430 = vrot.lane.b32.xlu0 %v3403, 64
        %v3431 = vpop.permute.xlu0 %3430
        %3432 = vrot.lane.b32.xlu0 %v3405, 64
        %v3433 = vpop.permute.xlu0 %3432
        %3434 = vrot.lane.b32.xlu0 %v3407, 64
        %v3435 = vpop.permute.xlu0 %3434
        %3436 = vrot.lane.b32.xlu0 %v3406, 64
        %v3437 = vpop.permute.xlu0 %3436
        %3438 = vrot.lane.b32.xlu0 %v3408, 64
        %v3439 = vpop.permute.xlu0 %3438
        %3440 = vrot.lane.b32.xlu0 %v3410, 64
        %v3441 = vpop.permute.xlu0 %3440
        %3442 = vrot.lane.b32.xlu0 %v3409, 64
        %v3443 = vpop.permute.xlu0 %3442
        %3444 = vrot.lane.b32.xlu0 %v3411, 64
        %v3445 = vpop.permute.xlu0 %3444
        %3446 = vrot.lane.b32.xlu0 %v3413, 64
        %v3447 = vpop.permute.xlu0 %3446
        %3448 = vrot.lane.b32.xlu0 %v3412, 64
        %v3449 = vpop.permute.xlu0 %3448
        %3450 = vrot.lane.b32.xlu0 %v3414, 64
        %v3451 = vpop.permute.xlu0 %3450
        %3452 = vrot.lane.b32.xlu0 %v3416, 64
        %v3453 = vpop.permute.xlu0 %3452
        %3454 = vrot.lane.b32.xlu0 %v3415, 64
        %v3455 = vpop.permute.xlu0 %3454
        %3456 = vrot.lane.b32.xlu0 %v3417, 64
        %v3457 = vpop.permute.xlu0 %3456
        %3458 = vrot.lane.b32.xlu0 %v3419, 64
        %v3459 = vpop.permute.xlu0 %3458
        %3460 = vrot.lane.b32.xlu0 %v3418, 64
        %v3461 = vpop.permute.xlu0 %3460
        %3462 = vrot.lane.b32.xlu0 %v3420, 64
        %v3463 = vpop.permute.xlu0 %3462
        %3464 = vrot.lane.b32.xlu0 %v3422, 64
        %v3465 = vpop.permute.xlu0 %3464
        %3466 = vrot.lane.b32.xlu0 %v3421, 64
        %v3467 = vpop.permute.xlu0 %3466
        %3468 = vrot.lane.b32.xlu0 %v3423, 64
        %v3469 = vpop.permute.xlu0 %3468
        %3470 = vrot.lane.b32.xlu0 %v3425, 64
        %v3471 = vpop.permute.xlu0 %3470
        %3472 = vrot.lane.b32.xlu0 %v3424, 64
        %v3473 = vpop.permute.xlu0 %3472
        %v3498 = vadd.f32 %v3376, %v3427
        %v3499 = vadd.f32 %v3377, %v3429
        %v3500 = vadd.f32 %v3378, %v3431
        %v3501 = vadd.f32 %v3379, %v3433
        %v3502 = vadd.f32 %v3380, %v3435
        %v3503 = vadd.f32 %v3381, %v3437
        %v3504 = vadd.f32 %v3382, %v3439
        %v3505 = vadd.f32 %v3383, %v3441
        %v3506 = vadd.f32 %v3384, %v3443
        %v3507 = vadd.f32 %v3385, %v3445
        %v3508 = vadd.f32 %v3386, %v3447
        %v3509 = vadd.f32 %v3387, %v3449
        %v3510 = vadd.f32 %v3388, %v3451
        %v3511 = vadd.f32 %v3389, %v3453
        %v3512 = vadd.f32 %v3390, %v3455
        %v3513 = vadd.f32 %v3391, %v3457
        %v3514 = vadd.f32 %v3392, %v3459
        %v3515 = vadd.f32 %v3393, %v3461
        %v3516 = vadd.f32 %v3394, %v3463
        %v3517 = vadd.f32 %v3395, %v3465
        %v3518 = vadd.f32 %v3396, %v3467
        %v3519 = vadd.f32 %v3397, %v3469
        %v3520 = vadd.f32 %v3398, %v3471
        %v3521 = vadd.f32 %v3399, %v3473
        %v3523 = vrot.slane %v1695, 7
        %v3524 = vrot.slane %v1699, 7
        %v3525 = vsel %vm2314, %v3523, %v3524
        %v3526 = vrot.slane %v1705, 7
        %v3527 = vsel %vm2314, %v3524, %v3526
        %v3528 = vrot.slane %v1709, 7
        %v3529 = vrot.slane %v1715, 7
        %v3530 = vsel %vm2314, %v3528, %v3529
        %v3531 = vrot.slane %v1719, 7
        %v3532 = vsel %vm2314, %v3529, %v3531
        %v3533 = vrot.slane %v1725, 7
        %v3534 = vrot.slane %v1729, 7
        %v3535 = vsel %vm2314, %v3533, %v3534
        %v3536 = vrot.slane %v1735, 7
        %v3537 = vsel %vm2314, %v3534, %v3536
        %v3538 = vrot.slane %v1739, 7
        %v3539 = vrot.slane %v1745, 7
        %v3540 = vsel %vm2314, %v3538, %v3539
        %v3541 = vrot.slane %v1749, 7
        %v3542 = vsel %vm2314, %v3539, %v3541
        %v3543 = vrot.slane %v1755, 7
        %v3544 = vrot.slane %v1759, 7
        %v3545 = vsel %vm2314, %v3543, %v3544
        %v3546 = vrot.slane %v1765, 7
        %v3547 = vsel %vm2314, %v3544, %v3546
        %v3548 = vrot.slane %v1769, 7
        %v3549 = vrot.slane %v1775, 7
        %v3550 = vsel %vm2314, %v3548, %v3549
        %v3551 = vrot.slane %v1779, 7
        %v3552 = vsel %vm2314, %v3549, %v3551
        %v3553 = vrot.slane %v1785, 7
        %v3554 = vrot.slane %v1789, 7
        %v3555 = vsel %vm2314, %v3553, %v3554
        %v3556 = vrot.slane %v1795, 7
        %v3557 = vsel %vm2314, %v3554, %v3556
        %v3558 = vrot.slane %v1799, 7
        %v3559 = vrot.slane %v1805, 7
        %v3560 = vsel %vm2314, %v3558, %v3559
        %v3561 = vrot.slane %v1809, 7
        %v3562 = vsel %vm2314, %v3559, %v3561
        %3563 = vrot.lane.b32.xlu0 %v3523, 32
        %v3564 = vpop.permute.xlu0 %3563
        %3565 = vrot.lane.b32.xlu0 %v3525, 32
        %v3566 = vpop.permute.xlu0 %3565
        %3567 = vrot.lane.b32.xlu0 %v3527, 32
        %v3568 = vpop.permute.xlu0 %3567
        %3569 = vrot.lane.b32.xlu0 %v3528, 32
        %v3570 = vpop.permute.xlu0 %3569
        %3571 = vrot.lane.b32.xlu0 %v3530, 32
        %v3572 = vpop.permute.xlu0 %3571
        %3573 = vrot.lane.b32.xlu0 %v3532, 32
        %v3574 = vpop.permute.xlu0 %3573
        %3575 = vrot.lane.b32.xlu0 %v3533, 32
        %v3576 = vpop.permute.xlu0 %3575
        %3577 = vrot.lane.b32.xlu0 %v3535, 32
        %v3578 = vpop.permute.xlu0 %3577
        %3579 = vrot.lane.b32.xlu0 %v3537, 32
        %v3580 = vpop.permute.xlu0 %3579
        %3581 = vrot.lane.b32.xlu0 %v3538, 32
        %v3582 = vpop.permute.xlu0 %3581
        %3583 = vrot.lane.b32.xlu0 %v3540, 32
        %v3584 = vpop.permute.xlu0 %3583
        %3585 = vrot.lane.b32.xlu0 %v3542, 32
        %v3586 = vpop.permute.xlu0 %3585
        %3587 = vrot.lane.b32.xlu0 %v3543, 32
        %v3588 = vpop.permute.xlu0 %3587
        %3589 = vrot.lane.b32.xlu0 %v3545, 32
        %v3590 = vpop.permute.xlu0 %3589
        %3591 = vrot.lane.b32.xlu0 %v3547, 32
        %v3592 = vpop.permute.xlu0 %3591
        %3593 = vrot.lane.b32.xlu0 %v3548, 32
        %v3594 = vpop.permute.xlu0 %3593
        %3595 = vrot.lane.b32.xlu0 %v3550, 32
        %v3596 = vpop.permute.xlu0 %3595
        %3597 = vrot.lane.b32.xlu0 %v3552, 32
        %v3598 = vpop.permute.xlu0 %3597
        %3599 = vrot.lane.b32.xlu0 %v3553, 32
        %v3600 = vpop.permute.xlu0 %3599
        %3601 = vrot.lane.b32.xlu0 %v3555, 32
        %v3602 = vpop.permute.xlu0 %3601
        %3603 = vrot.lane.b32.xlu0 %v3557, 32
        %v3604 = vpop.permute.xlu0 %3603
        %3605 = vrot.lane.b32.xlu0 %v3558, 32
        %v3606 = vpop.permute.xlu0 %3605
        %3607 = vrot.lane.b32.xlu0 %v3560, 32
        %v3608 = vpop.permute.xlu0 %3607
        %3609 = vrot.lane.b32.xlu0 %v3562, 32
        %v3610 = vpop.permute.xlu0 %3609
        %v3635 = vadd.f32 %v3498, %v3564
        %v3636 = vadd.f32 %v3499, %v3566
        %v3637 = vadd.f32 %v3500, %v3568
        %v3638 = vadd.f32 %v3501, %v3570
        %v3639 = vadd.f32 %v3502, %v3572
        %v3640 = vadd.f32 %v3503, %v3574
        %v3641 = vadd.f32 %v3504, %v3576
        %v3642 = vadd.f32 %v3505, %v3578
        %v3643 = vadd.f32 %v3506, %v3580
        %v3644 = vadd.f32 %v3507, %v3582
        %v3645 = vadd.f32 %v3508, %v3584
        %v3646 = vadd.f32 %v3509, %v3586
        %v3647 = vadd.f32 %v3510, %v3588
        %v3648 = vadd.f32 %v3511, %v3590
        %v3649 = vadd.f32 %v3512, %v3592
        %v3650 = vadd.f32 %v3513, %v3594
        %v3651 = vadd.f32 %v3514, %v3596
        %v3652 = vadd.f32 %v3515, %v3598
        %v3653 = vadd.f32 %v3516, %v3600
        %v3654 = vadd.f32 %v3517, %v3602
        %v3655 = vadd.f32 %v3518, %v3604
        %v3656 = vadd.f32 %v3519, %v3606
        %v3657 = vadd.f32 %v3520, %v3608
        %v3658 = vadd.f32 %v3521, %v3610
        %v3683 = vrot.slane %v1697, 1
        %v3684 = vrot.slane %v1701, 1
        %v3685 = vsel %vm2547, %v3683, %v3684
        %v3686 = vrot.slane %v1707, 1
        %v3687 = vsel %vm2547, %v3684, %v3686
        %v3688 = vrot.slane %v1711, 1
        %v3689 = vrot.slane %v1717, 1
        %v3690 = vsel %vm2547, %v3688, %v3689
        %v3691 = vrot.slane %v1721, 1
        %v3692 = vsel %vm2547, %v3689, %v3691
        %v3693 = vrot.slane %v1727, 1
        %v3694 = vrot.slane %v1731, 1
        %v3695 = vsel %vm2547, %v3693, %v3694
        %v3696 = vrot.slane %v1737, 1
        %v3697 = vsel %vm2547, %v3694, %v3696
        %v3698 = vrot.slane %v1741, 1
        %v3699 = vrot.slane %v1747, 1
        %v3700 = vsel %vm2547, %v3698, %v3699
        %v3701 = vrot.slane %v1751, 1
        %v3702 = vsel %vm2547, %v3699, %v3701
        %v3703 = vrot.slane %v1757, 1
        %v3704 = vrot.slane %v1761, 1
        %v3705 = vsel %vm2547, %v3703, %v3704
        %v3706 = vrot.slane %v1767, 1
        %v3707 = vsel %vm2547, %v3704, %v3706
        %v3708 = vrot.slane %v1771, 1
        %v3709 = vrot.slane %v1777, 1
        %v3710 = vsel %vm2547, %v3708, %v3709
        %v3711 = vrot.slane %v1781, 1
        %v3712 = vsel %vm2547, %v3709, %v3711
        %v3713 = vrot.slane %v1787, 1
        %v3714 = vrot.slane %v1791, 1
        %v3715 = vsel %vm2547, %v3713, %v3714
        %v3716 = vrot.slane %v1797, 1
        %v3717 = vsel %vm2547, %v3714, %v3716
        %v3718 = vrot.slane %v1801, 1
        %v3719 = vrot.slane %v1807, 1
        %v3720 = vsel %vm2547, %v3718, %v3719
        %v3721 = vrot.slane %v1811, 1
        %v3722 = vsel %vm2547, %v3719, %v3721
        %3723 = vrot.lane.b32.xlu0 %v3685, 96
        %v3724 = vpop.permute.xlu0 %3723
        %3725 = vrot.lane.b32.xlu0 %v3687, 96
        %v3726 = vpop.permute.xlu0 %3725
        %3727 = vrot.lane.b32.xlu0 %v3686, 96
        %v3728 = vpop.permute.xlu0 %3727
        %3729 = vrot.lane.b32.xlu0 %v3690, 96
        %v3730 = vpop.permute.xlu0 %3729
        %3731 = vrot.lane.b32.xlu0 %v3692, 96
        %v3732 = vpop.permute.xlu0 %3731
        %3733 = vrot.lane.b32.xlu0 %v3691, 96
        %v3734 = vpop.permute.xlu0 %3733
        %3735 = vrot.lane.b32.xlu0 %v3695, 96
        %v3736 = vpop.permute.xlu0 %3735
        %3737 = vrot.lane.b32.xlu0 %v3697, 96
        %v3738 = vpop.permute.xlu0 %3737
        %3739 = vrot.lane.b32.xlu0 %v3696, 96
        %v3740 = vpop.permute.xlu0 %3739
        %3741 = vrot.lane.b32.xlu0 %v3700, 96
        %v3742 = vpop.permute.xlu0 %3741
        %3743 = vrot.lane.b32.xlu0 %v3702, 96
        %v3744 = vpop.permute.xlu0 %3743
        %3745 = vrot.lane.b32.xlu0 %v3701, 96
        %v3746 = vpop.permute.xlu0 %3745
        %3747 = vrot.lane.b32.xlu0 %v3705, 96
        %v3748 = vpop.permute.xlu0 %3747
        %3749 = vrot.lane.b32.xlu0 %v3707, 96
        %v3750 = vpop.permute.xlu0 %3749
        %3751 = vrot.lane.b32.xlu0 %v3706, 96
        %v3752 = vpop.permute.xlu0 %3751
        %3753 = vrot.lane.b32.xlu0 %v3710, 96
        %v3754 = vpop.permute.xlu0 %3753
        %3755 = vrot.lane.b32.xlu0 %v3712, 96
        %v3756 = vpop.permute.xlu0 %3755
        %3757 = vrot.lane.b32.xlu0 %v3711, 96
        %v3758 = vpop.permute.xlu0 %3757
        %3759 = vrot.lane.b32.xlu0 %v3715, 96
        %v3760 = vpop.permute.xlu0 %3759
        %3761 = vrot.lane.b32.xlu0 %v3717, 96
        %v3762 = vpop.permute.xlu0 %3761
        %3763 = vrot.lane.b32.xlu0 %v3716, 96
        %v3764 = vpop.permute.xlu0 %3763
        %3765 = vrot.lane.b32.xlu0 %v3720, 96
        %v3766 = vpop.permute.xlu0 %3765
        %3767 = vrot.lane.b32.xlu0 %v3722, 96
        %v3768 = vpop.permute.xlu0 %3767
        %3769 = vrot.lane.b32.xlu0 %v3721, 96
        %v3770 = vpop.permute.xlu0 %3769
        %v3795 = vadd.f32 %v3635, %v3724
        %v3796 = vadd.f32 %v3636, %v3726
        %v3797 = vadd.f32 %v3637, %v3728
        %v3798 = vadd.f32 %v3638, %v3730
        %v3799 = vadd.f32 %v3639, %v3732
        %v3800 = vadd.f32 %v3640, %v3734
        %v3801 = vadd.f32 %v3641, %v3736
        %v3802 = vadd.f32 %v3642, %v3738
        %v3803 = vadd.f32 %v3643, %v3740
        %v3804 = vadd.f32 %v3644, %v3742
        %v3805 = vadd.f32 %v3645, %v3744
        %v3806 = vadd.f32 %v3646, %v3746
        %v3807 = vadd.f32 %v3647, %v3748
        %v3808 = vadd.f32 %v3648, %v3750
        %v3809 = vadd.f32 %v3649, %v3752
        %v3810 = vadd.f32 %v3650, %v3754
        %v3811 = vadd.f32 %v3651, %v3756
        %v3812 = vadd.f32 %v3652, %v3758
        %v3813 = vadd.f32 %v3653, %v3760
        %v3814 = vadd.f32 %v3654, %v3762
        %v3815 = vadd.f32 %v3655, %v3764
        %v3816 = vadd.f32 %v3656, %v3766
        %v3817 = vadd.f32 %v3657, %v3768
        %v3818 = vadd.f32 %v3658, %v3770
        %v3819 = vrot.slane %v1697, 2
        %v3820 = vrot.slane %v1701, 2
        %v3821 = vsel %vm2708, %v3819, %v3820
        %v3822 = vrot.slane %v1707, 2
        %v3823 = vsel %vm2708, %v3820, %v3822
        %v3824 = vrot.slane %v1711, 2
        %v3825 = vrot.slane %v1717, 2
        %v3826 = vsel %vm2708, %v3824, %v3825
        %v3827 = vrot.slane %v1721, 2
        %v3828 = vsel %vm2708, %v3825, %v3827
        %v3829 = vrot.slane %v1727, 2
        %v3830 = vrot.slane %v1731, 2
        %v3831 = vsel %vm2708, %v3829, %v3830
        %v3832 = vrot.slane %v1737, 2
        %v3833 = vsel %vm2708, %v3830, %v3832
        %v3834 = vrot.slane %v1741, 2
        %v3835 = vrot.slane %v1747, 2
        %v3836 = vsel %vm2708, %v3834, %v3835
        %v3837 = vrot.slane %v1751, 2
        %v3838 = vsel %vm2708, %v3835, %v3837
        %v3839 = vrot.slane %v1757, 2
        %v3840 = vrot.slane %v1761, 2
        %v3841 = vsel %vm2708, %v3839, %v3840
        %v3842 = vrot.slane %v1767, 2
        %v3843 = vsel %vm2708, %v3840, %v3842
        %v3844 = vrot.slane %v1771, 2
        %v3845 = vrot.slane %v1777, 2
        %v3846 = vsel %vm2708, %v3844, %v3845
        %v3847 = vrot.slane %v1781, 2
        %v3848 = vsel %vm2708, %v3845, %v3847
        %v3849 = vrot.slane %v1787, 2
        %v3850 = vrot.slane %v1791, 2
        %v3851 = vsel %vm2708, %v3849, %v3850
        %v3852 = vrot.slane %v1797, 2
        %v3853 = vsel %vm2708, %v3850, %v3852
        %v3854 = vrot.slane %v1801, 2
        %v3855 = vrot.slane %v1807, 2
        %v3856 = vsel %vm2708, %v3854, %v3855
        %v3857 = vrot.slane %v1811, 2
        %v3858 = vsel %vm2708, %v3855, %v3857
        %3859 = vrot.lane.b32.xlu0 %v3821, 64
        %v3860 = vpop.permute.xlu0 %3859
        %3861 = vrot.lane.b32.xlu0 %v3823, 64
        %v3862 = vpop.permute.xlu0 %3861
        %3863 = vrot.lane.b32.xlu0 %v3822, 64
        %v3864 = vpop.permute.xlu0 %3863
        %3865 = vrot.lane.b32.xlu0 %v3826, 64
        %v3866 = vpop.permute.xlu0 %3865
        %3867 = vrot.lane.b32.xlu0 %v3828, 64
        %v3868 = vpop.permute.xlu0 %3867
        %3869 = vrot.lane.b32.xlu0 %v3827, 64
        %v3870 = vpop.permute.xlu0 %3869
        %3871 = vrot.lane.b32.xlu0 %v3831, 64
        %v3872 = vpop.permute.xlu0 %3871
        %3873 = vrot.lane.b32.xlu0 %v3833, 64
        %v3874 = vpop.permute.xlu0 %3873
        %3875 = vrot.lane.b32.xlu0 %v3832, 64
        %v3876 = vpop.permute.xlu0 %3875
        %3877 = vrot.lane.b32.xlu0 %v3836, 64
        %v3878 = vpop.permute.xlu0 %3877
        %3879 = vrot.lane.b32.xlu0 %v3838, 64
        %v3880 = vpop.permute.xlu0 %3879
        %3881 = vrot.lane.b32.xlu0 %v3837, 64
        %v3882 = vpop.permute.xlu0 %3881
        %3883 = vrot.lane.b32.xlu0 %v3841, 64
        %v3884 = vpop.permute.xlu0 %3883
        %3885 = vrot.lane.b32.xlu0 %v3843, 64
        %v3886 = vpop.permute.xlu0 %3885
        %3887 = vrot.lane.b32.xlu0 %v3842, 64
        %v3888 = vpop.permute.xlu0 %3887
        %3889 = vrot.lane.b32.xlu0 %v3846, 64
        %v3890 = vpop.permute.xlu0 %3889
        %3891 = vrot.lane.b32.xlu0 %v3848, 64
        %v3892 = vpop.permute.xlu0 %3891
        %3893 = vrot.lane.b32.xlu0 %v3847, 64
        %v3894 = vpop.permute.xlu0 %3893
        %3895 = vrot.lane.b32.xlu0 %v3851, 64
        %v3896 = vpop.permute.xlu0 %3895
        %3897 = vrot.lane.b32.xlu0 %v3853, 64
        %v3898 = vpop.permute.xlu0 %3897
        %3899 = vrot.lane.b32.xlu0 %v3852, 64
        %v3900 = vpop.permute.xlu0 %3899
        %3901 = vrot.lane.b32.xlu0 %v3856, 64
        %v3902 = vpop.permute.xlu0 %3901
        %3903 = vrot.lane.b32.xlu0 %v3858, 64
        %v3904 = vpop.permute.xlu0 %3903
        %3905 = vrot.lane.b32.xlu0 %v3857, 64
        %v3906 = vpop.permute.xlu0 %3905
        %v3931 = vadd.f32 %v3795, %v3860
        %v3932 = vadd.f32 %v3796, %v3862
        %v3933 = vadd.f32 %v3797, %v3864
        %v3934 = vadd.f32 %v3798, %v3866
        %v3935 = vadd.f32 %v3799, %v3868
        %v3936 = vadd.f32 %v3800, %v3870
        %v3937 = vadd.f32 %v3801, %v3872
        %v3938 = vadd.f32 %v3802, %v3874
        %v3939 = vadd.f32 %v3803, %v3876
        %v3940 = vadd.f32 %v3804, %v3878
        %v3941 = vadd.f32 %v3805, %v3880
        %v3942 = vadd.f32 %v3806, %v3882
        %v3943 = vadd.f32 %v3807, %v3884
        %v3944 = vadd.f32 %v3808, %v3886
        %v3945 = vadd.f32 %v3809, %v3888
        %v3946 = vadd.f32 %v3810, %v3890
        %v3947 = vadd.f32 %v3811, %v3892
        %v3948 = vadd.f32 %v3812, %v3894
        %v3949 = vadd.f32 %v3813, %v3896
        %v3950 = vadd.f32 %v3814, %v3898
        %v3951 = vadd.f32 %v3815, %v3900
        %v3952 = vadd.f32 %v3816, %v3902
        %v3953 = vadd.f32 %v3817, %v3904
        %v3954 = vadd.f32 %v3818, %v3906
        %v3957 = vrot.slane %v1711, 6
        %v3958 = vrot.slane %v1717, 6
        %v3959 = vsel %vm581, %v3957, %v3958
        %v3960 = vrot.slane %v1727, 6
        %v3961 = vrot.slane %v1731, 6
        %v3962 = vsel %vm581, %v3960, %v3961
        %v3963 = vrot.slane %v1741, 6
        %v3964 = vrot.slane %v1747, 6
        %v3965 = vsel %vm581, %v3963, %v3964
        %v3966 = vrot.slane %v1757, 6
        %v3967 = vrot.slane %v1761, 6
        %v3968 = vsel %vm581, %v3966, %v3967
        %v3969 = vrot.slane %v1771, 6
        %v3970 = vrot.slane %v1777, 6
        %v3971 = vsel %vm581, %v3969, %v3970
        %v3972 = vrot.slane %v1787, 6
        %v3973 = vrot.slane %v1791, 6
        %v3974 = vsel %vm581, %v3972, %v3973
        %v3975 = vrot.slane %v1801, 6
        %v3976 = vrot.slane %v1807, 6
        %v3977 = vsel %vm581, %v3975, %v3976
        %v3978 = vrot.slane %v1816, 6
        %v3979 = vrot.slane %v1819, 6
        %v3980 = vsel %vm581, %v3978, %v3979
        %3981 = vrot.lane.b32.xlu0 %v3957, 32
        %v3982 = vpop.permute.xlu0 %3981
        %3983 = vrot.lane.b32.xlu0 %v3959, 32
        %v3984 = vpop.permute.xlu0 %3983
        %3985 = vrot.lane.b32.xlu0 %v3958, 32
        %v3986 = vpop.permute.xlu0 %3985
        %3987 = vrot.lane.b32.xlu0 %v3960, 32
        %v3988 = vpop.permute.xlu0 %3987
        %3989 = vrot.lane.b32.xlu0 %v3962, 32
        %v3990 = vpop.permute.xlu0 %3989
        %3991 = vrot.lane.b32.xlu0 %v3961, 32
        %v3992 = vpop.permute.xlu0 %3991
        %3993 = vrot.lane.b32.xlu0 %v3963, 32
        %v3994 = vpop.permute.xlu0 %3993
        %3995 = vrot.lane.b32.xlu0 %v3965, 32
        %v3996 = vpop.permute.xlu0 %3995
        %3997 = vrot.lane.b32.xlu0 %v3964, 32
        %v3998 = vpop.permute.xlu0 %3997
        %3999 = vrot.lane.b32.xlu0 %v3966, 32
        %v4000 = vpop.permute.xlu0 %3999
        %4001 = vrot.lane.b32.xlu0 %v3968, 32
        %v4002 = vpop.permute.xlu0 %4001
        %4003 = vrot.lane.b32.xlu0 %v3967, 32
        %v4004 = vpop.permute.xlu0 %4003
        %4005 = vrot.lane.b32.xlu0 %v3969, 32
        %v4006 = vpop.permute.xlu0 %4005
        %4007 = vrot.lane.b32.xlu0 %v3971, 32
        %v4008 = vpop.permute.xlu0 %4007
        %4009 = vrot.lane.b32.xlu0 %v3970, 32
        %v4010 = vpop.permute.xlu0 %4009
        %4011 = vrot.lane.b32.xlu0 %v3972, 32
        %v4012 = vpop.permute.xlu0 %4011
        %4013 = vrot.lane.b32.xlu0 %v3974, 32
        %v4014 = vpop.permute.xlu0 %4013
        %4015 = vrot.lane.b32.xlu0 %v3973, 32
        %v4016 = vpop.permute.xlu0 %4015
        %4017 = vrot.lane.b32.xlu0 %v3975, 32
        %v4018 = vpop.permute.xlu0 %4017
        %4019 = vrot.lane.b32.xlu0 %v3977, 32
        %v4020 = vpop.permute.xlu0 %4019
        %4021 = vrot.lane.b32.xlu0 %v3976, 32
        %v4022 = vpop.permute.xlu0 %4021
        %4023 = vrot.lane.b32.xlu0 %v3978, 32
        %v4024 = vpop.permute.xlu0 %4023
        %4025 = vrot.lane.b32.xlu0 %v3980, 32
        %v4026 = vpop.permute.xlu0 %4025
        %4027 = vrot.lane.b32.xlu0 %v3979, 32
        %v4028 = vpop.permute.xlu0 %4027
        %v4053 = vadd.f32 %v3931, %v3982
        %v4054 = vadd.f32 %v3932, %v3984
        %v4055 = vadd.f32 %v3933, %v3986
        %v4056 = vadd.f32 %v3934, %v3988
        %v4057 = vadd.f32 %v3935, %v3990
        %v4058 = vadd.f32 %v3936, %v3992
        %v4059 = vadd.f32 %v3937, %v3994
        %v4060 = vadd.f32 %v3938, %v3996
        %v4061 = vadd.f32 %v3939, %v3998
        %v4062 = vadd.f32 %v3940, %v4000
        %v4063 = vadd.f32 %v3941, %v4002
        %v4064 = vadd.f32 %v3942, %v4004
        %v4065 = vadd.f32 %v3943, %v4006
        %v4066 = vadd.f32 %v3944, %v4008
        %v4067 = vadd.f32 %v3945, %v4010
        %v4068 = vadd.f32 %v3946, %v4012
        %v4069 = vadd.f32 %v3947, %v4014
        %v4070 = vadd.f32 %v3948, %v4016
        %v4071 = vadd.f32 %v3949, %v4018
        %v4072 = vadd.f32 %v3950, %v4020
        %v4073 = vadd.f32 %v3951, %v4022
        %v4074 = vadd.f32 %v3952, %v4024
        %v4075 = vadd.f32 %v3953, %v4026
        %v4076 = vadd.f32 %v3954, %v4028
        %v4101 = vrot.slane %v1894, 7
        %v4102 = vrot.slane %v1899, 7
        %v4103 = vsel %vm2314, %v4101, %v4102
        %v4104 = vrot.slane %v1902, 7
        %v4105 = vsel %vm2314, %v4102, %v4104
        %v4106 = vrot.slane %v1907, 7
        %v4107 = vrot.slane %v1911, 7
        %v4108 = vsel %vm2314, %v4106, %v4107
        %v4109 = vrot.slane %v1917, 7
        %v4110 = vsel %vm2314, %v4107, %v4109
        %v4111 = vrot.slane %v1921, 7
        %v4112 = vrot.slane %v1927, 7
        %v4113 = vsel %vm2314, %v4111, %v4112
        %v4114 = vrot.slane %v1931, 7
        %v4115 = vsel %vm2314, %v4112, %v4114
        %v4116 = vrot.slane %v1937, 7
        %v4117 = vrot.slane %v1941, 7
        %v4118 = vsel %vm2314, %v4116, %v4117
        %v4119 = vrot.slane %v1947, 7
        %v4120 = vsel %vm2314, %v4117, %v4119
        %v4121 = vrot.slane %v1951, 7
        %v4122 = vrot.slane %v1957, 7
        %v4123 = vsel %vm2314, %v4121, %v4122
        %v4124 = vrot.slane %v1961, 7
        %v4125 = vsel %vm2314, %v4122, %v4124
        %v4126 = vrot.slane %v1967, 7
        %v4127 = vrot.slane %v1971, 7
        %v4128 = vsel %vm2314, %v4126, %v4127
        %v4129 = vrot.slane %v1977, 7
        %v4130 = vsel %vm2314, %v4127, %v4129
        %v4131 = vrot.slane %v1981, 7
        %v4132 = vrot.slane %v1987, 7
        %v4133 = vsel %vm2314, %v4131, %v4132
        %v4134 = vrot.slane %v1991, 7
        %v4135 = vsel %vm2314, %v4132, %v4134
        %v4136 = vrot.slane %v1997, 7
        %v4137 = vrot.slane %v2001, 7
        %v4138 = vsel %vm2314, %v4136, %v4137
        %v4139 = vrot.slane %v2007, 7
        %v4140 = vsel %vm2314, %v4137, %v4139
        %v4165 = vadd.f32 %v4053, %v4101
        %v4166 = vadd.f32 %v4054, %v4103
        %v4167 = vadd.f32 %v4055, %v4105
        %v4168 = vadd.f32 %v4056, %v4106
        %v4169 = vadd.f32 %v4057, %v4108
        %v4170 = vadd.f32 %v4058, %v4110
        %v4171 = vadd.f32 %v4059, %v4111
        %v4172 = vadd.f32 %v4060, %v4113
        %v4173 = vadd.f32 %v4061, %v4115
        %v4174 = vadd.f32 %v4062, %v4116
        %v4175 = vadd.f32 %v4063, %v4118
        %v4176 = vadd.f32 %v4064, %v4120
        %v4177 = vadd.f32 %v4065, %v4121
        %v4178 = vadd.f32 %v4066, %v4123
        %v4179 = vadd.f32 %v4067, %v4125
        %v4180 = vadd.f32 %v4068, %v4126
        %v4181 = vadd.f32 %v4069, %v4128
        %v4182 = vadd.f32 %v4070, %v4130
        %v4183 = vadd.f32 %v4071, %v4131
        %v4184 = vadd.f32 %v4072, %v4133
        %v4185 = vadd.f32 %v4073, %v4135
        %v4186 = vadd.f32 %v4074, %v4136
        %v4187 = vadd.f32 %v4075, %v4138
        %v4188 = vadd.f32 %v4076, %v4140
        %4189 = vrot.lane.b32.xlu0 %v1894, 96
        %v4190 = vpop.permute.xlu0 %4189
        %4191 = vrot.lane.b32.xlu0 %v1899, 96
        %v4192 = vpop.permute.xlu0 %4191
        %4193 = vrot.lane.b32.xlu0 %v1902, 96
        %v4194 = vpop.permute.xlu0 %4193
        %4195 = vrot.lane.b32.xlu0 %v1907, 96
        %v4196 = vpop.permute.xlu0 %4195
        %4197 = vrot.lane.b32.xlu0 %v1911, 96
        %v4198 = vpop.permute.xlu0 %4197
        %4199 = vrot.lane.b32.xlu0 %v1917, 96
        %v4200 = vpop.permute.xlu0 %4199
        %4201 = vrot.lane.b32.xlu0 %v1921, 96
        %v4202 = vpop.permute.xlu0 %4201
        %4203 = vrot.lane.b32.xlu0 %v1927, 96
        %v4204 = vpop.permute.xlu0 %4203
        %4205 = vrot.lane.b32.xlu0 %v1931, 96
        %v4206 = vpop.permute.xlu0 %4205
        %4207 = vrot.lane.b32.xlu0 %v1937, 96
        %v4208 = vpop.permute.xlu0 %4207
        %4209 = vrot.lane.b32.xlu0 %v1941, 96
        %v4210 = vpop.permute.xlu0 %4209
        %4211 = vrot.lane.b32.xlu0 %v1947, 96
        %v4212 = vpop.permute.xlu0 %4211
        %4213 = vrot.lane.b32.xlu0 %v1951, 96
        %v4214 = vpop.permute.xlu0 %4213
        %4215 = vrot.lane.b32.xlu0 %v1957, 96
        %v4216 = vpop.permute.xlu0 %4215
        %4217 = vrot.lane.b32.xlu0 %v1961, 96
        %v4218 = vpop.permute.xlu0 %4217
        %4219 = vrot.lane.b32.xlu0 %v1967, 96
        %v4220 = vpop.permute.xlu0 %4219
        %4221 = vrot.lane.b32.xlu0 %v1971, 96
        %v4222 = vpop.permute.xlu0 %4221
        %4223 = vrot.lane.b32.xlu0 %v1977, 96
        %v4224 = vpop.permute.xlu0 %4223
        %4225 = vrot.lane.b32.xlu0 %v1981, 96
        %v4226 = vpop.permute.xlu0 %4225
        %4227 = vrot.lane.b32.xlu0 %v1987, 96
        %v4228 = vpop.permute.xlu0 %4227
        %4229 = vrot.lane.b32.xlu0 %v1991, 96
        %v4230 = vpop.permute.xlu0 %4229
        %4231 = vrot.lane.b32.xlu0 %v1997, 96
        %v4232 = vpop.permute.xlu0 %4231
        %4233 = vrot.lane.b32.xlu0 %v2001, 96
        %v4234 = vpop.permute.xlu0 %4233
        %4235 = vrot.lane.b32.xlu0 %v2007, 96
        %v4236 = vpop.permute.xlu0 %4235
        %v4261 = vadd.f32 %v4165, %v4190
        %v4262 = vadd.f32 %v4166, %v4192
        %v4263 = vadd.f32 %v4167, %v4194
        %v4264 = vadd.f32 %v4168, %v4196
        %v4265 = vadd.f32 %v4169, %v4198
        %v4266 = vadd.f32 %v4170, %v4200
        %v4267 = vadd.f32 %v4171, %v4202
        %v4268 = vadd.f32 %v4172, %v4204
        %v4269 = vadd.f32 %v4173, %v4206
        %v4270 = vadd.f32 %v4174, %v4208
        %v4271 = vadd.f32 %v4175, %v4210
        %v4272 = vadd.f32 %v4176, %v4212
        %v4273 = vadd.f32 %v4177, %v4214
        %v4274 = vadd.f32 %v4178, %v4216
        %v4275 = vadd.f32 %v4179, %v4218
        %v4276 = vadd.f32 %v4180, %v4220
        %v4277 = vadd.f32 %v4181, %v4222
        %v4278 = vadd.f32 %v4182, %v4224
        %v4279 = vadd.f32 %v4183, %v4226
        %v4280 = vadd.f32 %v4184, %v4228
        %v4281 = vadd.f32 %v4185, %v4230
        %v4282 = vadd.f32 %v4186, %v4232
        %v4283 = vadd.f32 %v4187, %v4234
        %v4284 = vadd.f32 %v4188, %v4236
        %v4285 = vrot.slane %v1894, 1
        %v4286 = vrot.slane %v1899, 1
        %v4287 = vsel %vm2547, %v4285, %v4286
        %v4288 = vrot.slane %v1902, 1
        %v4289 = vsel %vm2547, %v4286, %v4288
        %v4290 = vrot.slane %v1907, 1
        %v4291 = vrot.slane %v1911, 1
        %v4292 = vsel %vm2547, %v4290, %v4291
        %v4293 = vrot.slane %v1917, 1
        %v4294 = vsel %vm2547, %v4291, %v4293
        %v4295 = vrot.slane %v1921, 1
        %v4296 = vrot.slane %v1927, 1
        %v4297 = vsel %vm2547, %v4295, %v4296
        %v4298 = vrot.slane %v1931, 1
        %v4299 = vsel %vm2547, %v4296, %v4298
        %v4300 = vrot.slane %v1937, 1
        %v4301 = vrot.slane %v1941, 1
        %v4302 = vsel %vm2547, %v4300, %v4301
        %v4303 = vrot.slane %v1947, 1
        %v4304 = vsel %vm2547, %v4301, %v4303
        %v4305 = vrot.slane %v1951, 1
        %v4306 = vrot.slane %v1957, 1
        %v4307 = vsel %vm2547, %v4305, %v4306
        %v4308 = vrot.slane %v1961, 1
        %v4309 = vsel %vm2547, %v4306, %v4308
        %v4310 = vrot.slane %v1967, 1
        %v4311 = vrot.slane %v1971, 1
        %v4312 = vsel %vm2547, %v4310, %v4311
        %v4313 = vrot.slane %v1977, 1
        %v4314 = vsel %vm2547, %v4311, %v4313
        %v4315 = vrot.slane %v1981, 1
        %v4316 = vrot.slane %v1987, 1
        %v4317 = vsel %vm2547, %v4315, %v4316
        %v4318 = vrot.slane %v1991, 1
        %v4319 = vsel %vm2547, %v4316, %v4318
        %v4320 = vrot.slane %v1997, 1
        %v4321 = vrot.slane %v2001, 1
        %v4322 = vsel %vm2547, %v4320, %v4321
        %v4323 = vrot.slane %v2007, 1
        %v4324 = vsel %vm2547, %v4321, %v4323
        %4325 = vrot.lane.b32.xlu0 %v4287, 64
        %v4326 = vpop.permute.xlu0 %4325
        %4327 = vrot.lane.b32.xlu0 %v4289, 64
        %v4328 = vpop.permute.xlu0 %4327
        %4329 = vrot.lane.b32.xlu0 %v4288, 64
        %v4330 = vpop.permute.xlu0 %4329
        %4331 = vrot.lane.b32.xlu0 %v4292, 64
        %v4332 = vpop.permute.xlu0 %4331
        %4333 = vrot.lane.b32.xlu0 %v4294, 64
        %v4334 = vpop.permute.xlu0 %4333
        %4335 = vrot.lane.b32.xlu0 %v4293, 64
        %v4336 = vpop.permute.xlu0 %4335
        %4337 = vrot.lane.b32.xlu0 %v4297, 64
        %v4338 = vpop.permute.xlu0 %4337
        %4339 = vrot.lane.b32.xlu0 %v4299, 64
        %v4340 = vpop.permute.xlu0 %4339
        %4341 = vrot.lane.b32.xlu0 %v4298, 64
        %v4342 = vpop.permute.xlu0 %4341
        %4343 = vrot.lane.b32.xlu0 %v4302, 64
        %v4344 = vpop.permute.xlu0 %4343
        %4345 = vrot.lane.b32.xlu0 %v4304, 64
        %v4346 = vpop.permute.xlu0 %4345
        %4347 = vrot.lane.b32.xlu0 %v4303, 64
        %v4348 = vpop.permute.xlu0 %4347
        %4349 = vrot.lane.b32.xlu0 %v4307, 64
        %v4350 = vpop.permute.xlu0 %4349
        %4351 = vrot.lane.b32.xlu0 %v4309, 64
        %v4352 = vpop.permute.xlu0 %4351
        %4353 = vrot.lane.b32.xlu0 %v4308, 64
        %v4354 = vpop.permute.xlu0 %4353
        %4355 = vrot.lane.b32.xlu0 %v4312, 64
        %v4356 = vpop.permute.xlu0 %4355
        %4357 = vrot.lane.b32.xlu0 %v4314, 64
        %v4358 = vpop.permute.xlu0 %4357
        %4359 = vrot.lane.b32.xlu0 %v4313, 64
        %v4360 = vpop.permute.xlu0 %4359
        %4361 = vrot.lane.b32.xlu0 %v4317, 64
        %v4362 = vpop.permute.xlu0 %4361
        %4363 = vrot.lane.b32.xlu0 %v4319, 64
        %v4364 = vpop.permute.xlu0 %4363
        %4365 = vrot.lane.b32.xlu0 %v4318, 64
        %v4366 = vpop.permute.xlu0 %4365
        %4367 = vrot.lane.b32.xlu0 %v4322, 64
        %v4368 = vpop.permute.xlu0 %4367
        %4369 = vrot.lane.b32.xlu0 %v4324, 64
        %v4370 = vpop.permute.xlu0 %4369
        %4371 = vrot.lane.b32.xlu0 %v4323, 64
        %v4372 = vpop.permute.xlu0 %4371
        %v4397 = vadd.f32 %v4261, %v4326
        %v4398 = vadd.f32 %v4262, %v4328
        %v4399 = vadd.f32 %v4263, %v4330
        %v4400 = vadd.f32 %v4264, %v4332
        %v4401 = vadd.f32 %v4265, %v4334
        %v4402 = vadd.f32 %v4266, %v4336
        %v4403 = vadd.f32 %v4267, %v4338
        %v4404 = vadd.f32 %v4268, %v4340
        %v4405 = vadd.f32 %v4269, %v4342
        %v4406 = vadd.f32 %v4270, %v4344
        %v4407 = vadd.f32 %v4271, %v4346
        %v4408 = vadd.f32 %v4272, %v4348
        %v4409 = vadd.f32 %v4273, %v4350
        %v4410 = vadd.f32 %v4274, %v4352
        %v4411 = vadd.f32 %v4275, %v4354
        %v4412 = vadd.f32 %v4276, %v4356
        %v4413 = vadd.f32 %v4277, %v4358
        %v4414 = vadd.f32 %v4278, %v4360
        %v4415 = vadd.f32 %v4279, %v4362
        %v4416 = vadd.f32 %v4280, %v4364
        %v4417 = vadd.f32 %v4281, %v4366
        %v4418 = vadd.f32 %v4282, %v4368
        %v4419 = vadd.f32 %v4283, %v4370
        %v4420 = vadd.f32 %v4284, %v4372
        %v4421 = vrot.slane %v1894, 2
        %v4422 = vrot.slane %v1899, 2
        %v4423 = vsel %vm2708, %v4421, %v4422
        %v4424 = vrot.slane %v1902, 2
        %v4425 = vsel %vm2708, %v4422, %v4424
        %v4426 = vrot.slane %v1907, 2
        %v4427 = vrot.slane %v1911, 2
        %v4428 = vsel %vm2708, %v4426, %v4427
        %v4429 = vrot.slane %v1917, 2
        %v4430 = vsel %vm2708, %v4427, %v4429
        %v4431 = vrot.slane %v1921, 2
        %v4432 = vrot.slane %v1927, 2
        %v4433 = vsel %vm2708, %v4431, %v4432
        %v4434 = vrot.slane %v1931, 2
        %v4435 = vsel %vm2708, %v4432, %v4434
        %v4436 = vrot.slane %v1937, 2
        %v4437 = vrot.slane %v1941, 2
        %v4438 = vsel %vm2708, %v4436, %v4437
        %v4439 = vrot.slane %v1947, 2
        %v4440 = vsel %vm2708, %v4437, %v4439
        %v4441 = vrot.slane %v1951, 2
        %v4442 = vrot.slane %v1957, 2
        %v4443 = vsel %vm2708, %v4441, %v4442
        %v4444 = vrot.slane %v1961, 2
        %v4445 = vsel %vm2708, %v4442, %v4444
        %v4446 = vrot.slane %v1967, 2
        %v4447 = vrot.slane %v1971, 2
        %v4448 = vsel %vm2708, %v4446, %v4447
        %v4449 = vrot.slane %v1977, 2
        %v4450 = vsel %vm2708, %v4447, %v4449
        %v4451 = vrot.slane %v1981, 2
        %v4452 = vrot.slane %v1987, 2
        %v4453 = vsel %vm2708, %v4451, %v4452
        %v4454 = vrot.slane %v1991, 2
        %v4455 = vsel %vm2708, %v4452, %v4454
        %v4456 = vrot.slane %v1997, 2
        %v4457 = vrot.slane %v2001, 2
        %v4458 = vsel %vm2708, %v4456, %v4457
        %v4459 = vrot.slane %v2007, 2
        %v4460 = vsel %vm2708, %v4457, %v4459
        %4461 = vrot.lane.b32.xlu0 %v4423, 32
        %v4462 = vpop.permute.xlu0 %4461
        %4463 = vrot.lane.b32.xlu0 %v4425, 32
        %v4464 = vpop.permute.xlu0 %4463
        %4465 = vrot.lane.b32.xlu0 %v4424, 32
        %v4466 = vpop.permute.xlu0 %4465
        %4467 = vrot.lane.b32.xlu0 %v4428, 32
        %v4468 = vpop.permute.xlu0 %4467
        %4469 = vrot.lane.b32.xlu0 %v4430, 32
        %v4470 = vpop.permute.xlu0 %4469
        %4471 = vrot.lane.b32.xlu0 %v4429, 32
        %v4472 = vpop.permute.xlu0 %4471
        %4473 = vrot.lane.b32.xlu0 %v4433, 32
        %v4474 = vpop.permute.xlu0 %4473
        %4475 = vrot.lane.b32.xlu0 %v4435, 32
        %v4476 = vpop.permute.xlu0 %4475
        %4477 = vrot.lane.b32.xlu0 %v4434, 32
        %v4478 = vpop.permute.xlu0 %4477
        %4479 = vrot.lane.b32.xlu0 %v4438, 32
        %v4480 = vpop.permute.xlu0 %4479
        %4481 = vrot.lane.b32.xlu0 %v4440, 32
        %v4482 = vpop.permute.xlu0 %4481
        %4483 = vrot.lane.b32.xlu0 %v4439, 32
        %v4484 = vpop.permute.xlu0 %4483
        %4485 = vrot.lane.b32.xlu0 %v4443, 32
        %v4486 = vpop.permute.xlu0 %4485
        %4487 = vrot.lane.b32.xlu0 %v4445, 32
        %v4488 = vpop.permute.xlu0 %4487
        %4489 = vrot.lane.b32.xlu0 %v4444, 32
        %v4490 = vpop.permute.xlu0 %4489
        %4491 = vrot.lane.b32.xlu0 %v4448, 32
        %v4492 = vpop.permute.xlu0 %4491
        %4493 = vrot.lane.b32.xlu0 %v4450, 32
        %v4494 = vpop.permute.xlu0 %4493
        %4495 = vrot.lane.b32.xlu0 %v4449, 32
        %v4496 = vpop.permute.xlu0 %4495
        %4497 = vrot.lane.b32.xlu0 %v4453, 32
        %v4498 = vpop.permute.xlu0 %4497
        %4499 = vrot.lane.b32.xlu0 %v4455, 32
        %v4500 = vpop.permute.xlu0 %4499
        %4501 = vrot.lane.b32.xlu0 %v4454, 32
        %v4502 = vpop.permute.xlu0 %4501
        %4503 = vrot.lane.b32.xlu0 %v4458, 32
        %v4504 = vpop.permute.xlu0 %4503
        %4505 = vrot.lane.b32.xlu0 %v4460, 32
        %v4506 = vpop.permute.xlu0 %4505
        %4507 = vrot.lane.b32.xlu0 %v4459, 32
        %v4508 = vpop.permute.xlu0 %4507
        %v4533 = vadd.f32 %v4397, %v4462
        %v4534 = vadd.f32 %v4398, %v4464
        %v4535 = vadd.f32 %v4399, %v4466
        %v4536 = vadd.f32 %v4400, %v4468
        %v4537 = vadd.f32 %v4401, %v4470
        %v4538 = vadd.f32 %v4402, %v4472
        %v4539 = vadd.f32 %v4403, %v4474
        %v4540 = vadd.f32 %v4404, %v4476
        %v4541 = vadd.f32 %v4405, %v4478
        %v4542 = vadd.f32 %v4406, %v4480
        %v4543 = vadd.f32 %v4407, %v4482
        %v4544 = vadd.f32 %v4408, %v4484
        %v4545 = vadd.f32 %v4409, %v4486
        %v4546 = vadd.f32 %v4410, %v4488
        %v4547 = vadd.f32 %v4411, %v4490
        %v4548 = vadd.f32 %v4412, %v4492
        %v4549 = vadd.f32 %v4413, %v4494
        %v4550 = vadd.f32 %v4414, %v4496
        %v4551 = vadd.f32 %v4415, %v4498
        %v4552 = vadd.f32 %v4416, %v4500
        %v4553 = vadd.f32 %v4417, %v4502
        %v4554 = vadd.f32 %v4418, %v4504
        %v4555 = vadd.f32 %v4419, %v4506
        %v4556 = vadd.f32 %v4420, %v4508
        %v4573 = vrot.slane %v1909, 6
        %v4574 = vrot.slane %v1913, 6
        %v4575 = vsel %vm581, %v4573, %v4574
        %v4576 = vrot.slane %v1923, 6
        %v4577 = vrot.slane %v1929, 6
        %v4578 = vsel %vm581, %v4576, %v4577
        %v4579 = vrot.slane %v1939, 6
        %v4580 = vrot.slane %v1943, 6
        %v4581 = vsel %vm581, %v4579, %v4580
        %v4582 = vrot.slane %v1953, 6
        %v4583 = vrot.slane %v1959, 6
        %v4584 = vsel %vm581, %v4582, %v4583
        %v4585 = vrot.slane %v1969, 6
        %v4586 = vrot.slane %v1973, 6
        %v4587 = vsel %vm581, %v4585, %v4586
        %v4588 = vrot.slane %v1983, 6
        %v4589 = vrot.slane %v1989, 6
        %v4590 = vsel %vm581, %v4588, %v4589
        %v4591 = vrot.slane %v1999, 6
        %v4592 = vrot.slane %v2003, 6
        %v4593 = vsel %vm581, %v4591, %v4592
        %v4594 = vrot.slane %v2012, 6
        %v4595 = vrot.slane %v2017, 6
        %v4596 = vsel %vm581, %v4594, %v4595
        %v4621 = vadd.f32 %v4533, %v4573
        %v4622 = vadd.f32 %v4534, %v4575
        %v4623 = vadd.f32 %v4535, %v4574
        %v4624 = vadd.f32 %v4536, %v4576
        %v4625 = vadd.f32 %v4537, %v4578
        %v4626 = vadd.f32 %v4538, %v4577
        %v4627 = vadd.f32 %v4539, %v4579
        %v4628 = vadd.f32 %v4540, %v4581
        %v4629 = vadd.f32 %v4541, %v4580
        %v4630 = vadd.f32 %v4542, %v4582
        %v4631 = vadd.f32 %v4543, %v4584
        %v4632 = vadd.f32 %v4544, %v4583
        %v4633 = vadd.f32 %v4545, %v4585
        %v4634 = vadd.f32 %v4546, %v4587
        %v4635 = vadd.f32 %v4547, %v4586
        %v4636 = vadd.f32 %v4548, %v4588
        %v4637 = vadd.f32 %v4549, %v4590
        %v4638 = vadd.f32 %v4550, %v4589
        %v4639 = vadd.f32 %v4551, %v4591
        %v4640 = vadd.f32 %v4552, %v4593
        %v4641 = vadd.f32 %v4553, %v4592
        %v4642 = vadd.f32 %v4554, %v4594
        %v4643 = vadd.f32 %v4555, %v4596
        %v4644 = vadd.f32 %v4556, %v4595
        %v4653 = vrot.slane %v1909, 7
        %v4654 = vrot.slane %v1913, 7
        %v4655 = vsel %vm2314, %v4653, %v4654
        %v4656 = vrot.slane %v1919, 7
        %v4657 = vsel %vm2314, %v4654, %v4656
        %v4658 = vrot.slane %v1923, 7
        %v4659 = vrot.slane %v1929, 7
        %v4660 = vsel %vm2314, %v4658, %v4659
        %v4661 = vrot.slane %v1933, 7
        %v4662 = vsel %vm2314, %v4659, %v4661
        %v4663 = vrot.slane %v1939, 7
        %v4664 = vrot.slane %v1943, 7
        %v4665 = vsel %vm2314, %v4663, %v4664
        %v4666 = vrot.slane %v1949, 7
        %v4667 = vsel %vm2314, %v4664, %v4666
        %v4668 = vrot.slane %v1953, 7
        %v4669 = vrot.slane %v1959, 7
        %v4670 = vsel %vm2314, %v4668, %v4669
        %v4671 = vrot.slane %v1963, 7
        %v4672 = vsel %vm2314, %v4669, %v4671
        %v4673 = vrot.slane %v1969, 7
        %v4674 = vrot.slane %v1973, 7
        %v4675 = vsel %vm2314, %v4673, %v4674
        %v4676 = vrot.slane %v1979, 7
        %v4677 = vsel %vm2314, %v4674, %v4676
        %v4678 = vrot.slane %v1983, 7
        %v4679 = vrot.slane %v1989, 7
        %v4680 = vsel %vm2314, %v4678, %v4679
        %v4681 = vrot.slane %v1993, 7
        %v4682 = vsel %vm2314, %v4679, %v4681
        %v4683 = vrot.slane %v1999, 7
        %v4684 = vrot.slane %v2003, 7
        %v4685 = vsel %vm2314, %v4683, %v4684
        %v4686 = vrot.slane %v2009, 7
        %v4687 = vsel %vm2314, %v4684, %v4686
        %v4688 = vrot.slane %v2012, 7
        %v4689 = vrot.slane %v2017, 7
        %v4690 = vsel %vm2314, %v4688, %v4689
        %v4691 = vrot.slane %v2020, 7
        %v4692 = vsel %vm2314, %v4689, %v4691
        %4693 = vrot.lane.b32.xlu0 %v4653, 96
        %v4694 = vpop.permute.xlu0 %4693
        %4695 = vrot.lane.b32.xlu0 %v4655, 96
        %v4696 = vpop.permute.xlu0 %4695
        %4697 = vrot.lane.b32.xlu0 %v4657, 96
        %v4698 = vpop.permute.xlu0 %4697
        %4699 = vrot.lane.b32.xlu0 %v4658, 96
        %v4700 = vpop.permute.xlu0 %4699
        %4701 = vrot.lane.b32.xlu0 %v4660, 96
        %v4702 = vpop.permute.xlu0 %4701
        %4703 = vrot.lane.b32.xlu0 %v4662, 96
        %v4704 = vpop.permute.xlu0 %4703
        %4705 = vrot.lane.b32.xlu0 %v4663, 96
        %v4706 = vpop.permute.xlu0 %4705
        %4707 = vrot.lane.b32.xlu0 %v4665, 96
        %v4708 = vpop.permute.xlu0 %4707
        %4709 = vrot.lane.b32.xlu0 %v4667, 96
        %v4710 = vpop.permute.xlu0 %4709
        %4711 = vrot.lane.b32.xlu0 %v4668, 96
        %v4712 = vpop.permute.xlu0 %4711
        %4713 = vrot.lane.b32.xlu0 %v4670, 96
        %v4714 = vpop.permute.xlu0 %4713
        %4715 = vrot.lane.b32.xlu0 %v4672, 96
        %v4716 = vpop.permute.xlu0 %4715
        %4717 = vrot.lane.b32.xlu0 %v4673, 96
        %v4718 = vpop.permute.xlu0 %4717
        %4719 = vrot.lane.b32.xlu0 %v4675, 96
        %v4720 = vpop.permute.xlu0 %4719
        %4721 = vrot.lane.b32.xlu0 %v4677, 96
        %v4722 = vpop.permute.xlu0 %4721
        %4723 = vrot.lane.b32.xlu0 %v4678, 96
        %v4724 = vpop.permute.xlu0 %4723
        %4725 = vrot.lane.b32.xlu0 %v4680, 96
        %v4726 = vpop.permute.xlu0 %4725
        %4727 = vrot.lane.b32.xlu0 %v4682, 96
        %v4728 = vpop.permute.xlu0 %4727
        %4729 = vrot.lane.b32.xlu0 %v4683, 96
        %v4730 = vpop.permute.xlu0 %4729
        %4731 = vrot.lane.b32.xlu0 %v4685, 96
        %v4732 = vpop.permute.xlu0 %4731
        %4733 = vrot.lane.b32.xlu0 %v4687, 96
        %v4734 = vpop.permute.xlu0 %4733
        %4735 = vrot.lane.b32.xlu0 %v4688, 96
        %v4736 = vpop.permute.xlu0 %4735
        %4737 = vrot.lane.b32.xlu0 %v4690, 96
        %v4738 = vpop.permute.xlu0 %4737
        %4739 = vrot.lane.b32.xlu0 %v4692, 96
        %v4740 = vpop.permute.xlu0 %4739
        %v4765 = vadd.f32 %v4621, %v4694
        %v4766 = vadd.f32 %v4622, %v4696
        %v4767 = vadd.f32 %v4623, %v4698
        %v4768 = vadd.f32 %v4624, %v4700
        %v4769 = vadd.f32 %v4625, %v4702
        %v4770 = vadd.f32 %v4626, %v4704
        %v4771 = vadd.f32 %v4627, %v4706
        %v4772 = vadd.f32 %v4628, %v4708
        %v4773 = vadd.f32 %v4629, %v4710
        %v4774 = vadd.f32 %v4630, %v4712
        %v4775 = vadd.f32 %v4631, %v4714
        %v4776 = vadd.f32 %v4632, %v4716
        %v4777 = vadd.f32 %v4633, %v4718
        %v4778 = vadd.f32 %v4634, %v4720
        %v4779 = vadd.f32 %v4635, %v4722
        %v4780 = vadd.f32 %v4636, %v4724
        %v4781 = vadd.f32 %v4637, %v4726
        %v4782 = vadd.f32 %v4638, %v4728
        %v4783 = vadd.f32 %v4639, %v4730
        %v4784 = vadd.f32 %v4640, %v4732
        %v4785 = vadd.f32 %v4641, %v4734
        %v4786 = vadd.f32 %v4642, %v4736
        %v4787 = vadd.f32 %v4643, %v4738
        %v4788 = vadd.f32 %v4644, %v4740
        %4789 = vrot.lane.b32.xlu0 %v1909, 64
        %v4790 = vpop.permute.xlu0 %4789
        %4791 = vrot.lane.b32.xlu0 %v1913, 64
        %v4792 = vpop.permute.xlu0 %4791
        %4793 = vrot.lane.b32.xlu0 %v1919, 64
        %v4794 = vpop.permute.xlu0 %4793
        %4795 = vrot.lane.b32.xlu0 %v1923, 64
        %v4796 = vpop.permute.xlu0 %4795
        %4797 = vrot.lane.b32.xlu0 %v1929, 64
        %v4798 = vpop.permute.xlu0 %4797
        %4799 = vrot.lane.b32.xlu0 %v1933, 64
        %v4800 = vpop.permute.xlu0 %4799
        %4801 = vrot.lane.b32.xlu0 %v1939, 64
        %v4802 = vpop.permute.xlu0 %4801
        %4803 = vrot.lane.b32.xlu0 %v1943, 64
        %v4804 = vpop.permute.xlu0 %4803
        %4805 = vrot.lane.b32.xlu0 %v1949, 64
        %v4806 = vpop.permute.xlu0 %4805
        %4807 = vrot.lane.b32.xlu0 %v1953, 64
        %v4808 = vpop.permute.xlu0 %4807
        %4809 = vrot.lane.b32.xlu0 %v1959, 64
        %v4810 = vpop.permute.xlu0 %4809
        %4811 = vrot.lane.b32.xlu0 %v1963, 64
        %v4812 = vpop.permute.xlu0 %4811
        %4813 = vrot.lane.b32.xlu0 %v1969, 64
        %v4814 = vpop.permute.xlu0 %4813
        %4815 = vrot.lane.b32.xlu0 %v1973, 64
        %v4816 = vpop.permute.xlu0 %4815
        %4817 = vrot.lane.b32.xlu0 %v1979, 64
        %v4818 = vpop.permute.xlu0 %4817
        %4819 = vrot.lane.b32.xlu0 %v1983, 64
        %v4820 = vpop.permute.xlu0 %4819
        %4821 = vrot.lane.b32.xlu0 %v1989, 64
        %v4822 = vpop.permute.xlu0 %4821
        %4823 = vrot.lane.b32.xlu0 %v1993, 64
        %v4824 = vpop.permute.xlu0 %4823
        %4825 = vrot.lane.b32.xlu0 %v1999, 64
        %v4826 = vpop.permute.xlu0 %4825
        %4827 = vrot.lane.b32.xlu0 %v2003, 64
        %v4828 = vpop.permute.xlu0 %4827
        %4829 = vrot.lane.b32.xlu0 %v2009, 64
        %v4830 = vpop.permute.xlu0 %4829
        %4831 = vrot.lane.b32.xlu0 %v2012, 64
        %v4832 = vpop.permute.xlu0 %4831
        %4833 = vrot.lane.b32.xlu0 %v2017, 64
        %v4834 = vpop.permute.xlu0 %4833
        %4835 = vrot.lane.b32.xlu0 %v2020, 64
        %v4836 = vpop.permute.xlu0 %4835
        %v4861 = vadd.f32 %v4765, %v4790
        %v4862 = vadd.f32 %v4766, %v4792
        %v4863 = vadd.f32 %v4767, %v4794
        %v4864 = vadd.f32 %v4768, %v4796
        %v4865 = vadd.f32 %v4769, %v4798
        %v4866 = vadd.f32 %v4770, %v4800
        %v4867 = vadd.f32 %v4771, %v4802
        %v4868 = vadd.f32 %v4772, %v4804
        %v4869 = vadd.f32 %v4773, %v4806
        %v4870 = vadd.f32 %v4774, %v4808
        %v4871 = vadd.f32 %v4775, %v4810
        %v4872 = vadd.f32 %v4776, %v4812
        %v4873 = vadd.f32 %v4777, %v4814
        %v4874 = vadd.f32 %v4778, %v4816
        %v4875 = vadd.f32 %v4779, %v4818
        %v4876 = vadd.f32 %v4780, %v4820
        %v4877 = vadd.f32 %v4781, %v4822
        %v4878 = vadd.f32 %v4782, %v4824
        %v4879 = vadd.f32 %v4783, %v4826
        %v4880 = vadd.f32 %v4784, %v4828
        %v4881 = vadd.f32 %v4785, %v4830
        %v4882 = vadd.f32 %v4786, %v4832
        %v4883 = vadd.f32 %v4787, %v4834
        %v4884 = vadd.f32 %v4788, %v4836
        %v4885 = vrot.slane %v1909, 1
        %v4886 = vrot.slane %v1913, 1
        %v4887 = vsel %vm2547, %v4885, %v4886
        %v4888 = vrot.slane %v1919, 1
        %v4889 = vsel %vm2547, %v4886, %v4888
        %v4890 = vrot.slane %v1923, 1
        %v4891 = vrot.slane %v1929, 1
        %v4892 = vsel %vm2547, %v4890, %v4891
        %v4893 = vrot.slane %v1933, 1
        %v4894 = vsel %vm2547, %v4891, %v4893
        %v4895 = vrot.slane %v1939, 1
        %v4896 = vrot.slane %v1943, 1
        %v4897 = vsel %vm2547, %v4895, %v4896
        %v4898 = vrot.slane %v1949, 1
        %v4899 = vsel %vm2547, %v4896, %v4898
        %v4900 = vrot.slane %v1953, 1
        %v4901 = vrot.slane %v1959, 1
        %v4902 = vsel %vm2547, %v4900, %v4901
        %v4903 = vrot.slane %v1963, 1
        %v4904 = vsel %vm2547, %v4901, %v4903
        %v4905 = vrot.slane %v1969, 1
        %v4906 = vrot.slane %v1973, 1
        %v4907 = vsel %vm2547, %v4905, %v4906
        %v4908 = vrot.slane %v1979, 1
        %v4909 = vsel %vm2547, %v4906, %v4908
        %v4910 = vrot.slane %v1983, 1
        %v4911 = vrot.slane %v1989, 1
        %v4912 = vsel %vm2547, %v4910, %v4911
        %v4913 = vrot.slane %v1993, 1
        %v4914 = vsel %vm2547, %v4911, %v4913
        %v4915 = vrot.slane %v1999, 1
        %v4916 = vrot.slane %v2003, 1
        %v4917 = vsel %vm2547, %v4915, %v4916
        %v4918 = vrot.slane %v2009, 1
        %v4919 = vsel %vm2547, %v4916, %v4918
        %v4920 = vrot.slane %v2012, 1
        %v4921 = vrot.slane %v2017, 1
        %v4922 = vsel %vm2547, %v4920, %v4921
        %v4923 = vrot.slane %v2020, 1
        %v4924 = vsel %vm2547, %v4921, %v4923
        %4925 = vrot.lane.b32.xlu0 %v4887, 32
        %v4926 = vpop.permute.xlu0 %4925
        %4927 = vrot.lane.b32.xlu0 %v4889, 32
        %v4928 = vpop.permute.xlu0 %4927
        %4929 = vrot.lane.b32.xlu0 %v4888, 32
        %v4930 = vpop.permute.xlu0 %4929
        %4931 = vrot.lane.b32.xlu0 %v4892, 32
        %v4932 = vpop.permute.xlu0 %4931
        %4933 = vrot.lane.b32.xlu0 %v4894, 32
        %v4934 = vpop.permute.xlu0 %4933
        %4935 = vrot.lane.b32.xlu0 %v4893, 32
        %v4936 = vpop.permute.xlu0 %4935
        %4937 = vrot.lane.b32.xlu0 %v4897, 32
        %v4938 = vpop.permute.xlu0 %4937
        %4939 = vrot.lane.b32.xlu0 %v4899, 32
        %v4940 = vpop.permute.xlu0 %4939
        %4941 = vrot.lane.b32.xlu0 %v4898, 32
        %v4942 = vpop.permute.xlu0 %4941
        %4943 = vrot.lane.b32.xlu0 %v4902, 32
        %v4944 = vpop.permute.xlu0 %4943
        %4945 = vrot.lane.b32.xlu0 %v4904, 32
        %v4946 = vpop.permute.xlu0 %4945
        %4947 = vrot.lane.b32.xlu0 %v4903, 32
        %v4948 = vpop.permute.xlu0 %4947
        %4949 = vrot.lane.b32.xlu0 %v4907, 32
        %v4950 = vpop.permute.xlu0 %4949
        %4951 = vrot.lane.b32.xlu0 %v4909, 32
        %v4952 = vpop.permute.xlu0 %4951
        %4953 = vrot.lane.b32.xlu0 %v4908, 32
        %v4954 = vpop.permute.xlu0 %4953
        %4955 = vrot.lane.b32.xlu0 %v4912, 32
        %v4956 = vpop.permute.xlu0 %4955
        %4957 = vrot.lane.b32.xlu0 %v4914, 32
        %v4958 = vpop.permute.xlu0 %4957
        %4959 = vrot.lane.b32.xlu0 %v4913, 32
        %v4960 = vpop.permute.xlu0 %4959
        %4961 = vrot.lane.b32.xlu0 %v4917, 32
        %v4962 = vpop.permute.xlu0 %4961
        %4963 = vrot.lane.b32.xlu0 %v4919, 32
        %v4964 = vpop.permute.xlu0 %4963
        %4965 = vrot.lane.b32.xlu0 %v4918, 32
        %v4966 = vpop.permute.xlu0 %4965
        %4967 = vrot.lane.b32.xlu0 %v4922, 32
        %v4968 = vpop.permute.xlu0 %4967
        %4969 = vrot.lane.b32.xlu0 %v4924, 32
        %v4970 = vpop.permute.xlu0 %4969
        %4971 = vrot.lane.b32.xlu0 %v4923, 32
        %v4972 = vpop.permute.xlu0 %4971
        %v4997 = vadd.f32 %v4861, %v4926
        %v4998 = vadd.f32 %v4862, %v4928
        %v4999 = vadd.f32 %v4863, %v4930
        %v5000 = vadd.f32 %v4864, %v4932
        %v5001 = vadd.f32 %v4865, %v4934
        %v5002 = vadd.f32 %v4866, %v4936
        %v5003 = vadd.f32 %v4867, %v4938
        %v5004 = vadd.f32 %v4868, %v4940
        %v5005 = vadd.f32 %v4869, %v4942
        %v5006 = vadd.f32 %v4870, %v4944
        %v5007 = vadd.f32 %v4871, %v4946
        %v5008 = vadd.f32 %v4872, %v4948
        %v5009 = vadd.f32 %v4873, %v4950
        %v5010 = vadd.f32 %v4874, %v4952
        %v5011 = vadd.f32 %v4875, %v4954
        %v5012 = vadd.f32 %v4876, %v4956
        %v5013 = vadd.f32 %v4877, %v4958
        %v5014 = vadd.f32 %v4878, %v4960
        %v5015 = vadd.f32 %v4879, %v4962
        %v5016 = vadd.f32 %v4880, %v4964
        %v5017 = vadd.f32 %v4881, %v4966
        %v5018 = vadd.f32 %v4882, %v4968
        %v5019 = vadd.f32 %v4883, %v4970
        %v5020 = vadd.f32 %v4884, %v4972
        %v5045 = vrot.slane %v2093, 2
        %v5046 = vrot.slane %v2096, 2
        %v5047 = vsel %vm2708, %v5045, %v5046
        %v5048 = vrot.slane %v2101, 2
        %v5049 = vsel %vm2708, %v5046, %v5048
        %v5050 = vrot.slane %v2104, 2
        %v5051 = vrot.slane %v2109, 2
        %v5052 = vsel %vm2708, %v5050, %v5051
        %v5053 = vrot.slane %v2112, 2
        %v5054 = vsel %vm2708, %v5051, %v5053
        %v5055 = vrot.slane %v2117, 2
        %v5056 = vrot.slane %v2120, 2
        %v5057 = vsel %vm2708, %v5055, %v5056
        %v5058 = vrot.slane %v2125, 2
        %v5059 = vsel %vm2708, %v5056, %v5058
        %v5060 = vrot.slane %v2128, 2
        %v5061 = vrot.slane %v2133, 2
        %v5062 = vsel %vm2708, %v5060, %v5061
        %v5063 = vrot.slane %v2136, 2
        %v5064 = vsel %vm2708, %v5061, %v5063
        %v5065 = vrot.slane %v2141, 2
        %v5066 = vrot.slane %v2144, 2
        %v5067 = vsel %vm2708, %v5065, %v5066
        %v5068 = vrot.slane %v2149, 2
        %v5069 = vsel %vm2708, %v5066, %v5068
        %v5070 = vrot.slane %v2152, 2
        %v5071 = vrot.slane %v2157, 2
        %v5072 = vsel %vm2708, %v5070, %v5071
        %v5073 = vrot.slane %v2160, 2
        %v5074 = vsel %vm2708, %v5071, %v5073
        %v5075 = vrot.slane %v2165, 2
        %v5076 = vrot.slane %v2168, 2
        %v5077 = vsel %vm2708, %v5075, %v5076
        %v5078 = vrot.slane %v2173, 2
        %v5079 = vsel %vm2708, %v5076, %v5078
        %v5080 = vrot.slane %v2176, 2
        %v5081 = vrot.slane %v2181, 2
        %v5082 = vsel %vm2708, %v5080, %v5081
        %v5083 = vrot.slane %v2184, 2
        %v5084 = vsel %vm2708, %v5081, %v5083
        %v5109 = vadd.f32 %v4997, %v5047
        %v5110 = vadd.f32 %v4998, %v5049
        %v5111 = vadd.f32 %v4999, %v5048
        %v5112 = vadd.f32 %v5000, %v5052
        %v5113 = vadd.f32 %v5001, %v5054
        %v5114 = vadd.f32 %v5002, %v5053
        %v5115 = vadd.f32 %v5003, %v5057
        %v5116 = vadd.f32 %v5004, %v5059
        %v5117 = vadd.f32 %v5005, %v5058
        %v5118 = vadd.f32 %v5006, %v5062
        %v5119 = vadd.f32 %v5007, %v5064
        %v5120 = vadd.f32 %v5008, %v5063
        %v5121 = vadd.f32 %v5009, %v5067
        %v5122 = vadd.f32 %v5010, %v5069
        %v5123 = vadd.f32 %v5011, %v5068
        %v5124 = vadd.f32 %v5012, %v5072
        %v5125 = vadd.f32 %v5013, %v5074
        %v5126 = vadd.f32 %v5014, %v5073
        %v5127 = vadd.f32 %v5015, %v5077
        %v5128 = vadd.f32 %v5016, %v5079
        %v5129 = vadd.f32 %v5017, %v5078
        %v5130 = vadd.f32 %v5018, %v5082
        %v5131 = vadd.f32 %v5019, %v5084
        %v5132 = vadd.f32 %v5020, %v5083
        %vm5133 = vcmask 261122
        %5134 = vst.msk [vmem:[%s295 - $0x2] sm:$0xfc] %vm5133, %v5109
        %vm5135 = vcmask 261120
        %5136 = vst.msk [vmem:[%s295 + $0x6] sm:$0xff] %vm5135, %v5110
        %vm5137 = vcmask 254976
        %5138 = vst.msk [vmem:[%s295 + $0xe] sm:$0x3] %vm5137, %v5111
        %5139 = vst.msk [vmem:[%s295 + $0xe] sm:$0xfc] %vm5133, %v5112
        %5140 = vst.msk [vmem:[%s295 + $0x16] sm:$0xff] %vm5135, %v5113
        %5141 = vst.msk [vmem:[%s295 + $0x1e] sm:$0x3] %vm5137, %v5114
        %5142 = vst.msk [vmem:[%s295 + $0x1e] sm:$0xfc] %vm5133, %v5115
        %5143 = vst.msk [vmem:[%s295 + $0x26] sm:$0xff] %vm5135, %v5116
        %5144 = vst.msk [vmem:[%s295 + $0x2e] sm:$0x3] %vm5137, %v5117
        %5145 = vst.msk [vmem:[%s295 + $0x2e] sm:$0xfc] %vm5133, %v5118
        %5146 = vst.msk [vmem:[%s295 + $0x36] sm:$0xff] %vm5135, %v5119
        %5147 = vst.msk [vmem:[%s295 + $0x3e] sm:$0x3] %vm5137, %v5120
        %5148 = vst.msk [vmem:[%s295 + $0x3e] sm:$0xfc] %vm5133, %v5121
        %5149 = vst.msk [vmem:[%s295 + $0x46] sm:$0xff] %vm5135, %v5122
        %5150 = vst.msk [vmem:[%s295 + $0x4e] sm:$0x3] %vm5137, %v5123
        %5151 = vst.msk [vmem:[%s295 + $0x4e] sm:$0xfc] %vm5133, %v5124
        %5152 = vst.msk [vmem:[%s295 + $0x56] sm:$0xff] %vm5135, %v5125
        %5153 = vst.msk [vmem:[%s295 + $0x5e] sm:$0x3] %vm5137, %v5126
        %5154 = vst.msk [vmem:[%s295 + $0x5e] sm:$0xfc] %vm5133, %v5127
        %5155 = vst.msk [vmem:[%s295 + $0x66] sm:$0xff] %vm5135, %v5128
        %5156 = vst.msk [vmem:[%s295 + $0x6e] sm:$0x3] %vm5137, %v5129
        %5157 = vst.msk [vmem:[%s295 + $0x6e] sm:$0xfc] %vm5133, %v5130
        %5158 = vst.msk [vmem:[%s295 + $0x76] sm:$0xff] %vm5135, %v5131
        %5159 = vst.msk [vmem:[%s295 + $0x7e] sm:$0x3] %vm5137, %v5132
        %s5160 = sand.u32 %s197, 1
        %s5161 = scalar_lea.sflag [#allocation3], %s5160
        %s5162 = sand.u32 %s197, 1
        %s5163 = smul.addr %s5162, 128
        %s5164 = scalar_lea.vmem [#allocation2], %s5163
        // Predicated region
        $region49: #{tpu_custom_call.1} parent=47 // pred_check
          %p5165 = pneg %p207
        $region50: #{tpu_custom_call.1} parent=47 // pred_check_branch
          %5167 = sbr.rel (%p5165) target = $region52
        $region51: #{tpu_custom_call.1} parent=47 // pred_region
          %s5169 = ssub.s32 2048, 2048
          %5170 = vsyncadd %s5161, %s5169
          %s5171 = smul.addr %s26, 16
          %s5172 = smul.addr %s25, 32
          %s5173 = sadd.s32 %s5171, %s5172
          %s5174 = smul.addr %s5173, 128
          %s5175 = scalar_lea.hbm %s7, %s5174
          %s5176 = sshll.u32 %s5164, 4
          %s5177 = int_to_ptr.vmem [resolvable:$true] %s5176
          %5182 = dma.vmem_to_hbm [thread:$0]  %s5177, 2048, %s5175, %s5161, 128, 128, 8
        $region52: #{tpu_custom_call.1} parent=47 // pred_fallthru
          _
      $region48: #{tpu_custom_call.1} parent=5 // pred_fallthru
        _
      %p5183 = scmp.le.s32.totalorder 2, %s16
      // Predicated region
      $region53: #{tpu_custom_call.1} parent=5 // pred_check
        %p5184 = pneg %p5183
      $region54: #{tpu_custom_call.1} parent=5 // pred_check_branch
        %5186 = sbr.rel (%p5184) target = $region56
      $region55: #{tpu_custom_call.1} parent=5 // pred_region
        %s5187 = ssub.s32 %s16, 2
        // Predicated region
        $region57: #{tpu_custom_call.1} parent=55 // pred_check
          %p5188 = pneg %p213
        $region58: #{tpu_custom_call.1} parent=55 // pred_check_branch
          %5190 = sbr.rel (%p5188) target = $region60
        $region59: #{tpu_custom_call.1} parent=55 // pred_region
          %s5191 = sand.u32 %s198, 1
          %s5192 = scalar_lea.sflag [#allocation3], %s5191
          %s5193 = sand.u32 %s198, 1
          %s5194 = smul.addr %s5193, 128
          %s5195 = scalar_lea.vmem [#allocation2], %s5194
          %5196 = dma.done %s5192, 2048
        $region60: #{tpu_custom_call.1} parent=55 // pred_fallthru
          _
      $region56: #{tpu_custom_call.1} parent=5 // pred_fallthru
        _
    $region6: #{tpu_custom_call.1} parent=1 // loop_footer
      %s20 = sadd.s32 1, %s16
    $region7: #{tpu_custom_call.1} parent=1 // loop_footer_branch
      %15 = sbr.rel target = $region3
    $region8: #{tpu_custom_call.1} parent=1 // loop_exit
      _
    %5197 = vsyncpa [#allocation3], 1
    %s5198 = scalar_lea.sflag [#allocation3], 1
    %5199 = vsyncpa %s5198, 1

</llo_original>
